<compile_context>
chip_gen: v6e
topology: v6e:2x2x1
jax: 0.10.0
libtpu: 0.0.40
codegen_flags: <defaults>
</compile_context>

<pallas_src>
import jax
import jax.numpy as jnp
from jax.experimental import pallas as pl
from jax.experimental.pallas import tpu as pltpu

DILATIONS = (2, 3, 4, 5, 6, 7)     # concat order: r2, r3, r4, r5, r6, r7
D_MAX = max(DILATIONS)
NUM_BRANCH = len(DILATIONS)
TAPS_NC = ((0, 0), (0, 1), (0, 2), (1, 0), (1, 2), (2, 0), (2, 1), (2, 2))
NUM_TAPS_NC = len(TAPS_NC)         # 8 non-centre taps per branch
BN_EPS = 0.001


def _round_up(v, m):
    return (v + m - 1) // m * m


@jax.jit
def dilate_merge_pallas(x, w, conv_b, gamma, beta, run_mean, run_var):
    """x: (N, Cin, H, W) f32; w: (6, Cout, Cin, 3, 3) OIHW.

    Returns (N, 6*Cout, H, W), matching torch.cat((r2,...,r7), dim=1)."""
    N, Cin, H, W = x.shape
    Cout = w.shape[1]
    Cin_p = _round_up(Cin, 8)                    # pad channels to a sublane tile
    Hp, Wp = H + 2 * D_MAX, W + 2 * D_MAX
    L = H * Wp                                   # extended-output row length
    HW = H * W
    n_blk = 1 + NUM_BRANCH * NUM_TAPS_NC         # 49 im2col blocks (shared centre)
    K_tot = n_blk * Cin_p
    Crows = NUM_BRANCH * Cout                    # 6*Cout output channels
    s_max = 2 * D_MAX * Wp + 2 * D_MAX           # largest tap offset
    Lpad = _round_up(max(Hp * Wp, s_max + L), 128)

    # ---- glue: pad channels + spatial, flatten spatial (free reshape in NCHW) --
    x_pad = jnp.pad(x, ((0, 0), (0, Cin_p - Cin), (D_MAX, D_MAX), (D_MAX, D_MAX)))
    x_flat = x_pad.reshape(N, Cin_p, Hp * Wp)
    x_flat = jnp.pad(x_flat, ((0, 0), (0, 0), (0, Lpad - Hp * Wp)))

    # ---- glue: fold BN (eval) into conv weights; build fused weight matrix -----
    scale = gamma / jnp.sqrt(run_var + BN_EPS)                   # (6, Cout)
    wf = w * scale[:, :, None, None, None]                       # (6, Cout, Cin, 3, 3)
    bias = (beta + scale * (conv_b - run_mean)).reshape(Crows, 1)

    w_big = jnp.zeros((Crows, K_tot), jnp.float32)
    for b in range(NUM_BRANCH):
        r0 = b * Cout
        # shared centre tap block (columns 0:Cin_p)
        w_big = w_big.at[r0:r0 + Cout, 0:Cin].set(wf[b, :, :, 1, 1])
        for j, (ky, kx) in enumerate(TAPS_NC):
            c0 = (1 + b * NUM_TAPS_NC + j) * Cin_p
            w_big = w_big.at[r0:r0 + Cout, c0:c0 + Cin].set(wf[b, :, :, ky, kx])

    # ---- glue: 0/1 selection matrix dropping the (Wp - W) garbage columns ------
    p = jnp.arange(L)
    q = (p // Wp) * W + (p % Wp)
    sel = ((p % Wp < W)[:, None]
           & (q[:, None] == jnp.arange(HW)[None, :])).astype(jnp.float32)  # (L, HW)

    # ---- kernel ----------------------------------------------------------------
    def kernel(x_ref, w_ref, b_ref, s_ref, o_ref, patch_ref):
        # x_ref:     (1, Cin_p, Lpad)   flattened zero-padded input (one batch elem)
        # w_ref:     (Crows, K_tot)     fused, BN-folded, block-structured weights
        # b_ref:     (Crows, 1)         folded bias
        # s_ref:     (L, HW)            0/1 column-selection matrix
        # o_ref:     (1, Crows, HW)     lane-dense NCHW-flattened output
        # patch_ref: (K_tot, L)         VMEM im2col scratch
        s_c = D_MAX * Wp + D_MAX
        patch_ref[0:Cin_p, :] = x_ref[0, :, s_c:s_c + L]      # shared centre tap
        for b, d in enumerate(DILATIONS):
            for j, (ky, kx) in enumerate(TAPS_NC):
                s = (D_MAX + (ky - 1) * d) * Wp + (D_MAX + (kx - 1) * d)
                r0 = (1 + b * NUM_TAPS_NC + j) * Cin_p
                patch_ref[r0:r0 + Cin_p, :] = x_ref[0, :, s:s + L]
        # one fused MXU matmul for all 6 branches x 9 taps
        y_ext = jnp.dot(w_ref[...], patch_ref[...],
                        preferred_element_type=jnp.float32)            # (Crows, L)
        # compact valid columns (gather-as-matmul; exact, no lane relayout)
        y = jnp.dot(y_ext, s_ref[...],
                    preferred_element_type=jnp.float32)                # (Crows, HW)
        # folded-BN bias + ReLU, single wide lane-dense store
        o_ref[0, :, :] = jnp.maximum(y + b_ref[...], 0.0)

    out = pl.pallas_call(
        kernel,
        out_shape=jax.ShapeDtypeStruct((N, Crows, HW), jnp.float32),
        grid_spec=pltpu.PrefetchScalarGridSpec(
            num_scalar_prefetch=0,
            grid=(N,),
            in_specs=[
                pl.BlockSpec((1, Cin_p, Lpad), lambda n: (n, 0, 0)),
                pl.BlockSpec((Crows, K_tot), lambda n: (0, 0)),
                pl.BlockSpec((Crows, 1), lambda n: (0, 0)),
                pl.BlockSpec((L, HW), lambda n: (0, 0)),
            ],
            out_specs=pl.BlockSpec((1, Crows, HW), lambda n: (n, 0, 0)),
            scratch_shapes=[pltpu.VMEM((K_tot, L), jnp.float32)],
        ),
        compiler_params=pltpu.CompilerParams(
            dimension_semantics=("parallel",),
            vmem_limit_bytes=32 * 1024 * 1024),
    )(x_flat, w_big, bias, sel)

    # free reshape: (N, 6*Cout, H*W) -> (N, 6*Cout, H, W)  (already NCHW order)
    return out.reshape(N, Crows, H, W)


def dilate_merge_reference(x, w, conv_b, gamma, beta, run_mean, run_var):
    """Pure-JAX reference reproducing the PyTorch forward (eval-mode BN)."""
    outs = []
    for b, d in enumerate(DILATIONS):
        y = jax.lax.conv_general_dilated(
            x, w[b], window_strides=(1, 1), padding=[(d, d), (d, d)],
            rhs_dilation=(d, d), dimension_numbers=("NCHW", "OIHW", "NCHW"))
        y = y + conv_b[b][None, :, None, None]
        sc = gamma[b] / jnp.sqrt(run_var[b] + BN_EPS)
        y = sc[None, :, None, None] * (y - run_mean[b][None, :, None, None]) \
            + beta[b][None, :, None, None]
        outs.append(jax.nn.relu(y))
    return jnp.concatenate(outs, axis=1)


if __name__ == "__main__":
    # small shapes consistent with the module: NCHW input
    N, Cin, H, W = 2, 4, 16, 16
    hid = 8

    key = jax.random.PRNGKey(0)
    k_x, k_w, k_b, k_g, k_be, k_m, k_v = jax.random.split(key, 7)

    x = jax.random.normal(k_x, (N, Cin, H, W), jnp.float32)

    # deterministic synthetic parameters (6 branches, OIHW conv weights)
    w = 0.1 * jax.random.normal(k_w, (NUM_BRANCH, hid, Cin, 3, 3), jnp.float32)
    conv_b = 0.05 * jax.random.normal(k_b, (NUM_BRANCH, hid), jnp.float32)
    gamma = 0.5 + jax.random.uniform(k_g, (NUM_BRANCH, hid), jnp.float32)
    beta = 0.05 * jax.random.normal(k_be, (NUM_BRANCH, hid), jnp.float32)
    run_mean = 0.1 * jax.random.normal(k_m, (NUM_BRANCH, hid), jnp.float32)
    run_var = 0.5 + jax.random.uniform(k_v, (NUM_BRANCH, hid), jnp.float32)

    out = dilate_merge_pallas(x, w, conv_b, gamma, beta, run_mean, run_var)
    out = jax.block_until_ready(out)

    ref = dilate_merge_reference(x, w, conv_b, gamma, beta, run_mean, run_var)
    ref = jax.block_until_ready(ref)

    assert out.shape == (N, NUM_BRANCH * hid, H, W), out.shape
    assert jnp.allclose(out, ref, rtol=1e-4, atol=1e-4), \
        float(jnp.max(jnp.abs(out - ref)))

    print("KERNEL_OK")
</pallas_src>

<mosaic_0001>
module attributes {stable_mosaic.version = 11 : i64} {
  func.func @kernel(%arg0: i32, %arg1: memref<1x8x1024xf32, #tpu.memory_space<vmem>>, %arg2: memref<48x392xf32, #tpu.memory_space<vmem>>, %arg3: memref<48x1xf32, #tpu.memory_space<vmem>>, %arg4: memref<480x256xf32, #tpu.memory_space<vmem>>, %arg5: memref<1x48x256xf32, #tpu.memory_space<vmem>>, %arg6: memref<392x480xf32, #tpu.memory_space<vmem>>) attributes {dimension_semantics = [#tpu.dimension_semantics<parallel>], iteration_bounds = array<i64: 2>, scalar_prefetch = 0 : i64, scratch_operands = 1 : i64, tpu.core_type = #tpu.core_type<tc>, window_params = [{transform_indices = @transform_0, window_bounds = array<i64: 1, 8, 1024>}, {pipeline_mode = #tpu.pipeline_mode<synchronous>, transform_indices = @transform_1, window_bounds = array<i64: 48, 392>}, {pipeline_mode = #tpu.pipeline_mode<synchronous>, transform_indices = @transform_2, window_bounds = array<i64: 48, 1>}, {pipeline_mode = #tpu.pipeline_mode<synchronous>, transform_indices = @transform_3, window_bounds = array<i64: 480, 256>}, {transform_indices = @transform_4, window_bounds = array<i64: 1, 48, 256>}]} {
    %c0 = arith.constant 0 : index
    %c0_0 = arith.constant 0 : index
    %c217 = arith.constant 217 : index
    %0 = vector.load %arg1[%c0, %c0_0, %c217] : memref<1x8x1024xf32, #tpu.memory_space<vmem>>, vector<1x8x480xf32>
    %1 = vector.shape_cast %0 : vector<1x8x480xf32> to vector<8x480xf32>
    %c0_1 = arith.constant 0 : index
    %c0_2 = arith.constant 0 : index
    %2 = vector.load %arg6[%c0_1, %c0_2] : memref<392x480xf32, #tpu.memory_space<vmem>>, vector<8x480xf32>
    tpu.vector_store %arg6[%c0_1, %c0_2], %1 {strides = array<i32>} : memref<392x480xf32, #tpu.memory_space<vmem>>, vector<8x480xf32>,
    %c0_3 = arith.constant 0 : index
    %c0_4 = arith.constant 0 : index
    %c155 = arith.constant 155 : index
    %3 = vector.load %arg1[%c0_3, %c0_4, %c155] : memref<1x8x1024xf32, #tpu.memory_space<vmem>>, vector<1x8x480xf32>
    %4 = vector.shape_cast %3 : vector<1x8x480xf32> to vector<8x480xf32>
    %c8 = arith.constant 8 : index
    %c0_5 = arith.constant 0 : index
    %5 = vector.load %arg6[%c8, %c0_5] : memref<392x480xf32, #tpu.memory_space<vmem>>, vector<8x480xf32>
    tpu.vector_store %arg6[%c8, %c0_5], %4 {strides = array<i32>} : memref<392x480xf32, #tpu.memory_space<vmem>>, vector<8x480xf32>,
    %c0_6 = arith.constant 0 : index
    %c0_7 = arith.constant 0 : index
    %c157 = arith.constant 157 : index
    %6 = vector.load %arg1[%c0_6, %c0_7, %c157] : memref<1x8x1024xf32, #tpu.memory_space<vmem>>, vector<1x8x480xf32>
    %7 = vector.shape_cast %6 : vector<1x8x480xf32> to vector<8x480xf32>
    %c16 = arith.constant 16 : index
    %c0_8 = arith.constant 0 : index
    %8 = vector.load %arg6[%c16, %c0_8] : memref<392x480xf32, #tpu.memory_space<vmem>>, vector<8x480xf32>
    tpu.vector_store %arg6[%c16, %c0_8], %7 {strides = array<i32>} : memref<392x480xf32, #tpu.memory_space<vmem>>, vector<8x480xf32>,
    %c0_9 = arith.constant 0 : index
    %c0_10 = arith.constant 0 : index
    %c159 = arith.constant 159 : index
    %9 = vector.load %arg1[%c0_9, %c0_10, %c159] : memref<1x8x1024xf32, #tpu.memory_space<vmem>>, vector<1x8x480xf32>
    %10 = vector.shape_cast %9 : vector<1x8x480xf32> to vector<8x480xf32>
    %c24 = arith.constant 24 : index
    %c0_11 = arith.constant 0 : index
    %11 = vector.load %arg6[%c24, %c0_11] : memref<392x480xf32, #tpu.memory_space<vmem>>, vector<8x480xf32>
    tpu.vector_store %arg6[%c24, %c0_11], %10 {strides = array<i32>} : memref<392x480xf32, #tpu.memory_space<vmem>>, vector<8x480xf32>,
    %c0_12 = arith.constant 0 : index
    %c0_13 = arith.constant 0 : index
    %c215 = arith.constant 215 : index
    %12 = vector.load %arg1[%c0_12, %c0_13, %c215] : memref<1x8x1024xf32, #tpu.memory_space<vmem>>, vector<1x8x480xf32>
    %13 = vector.shape_cast %12 : vector<1x8x480xf32> to vector<8x480xf32>
    %c32 = arith.constant 32 : index
    %c0_14 = arith.constant 0 : index
    %14 = vector.load %arg6[%c32, %c0_14] : memref<392x480xf32, #tpu.memory_space<vmem>>, vector<8x480xf32>
    tpu.vector_store %arg6[%c32, %c0_14], %13 {strides = array<i32>} : memref<392x480xf32, #tpu.memory_space<vmem>>, vector<8x480xf32>,
    %c0_15 = arith.constant 0 : index
    %c0_16 = arith.constant 0 : index
    %c219 = arith.constant 219 : index
    %15 = vector.load %arg1[%c0_15, %c0_16, %c219] : memref<1x8x1024xf32, #tpu.memory_space<vmem>>, vector<1x8x480xf32>
    %16 = vector.shape_cast %15 : vector<1x8x480xf32> to vector<8x480xf32>
    %c40 = arith.constant 40 : index
    %c0_17 = arith.constant 0 : index
    %17 = vector.load %arg6[%c40, %c0_17] : memref<392x480xf32, #tpu.memory_space<vmem>>, vector<8x480xf32>
    tpu.vector_store %arg6[%c40, %c0_17], %16 {strides = array<i32>} : memref<392x480xf32, #tpu.memory_space<vmem>>, vector<8x480xf32>,
    %c0_18 = arith.constant 0 : index
    %c0_19 = arith.constant 0 : index
    %c275 = arith.constant 275 : index
    %18 = vector.load %arg1[%c0_18, %c0_19, %c275] : memref<1x8x1024xf32, #tpu.memory_space<vmem>>, vector<1x8x480xf32>
    %19 = vector.shape_cast %18 : vector<1x8x480xf32> to vector<8x480xf32>
    %c48 = arith.constant 48 : index
    %c0_20 = arith.constant 0 : index
    %20 = vector.load %arg6[%c48, %c0_20] : memref<392x480xf32, #tpu.memory_space<vmem>>, vector<8x480xf32>
    tpu.vector_store %arg6[%c48, %c0_20], %19 {strides = array<i32>} : memref<392x480xf32, #tpu.memory_space<vmem>>, vector<8x480xf32>,
    %c0_21 = arith.constant 0 : index
    %c0_22 = arith.constant 0 : index
    %c277 = arith.constant 277 : index
    %21 = vector.load %arg1[%c0_21, %c0_22, %c277] : memref<1x8x1024xf32, #tpu.memory_space<vmem>>, vector<1x8x480xf32>
    %22 = vector.shape_cast %21 : vector<1x8x480xf32> to vector<8x480xf32>
    %c56 = arith.constant 56 : index
    %c0_23 = arith.constant 0 : index
    %23 = vector.load %arg6[%c56, %c0_23] : memref<392x480xf32, #tpu.memory_space<vmem>>, vector<8x480xf32>
    tpu.vector_store %arg6[%c56, %c0_23], %22 {strides = array<i32>} : memref<392x480xf32, #tpu.memory_space<vmem>>, vector<8x480xf32>,
    %c0_24 = arith.constant 0 : index
    %c0_25 = arith.constant 0 : index
    %c279 = arith.constant 279 : index
    %24 = vector.load %arg1[%c0_24, %c0_25, %c279] : memref<1x8x1024xf32, #tpu.memory_space<vmem>>, vector<1x8x480xf32>
    %25 = vector.shape_cast %24 : vector<1x8x480xf32> to vector<8x480xf32>
    %c64 = arith.constant 64 : index
    %c0_26 = arith.constant 0 : index
    %26 = vector.load %arg6[%c64, %c0_26] : memref<392x480xf32, #tpu.memory_space<vmem>>, vector<8x480xf32>
    tpu.vector_store %arg6[%c64, %c0_26], %25 {strides = array<i32>} : memref<392x480xf32, #tpu.memory_space<vmem>>, vector<8x480xf32>,
    %c0_27 = arith.constant 0 : index
    %c0_28 = arith.constant 0 : index
    %c124 = arith.constant 124 : index
    %27 = vector.load %arg1[%c0_27, %c0_28, %c124] : memref<1x8x1024xf32, #tpu.memory_space<vmem>>, vector<1x8x480xf32>
    %28 = vector.shape_cast %27 : vector<1x8x480xf32> to vector<8x480xf32>
    %c72 = arith.constant 72 : index
    %c0_29 = arith.constant 0 : index
    %29 = vector.load %arg6[%c72, %c0_29] : memref<392x480xf32, #tpu.memory_space<vmem>>, vector<8x480xf32>
    tpu.vector_store %arg6[%c72, %c0_29], %28 {strides = array<i32>} : memref<392x480xf32, #tpu.memory_space<vmem>>, vector<8x480xf32>,
    %c0_30 = arith.constant 0 : index
    %c0_31 = arith.constant 0 : index
    %c127 = arith.constant 127 : index
    %30 = vector.load %arg1[%c0_30, %c0_31, %c127] : memref<1x8x1024xf32, #tpu.memory_space<vmem>>, vector<1x8x480xf32>
    %31 = vector.shape_cast %30 : vector<1x8x480xf32> to vector<8x480xf32>
    %c80 = arith.constant 80 : index
    %c0_32 = arith.constant 0 : index
    %32 = vector.load %arg6[%c80, %c0_32] : memref<392x480xf32, #tpu.memory_space<vmem>>, vector<8x480xf32>
    tpu.vector_store %arg6[%c80, %c0_32], %31 {strides = array<i32>} : memref<392x480xf32, #tpu.memory_space<vmem>>, vector<8x480xf32>,
    %c0_33 = arith.constant 0 : index
    %c0_34 = arith.constant 0 : index
    %c130 = arith.constant 130 : index
    %33 = vector.load %arg1[%c0_33, %c0_34, %c130] : memref<1x8x1024xf32, #tpu.memory_space<vmem>>, vector<1x8x480xf32>
    %34 = vector.shape_cast %33 : vector<1x8x480xf32> to vector<8x480xf32>
    %c88 = arith.constant 88 : index
    %c0_35 = arith.constant 0 : index
    %35 = vector.load %arg6[%c88, %c0_35] : memref<392x480xf32, #tpu.memory_space<vmem>>, vector<8x480xf32>
    tpu.vector_store %arg6[%c88, %c0_35], %34 {strides = array<i32>} : memref<392x480xf32, #tpu.memory_space<vmem>>, vector<8x480xf32>,
    %c0_36 = arith.constant 0 : index
    %c0_37 = arith.constant 0 : index
    %c214 = arith.constant 214 : index
    %36 = vector.load %arg1[%c0_36, %c0_37, %c214] : memref<1x8x1024xf32, #tpu.memory_space<vmem>>, vector<1x8x480xf32>
    %37 = vector.shape_cast %36 : vector<1x8x480xf32> to vector<8x480xf32>
    %c96 = arith.constant 96 : index
    %c0_38 = arith.constant 0 : index
    %38 = vector.load %arg6[%c96, %c0_38] : memref<392x480xf32, #tpu.memory_space<vmem>>, vector<8x480xf32>
    tpu.vector_store %arg6[%c96, %c0_38], %37 {strides = array<i32>} : memref<392x480xf32, #tpu.memory_space<vmem>>, vector<8x480xf32>,
    %c0_39 = arith.constant 0 : index
    %c0_40 = arith.constant 0 : index
    %c220 = arith.constant 220 : index
    %39 = vector.load %arg1[%c0_39, %c0_40, %c220] : memref<1x8x1024xf32, #tpu.memory_space<vmem>>, vector<1x8x480xf32>
    %40 = vector.shape_cast %39 : vector<1x8x480xf32> to vector<8x480xf32>
    %c104 = arith.constant 104 : index
    %c0_41 = arith.constant 0 : index
    %41 = vector.load %arg6[%c104, %c0_41] : memref<392x480xf32, #tpu.memory_space<vmem>>, vector<8x480xf32>
    tpu.vector_store %arg6[%c104, %c0_41], %40 {strides = array<i32>} : memref<392x480xf32, #tpu.memory_space<vmem>>, vector<8x480xf32>,
    %c0_42 = arith.constant 0 : index
    %c0_43 = arith.constant 0 : index
    %c304 = arith.constant 304 : index
    %42 = vector.load %arg1[%c0_42, %c0_43, %c304] : memref<1x8x1024xf32, #tpu.memory_space<vmem>>, vector<1x8x480xf32>
    %43 = vector.shape_cast %42 : vector<1x8x480xf32> to vector<8x480xf32>
    %c112 = arith.constant 112 : index
    %c0_44 = arith.constant 0 : index
    %44 = vector.load %arg6[%c112, %c0_44] : memref<392x480xf32, #tpu.memory_space<vmem>>, vector<8x480xf32>
    tpu.vector_store %arg6[%c112, %c0_44], %43 {strides = array<i32>} : memref<392x480xf32, #tpu.memory_space<vmem>>, vector<8x480xf32>,
    %c0_45 = arith.constant 0 : index
    %c0_46 = arith.constant 0 : index
    %c307 = arith.constant 307 : index
    %45 = vector.load %arg1[%c0_45, %c0_46, %c307] : memref<1x8x1024xf32, #tpu.memory_space<vmem>>, vector<1x8x480xf32>
    %46 = vector.shape_cast %45 : vector<1x8x480xf32> to vector<8x480xf32>
    %c120 = arith.constant 120 : index
    %c0_47 = arith.constant 0 : index
    %47 = vector.load %arg6[%c120, %c0_47] : memref<392x480xf32, #tpu.memory_space<vmem>>, vector<8x480xf32>
    tpu.vector_store %arg6[%c120, %c0_47], %46 {strides = array<i32>} : memref<392x480xf32, #tpu.memory_space<vmem>>, vector<8x480xf32>,
    %c0_48 = arith.constant 0 : index
    %c0_49 = arith.constant 0 : index
    %c310 = arith.constant 310 : index
    %48 = vector.load %arg1[%c0_48, %c0_49, %c310] : memref<1x8x1024xf32, #tpu.memory_space<vmem>>, vector<1x8x480xf32>
    %49 = vector.shape_cast %48 : vector<1x8x480xf32> to vector<8x480xf32>
    %c128 = arith.constant 128 : index
    %c0_50 = arith.constant 0 : index
    %50 = vector.load %arg6[%c128, %c0_50] : memref<392x480xf32, #tpu.memory_space<vmem>>, vector<8x480xf32>
    tpu.vector_store %arg6[%c128, %c0_50], %49 {strides = array<i32>} : memref<392x480xf32, #tpu.memory_space<vmem>>, vector<8x480xf32>,
    %c0_51 = arith.constant 0 : index
    %c0_52 = arith.constant 0 : index
    %c93 = arith.constant 93 : index
    %51 = vector.load %arg1[%c0_51, %c0_52, %c93] : memref<1x8x1024xf32, #tpu.memory_space<vmem>>, vector<1x8x480xf32>
    %52 = vector.shape_cast %51 : vector<1x8x480xf32> to vector<8x480xf32>
    %c136 = arith.constant 136 : index
    %c0_53 = arith.constant 0 : index
    %53 = vector.load %arg6[%c136, %c0_53] : memref<392x480xf32, #tpu.memory_space<vmem>>, vector<8x480xf32>
    tpu.vector_store %arg6[%c136, %c0_53], %52 {strides = array<i32>} : memref<392x480xf32, #tpu.memory_space<vmem>>, vector<8x480xf32>,
    %c0_54 = arith.constant 0 : index
    %c0_55 = arith.constant 0 : index
    %c97 = arith.constant 97 : index
    %54 = vector.load %arg1[%c0_54, %c0_55, %c97] : memref<1x8x1024xf32, #tpu.memory_space<vmem>>, vector<1x8x480xf32>
    %55 = vector.shape_cast %54 : vector<1x8x480xf32> to vector<8x480xf32>
    %c144 = arith.constant 144 : index
    %c0_56 = arith.constant 0 : index
    %56 = vector.load %arg6[%c144, %c0_56] : memref<392x480xf32, #tpu.memory_space<vmem>>, vector<8x480xf32>
    tpu.vector_store %arg6[%c144, %c0_56], %55 {strides = array<i32>} : memref<392x480xf32, #tpu.memory_space<vmem>>, vector<8x480xf32>,
    %c0_57 = arith.constant 0 : index
    %c0_58 = arith.constant 0 : index
    %c101 = arith.constant 101 : index
    %57 = vector.load %arg1[%c0_57, %c0_58, %c101] : memref<1x8x1024xf32, #tpu.memory_space<vmem>>, vector<1x8x480xf32>
    %58 = vector.shape_cast %57 : vector<1x8x480xf32> to vector<8x480xf32>
    %c152 = arith.constant 152 : index
    %c0_59 = arith.constant 0 : index
    %59 = vector.load %arg6[%c152, %c0_59] : memref<392x480xf32, #tpu.memory_space<vmem>>, vector<8x480xf32>
    tpu.vector_store %arg6[%c152, %c0_59], %58 {strides = array<i32>} : memref<392x480xf32, #tpu.memory_space<vmem>>, vector<8x480xf32>,
    %c0_60 = arith.constant 0 : index
    %c0_61 = arith.constant 0 : index
    %c213 = arith.constant 213 : index
    %60 = vector.load %arg1[%c0_60, %c0_61, %c213] : memref<1x8x1024xf32, #tpu.memory_space<vmem>>, vector<1x8x480xf32>
    %61 = vector.shape_cast %60 : vector<1x8x480xf32> to vector<8x480xf32>
    %c160 = arith.constant 160 : index
    %c0_62 = arith.constant 0 : index
    %62 = vector.load %arg6[%c160, %c0_62] : memref<392x480xf32, #tpu.memory_space<vmem>>, vector<8x480xf32>
    tpu.vector_store %arg6[%c160, %c0_62], %61 {strides = array<i32>} : memref<392x480xf32, #tpu.memory_space<vmem>>, vector<8x480xf32>,
    %c0_63 = arith.constant 0 : index
    %c0_64 = arith.constant 0 : index
    %c221 = arith.constant 221 : index
    %63 = vector.load %arg1[%c0_63, %c0_64, %c221] : memref<1x8x1024xf32, #tpu.memory_space<vmem>>, vector<1x8x480xf32>
    %64 = vector.shape_cast %63 : vector<1x8x480xf32> to vector<8x480xf32>
    %c168 = arith.constant 168 : index
    %c0_65 = arith.constant 0 : index
    %65 = vector.load %arg6[%c168, %c0_65] : memref<392x480xf32, #tpu.memory_space<vmem>>, vector<8x480xf32>
    tpu.vector_store %arg6[%c168, %c0_65], %64 {strides = array<i32>} : memref<392x480xf32, #tpu.memory_space<vmem>>, vector<8x480xf32>,
    %c0_66 = arith.constant 0 : index
    %c0_67 = arith.constant 0 : index
    %c333 = arith.constant 333 : index
    %66 = vector.load %arg1[%c0_66, %c0_67, %c333] : memref<1x8x1024xf32, #tpu.memory_space<vmem>>, vector<1x8x480xf32>
    %67 = vector.shape_cast %66 : vector<1x8x480xf32> to vector<8x480xf32>
    %c176 = arith.constant 176 : index
    %c0_68 = arith.constant 0 : index
    %68 = vector.load %arg6[%c176, %c0_68] : memref<392x480xf32, #tpu.memory_space<vmem>>, vector<8x480xf32>
    tpu.vector_store %arg6[%c176, %c0_68], %67 {strides = array<i32>} : memref<392x480xf32, #tpu.memory_space<vmem>>, vector<8x480xf32>,
    %c0_69 = arith.constant 0 : index
    %c0_70 = arith.constant 0 : index
    %c337 = arith.constant 337 : index
    %69 = vector.load %arg1[%c0_69, %c0_70, %c337] : memref<1x8x1024xf32, #tpu.memory_space<vmem>>, vector<1x8x480xf32>
    %70 = vector.shape_cast %69 : vector<1x8x480xf32> to vector<8x480xf32>
    %c184 = arith.constant 184 : index
    %c0_71 = arith.constant 0 : index
    %71 = vector.load %arg6[%c184, %c0_71] : memref<392x480xf32, #tpu.memory_space<vmem>>, vector<8x480xf32>
    tpu.vector_store %arg6[%c184, %c0_71], %70 {strides = array<i32>} : memref<392x480xf32, #tpu.memory_space<vmem>>, vector<8x480xf32>,
    %c0_72 = arith.constant 0 : index
    %c0_73 = arith.constant 0 : index
    %c341 = arith.constant 341 : index
    %72 = vector.load %arg1[%c0_72, %c0_73, %c341] : memref<1x8x1024xf32, #tpu.memory_space<vmem>>, vector<1x8x480xf32>
    %73 = vector.shape_cast %72 : vector<1x8x480xf32> to vector<8x480xf32>
    %c192 = arith.constant 192 : index
    %c0_74 = arith.constant 0 : index
    %74 = vector.load %arg6[%c192, %c0_74] : memref<392x480xf32, #tpu.memory_space<vmem>>, vector<8x480xf32>
    tpu.vector_store %arg6[%c192, %c0_74], %73 {strides = array<i32>} : memref<392x480xf32, #tpu.memory_space<vmem>>, vector<8x480xf32>,
    %c0_75 = arith.constant 0 : index
    %c0_76 = arith.constant 0 : index
    %c62 = arith.constant 62 : index
    %75 = vector.load %arg1[%c0_75, %c0_76, %c62] : memref<1x8x1024xf32, #tpu.memory_space<vmem>>, vector<1x8x480xf32>
    %76 = vector.shape_cast %75 : vector<1x8x480xf32> to vector<8x480xf32>
    %c200 = arith.constant 200 : index
    %c0_77 = arith.constant 0 : index
    %77 = vector.load %arg6[%c200, %c0_77] : memref<392x480xf32, #tpu.memory_space<vmem>>, vector<8x480xf32>
    tpu.vector_store %arg6[%c200, %c0_77], %76 {strides = array<i32>} : memref<392x480xf32, #tpu.memory_space<vmem>>, vector<8x480xf32>,
    %c0_78 = arith.constant 0 : index
    %c0_79 = arith.constant 0 : index
    %c67 = arith.constant 67 : index
    %78 = vector.load %arg1[%c0_78, %c0_79, %c67] : memref<1x8x1024xf32, #tpu.memory_space<vmem>>, vector<1x8x480xf32>
    %79 = vector.shape_cast %78 : vector<1x8x480xf32> to vector<8x480xf32>
    %c208 = arith.constant 208 : index
    %c0_80 = arith.constant 0 : index
    %80 = vector.load %arg6[%c208, %c0_80] : memref<392x480xf32, #tpu.memory_space<vmem>>, vector<8x480xf32>
    tpu.vector_store %arg6[%c208, %c0_80], %79 {strides = array<i32>} : memref<392x480xf32, #tpu.memory_space<vmem>>, vector<8x480xf32>,
    %c0_81 = arith.constant 0 : index
    %c0_82 = arith.constant 0 : index
    %c72_83 = arith.constant 72 : index
    %81 = vector.load %arg1[%c0_81, %c0_82, %c72_83] : memref<1x8x1024xf32, #tpu.memory_space<vmem>>, vector<1x8x480xf32>
    %82 = vector.shape_cast %81 : vector<1x8x480xf32> to vector<8x480xf32>
    %c216 = arith.constant 216 : index
    %c0_84 = arith.constant 0 : index
    %83 = vector.load %arg6[%c216, %c0_84] : memref<392x480xf32, #tpu.memory_space<vmem>>, vector<8x480xf32>
    tpu.vector_store %arg6[%c216, %c0_84], %82 {strides = array<i32>} : memref<392x480xf32, #tpu.memory_space<vmem>>, vector<8x480xf32>,
    %c0_85 = arith.constant 0 : index
    %c0_86 = arith.constant 0 : index
    %c212 = arith.constant 212 : index
    %84 = vector.load %arg1[%c0_85, %c0_86, %c212] : memref<1x8x1024xf32, #tpu.memory_space<vmem>>, vector<1x8x480xf32>
    %85 = vector.shape_cast %84 : vector<1x8x480xf32> to vector<8x480xf32>
    %c224 = arith.constant 224 : index
    %c0_87 = arith.constant 0 : index
    %86 = vector.load %arg6[%c224, %c0_87] : memref<392x480xf32, #tpu.memory_space<vmem>>, vector<8x480xf32>
    tpu.vector_store %arg6[%c224, %c0_87], %85 {strides = array<i32>} : memref<392x480xf32, #tpu.memory_space<vmem>>, vector<8x480xf32>,
    %c0_88 = arith.constant 0 : index
    %c0_89 = arith.constant 0 : index
    %c222 = arith.constant 222 : index
    %87 = vector.load %arg1[%c0_88, %c0_89, %c222] : memref<1x8x1024xf32, #tpu.memory_space<vmem>>, vector<1x8x480xf32>
    %88 = vector.shape_cast %87 : vector<1x8x480xf32> to vector<8x480xf32>
    %c232 = arith.constant 232 : index
    %c0_90 = arith.constant 0 : index
    %89 = vector.load %arg6[%c232, %c0_90] : memref<392x480xf32, #tpu.memory_space<vmem>>, vector<8x480xf32>
    tpu.vector_store %arg6[%c232, %c0_90], %88 {strides = array<i32>} : memref<392x480xf32, #tpu.memory_space<vmem>>, vector<8x480xf32>,
    %c0_91 = arith.constant 0 : index
    %c0_92 = arith.constant 0 : index
    %c362 = arith.constant 362 : index
    %90 = vector.load %arg1[%c0_91, %c0_92, %c362] : memref<1x8x1024xf32, #tpu.memory_space<vmem>>, vector<1x8x480xf32>
    %91 = vector.shape_cast %90 : vector<1x8x480xf32> to vector<8x480xf32>
    %c240 = arith.constant 240 : index
    %c0_93 = arith.constant 0 : index
    %92 = vector.load %arg6[%c240, %c0_93] : memref<392x480xf32, #tpu.memory_space<vmem>>, vector<8x480xf32>
    tpu.vector_store %arg6[%c240, %c0_93], %91 {strides = array<i32>} : memref<392x480xf32, #tpu.memory_space<vmem>>, vector<8x480xf32>,
    %c0_94 = arith.constant 0 : index
    %c0_95 = arith.constant 0 : index
    %c367 = arith.constant 367 : index
    %93 = vector.load %arg1[%c0_94, %c0_95, %c367] : memref<1x8x1024xf32, #tpu.memory_space<vmem>>, vector<1x8x480xf32>
    %94 = vector.shape_cast %93 : vector<1x8x480xf32> to vector<8x480xf32>
    %c248 = arith.constant 248 : index
    %c0_96 = arith.constant 0 : index
    %95 = vector.load %arg6[%c248, %c0_96] : memref<392x480xf32, #tpu.memory_space<vmem>>, vector<8x480xf32>
    tpu.vector_store %arg6[%c248, %c0_96], %94 {strides = array<i32>} : memref<392x480xf32, #tpu.memory_space<vmem>>, vector<8x480xf32>,
    %c0_97 = arith.constant 0 : index
    %c0_98 = arith.constant 0 : index
    %c372 = arith.constant 372 : index
    %96 = vector.load %arg1[%c0_97, %c0_98, %c372] : memref<1x8x1024xf32, #tpu.memory_space<vmem>>, vector<1x8x480xf32>
    %97 = vector.shape_cast %96 : vector<1x8x480xf32> to vector<8x480xf32>
    %c256 = arith.constant 256 : index
    %c0_99 = arith.constant 0 : index
    %98 = vector.load %arg6[%c256, %c0_99] : memref<392x480xf32, #tpu.memory_space<vmem>>, vector<8x480xf32>
    tpu.vector_store %arg6[%c256, %c0_99], %97 {strides = array<i32>} : memref<392x480xf32, #tpu.memory_space<vmem>>, vector<8x480xf32>,
    %c0_100 = arith.constant 0 : index
    %c0_101 = arith.constant 0 : index
    %c31 = arith.constant 31 : index
    %99 = vector.load %arg1[%c0_100, %c0_101, %c31] : memref<1x8x1024xf32, #tpu.memory_space<vmem>>, vector<1x8x480xf32>
    %100 = vector.shape_cast %99 : vector<1x8x480xf32> to vector<8x480xf32>
    %c264 = arith.constant 264 : index
    %c0_102 = arith.constant 0 : index
    %101 = vector.load %arg6[%c264, %c0_102] : memref<392x480xf32, #tpu.memory_space<vmem>>, vector<8x480xf32>
    tpu.vector_store %arg6[%c264, %c0_102], %100 {strides = array<i32>} : memref<392x480xf32, #tpu.memory_space<vmem>>, vector<8x480xf32>,
    %c0_103 = arith.constant 0 : index
    %c0_104 = arith.constant 0 : index
    %c37 = arith.constant 37 : index
    %102 = vector.load %arg1[%c0_103, %c0_104, %c37] : memref<1x8x1024xf32, #tpu.memory_space<vmem>>, vector<1x8x480xf32>
    %103 = vector.shape_cast %102 : vector<1x8x480xf32> to vector<8x480xf32>
    %c272 = arith.constant 272 : index
    %c0_105 = arith.constant 0 : index
    %104 = vector.load %arg6[%c272, %c0_105] : memref<392x480xf32, #tpu.memory_space<vmem>>, vector<8x480xf32>
    tpu.vector_store %arg6[%c272, %c0_105], %103 {strides = array<i32>} : memref<392x480xf32, #tpu.memory_space<vmem>>, vector<8x480xf32>,
    %c0_106 = arith.constant 0 : index
    %c0_107 = arith.constant 0 : index
    %c43 = arith.constant 43 : index
    %105 = vector.load %arg1[%c0_106, %c0_107, %c43] : memref<1x8x1024xf32, #tpu.memory_space<vmem>>, vector<1x8x480xf32>
    %106 = vector.shape_cast %105 : vector<1x8x480xf32> to vector<8x480xf32>
    %c280 = arith.constant 280 : index
    %c0_108 = arith.constant 0 : index
    %107 = vector.load %arg6[%c280, %c0_108] : memref<392x480xf32, #tpu.memory_space<vmem>>, vector<8x480xf32>
    tpu.vector_store %arg6[%c280, %c0_108], %106 {strides = array<i32>} : memref<392x480xf32, #tpu.memory_space<vmem>>, vector<8x480xf32>,
    %c0_109 = arith.constant 0 : index
    %c0_110 = arith.constant 0 : index
    %c211 = arith.constant 211 : index
    %108 = vector.load %arg1[%c0_109, %c0_110, %c211] : memref<1x8x1024xf32, #tpu.memory_space<vmem>>, vector<1x8x480xf32>
    %109 = vector.shape_cast %108 : vector<1x8x480xf32> to vector<8x480xf32>
    %c288 = arith.constant 288 : index
    %c0_111 = arith.constant 0 : index
    %110 = vector.load %arg6[%c288, %c0_111] : memref<392x480xf32, #tpu.memory_space<vmem>>, vector<8x480xf32>
    tpu.vector_store %arg6[%c288, %c0_111], %109 {strides = array<i32>} : memref<392x480xf32, #tpu.memory_space<vmem>>, vector<8x480xf32>,
    %c0_112 = arith.constant 0 : index
    %c0_113 = arith.constant 0 : index
    %c223 = arith.constant 223 : index
    %111 = vector.load %arg1[%c0_112, %c0_113, %c223] : memref<1x8x1024xf32, #tpu.memory_space<vmem>>, vector<1x8x480xf32>
    %112 = vector.shape_cast %111 : vector<1x8x480xf32> to vector<8x480xf32>
    %c296 = arith.constant 296 : index
    %c0_114 = arith.constant 0 : index
    %113 = vector.load %arg6[%c296, %c0_114] : memref<392x480xf32, #tpu.memory_space<vmem>>, vector<8x480xf32>
    tpu.vector_store %arg6[%c296, %c0_114], %112 {strides = array<i32>} : memref<392x480xf32, #tpu.memory_space<vmem>>, vector<8x480xf32>,
    %c0_115 = arith.constant 0 : index
    %c0_116 = arith.constant 0 : index
    %c391 = arith.constant 391 : index
    %114 = vector.load %arg1[%c0_115, %c0_116, %c391] : memref<1x8x1024xf32, #tpu.memory_space<vmem>>, vector<1x8x480xf32>
    %115 = vector.shape_cast %114 : vector<1x8x480xf32> to vector<8x480xf32>
    %c304_117 = arith.constant 304 : index
    %c0_118 = arith.constant 0 : index
    %116 = vector.load %arg6[%c304_117, %c0_118] : memref<392x480xf32, #tpu.memory_space<vmem>>, vector<8x480xf32>
    tpu.vector_store %arg6[%c304_117, %c0_118], %115 {strides = array<i32>} : memref<392x480xf32, #tpu.memory_space<vmem>>, vector<8x480xf32>,
    %c0_119 = arith.constant 0 : index
    %c0_120 = arith.constant 0 : index
    %c397 = arith.constant 397 : index
    %117 = vector.load %arg1[%c0_119, %c0_120, %c397] : memref<1x8x1024xf32, #tpu.memory_space<vmem>>, vector<1x8x480xf32>
    %118 = vector.shape_cast %117 : vector<1x8x480xf32> to vector<8x480xf32>
    %c312 = arith.constant 312 : index
    %c0_121 = arith.constant 0 : index
    %119 = vector.load %arg6[%c312, %c0_121] : memref<392x480xf32, #tpu.memory_space<vmem>>, vector<8x480xf32>
    tpu.vector_store %arg6[%c312, %c0_121], %118 {strides = array<i32>} : memref<392x480xf32, #tpu.memory_space<vmem>>, vector<8x480xf32>,
    %c0_122 = arith.constant 0 : index
    %c0_123 = arith.constant 0 : index
    %c403 = arith.constant 403 : index
    %120 = vector.load %arg1[%c0_122, %c0_123, %c403] : memref<1x8x1024xf32, #tpu.memory_space<vmem>>, vector<1x8x480xf32>
    %121 = vector.shape_cast %120 : vector<1x8x480xf32> to vector<8x480xf32>
    %c320 = arith.constant 320 : index
    %c0_124 = arith.constant 0 : index
    %122 = vector.load %arg6[%c320, %c0_124] : memref<392x480xf32, #tpu.memory_space<vmem>>, vector<8x480xf32>
    tpu.vector_store %arg6[%c320, %c0_124], %121 {strides = array<i32>} : memref<392x480xf32, #tpu.memory_space<vmem>>, vector<8x480xf32>,
    %c0_125 = arith.constant 0 : index
    %c0_126 = arith.constant 0 : index
    %c0_127 = arith.constant 0 : index
    %123 = vector.load %arg1[%c0_125, %c0_126, %c0_127] : memref<1x8x1024xf32, #tpu.memory_space<vmem>>, vector<1x8x480xf32>
    %124 = vector.shape_cast %123 : vector<1x8x480xf32> to vector<8x480xf32>
    %c328 = arith.constant 328 : index
    %c0_128 = arith.constant 0 : index
    %125 = vector.load %arg6[%c328, %c0_128] : memref<392x480xf32, #tpu.memory_space<vmem>>, vector<8x480xf32>
    tpu.vector_store %arg6[%c328, %c0_128], %124 {strides = array<i32>} : memref<392x480xf32, #tpu.memory_space<vmem>>, vector<8x480xf32>,
    %c0_129 = arith.constant 0 : index
    %c0_130 = arith.constant 0 : index
    %c7 = arith.constant 7 : index
    %126 = vector.load %arg1[%c0_129, %c0_130, %c7] : memref<1x8x1024xf32, #tpu.memory_space<vmem>>, vector<1x8x480xf32>
    %127 = vector.shape_cast %126 : vector<1x8x480xf32> to vector<8x480xf32>
    %c336 = arith.constant 336 : index
    %c0_131 = arith.constant 0 : index
    %128 = vector.load %arg6[%c336, %c0_131] : memref<392x480xf32, #tpu.memory_space<vmem>>, vector<8x480xf32>
    tpu.vector_store %arg6[%c336, %c0_131], %127 {strides = array<i32>} : memref<392x480xf32, #tpu.memory_space<vmem>>, vector<8x480xf32>,
    %c0_132 = arith.constant 0 : index
    %c0_133 = arith.constant 0 : index
    %c14 = arith.constant 14 : index
    %129 = vector.load %arg1[%c0_132, %c0_133, %c14] : memref<1x8x1024xf32, #tpu.memory_space<vmem>>, vector<1x8x480xf32>
    %130 = vector.shape_cast %129 : vector<1x8x480xf32> to vector<8x480xf32>
    %c344 = arith.constant 344 : index
    %c0_134 = arith.constant 0 : index
    %131 = vector.load %arg6[%c344, %c0_134] : memref<392x480xf32, #tpu.memory_space<vmem>>, vector<8x480xf32>
    tpu.vector_store %arg6[%c344, %c0_134], %130 {strides = array<i32>} : memref<392x480xf32, #tpu.memory_space<vmem>>, vector<8x480xf32>,
    %c0_135 = arith.constant 0 : index
    %c0_136 = arith.constant 0 : index
    %c210 = arith.constant 210 : index
    %132 = vector.load %arg1[%c0_135, %c0_136, %c210] : memref<1x8x1024xf32, #tpu.memory_space<vmem>>, vector<1x8x480xf32>
    %133 = vector.shape_cast %132 : vector<1x8x480xf32> to vector<8x480xf32>
    %c352 = arith.constant 352 : index
    %c0_137 = arith.constant 0 : index
    %134 = vector.load %arg6[%c352, %c0_137] : memref<392x480xf32, #tpu.memory_space<vmem>>, vector<8x480xf32>
    tpu.vector_store %arg6[%c352, %c0_137], %133 {strides = array<i32>} : memref<392x480xf32, #tpu.memory_space<vmem>>, vector<8x480xf32>,
    %c0_138 = arith.constant 0 : index
    %c0_139 = arith.constant 0 : index
    %c224_140 = arith.constant 224 : index
    %135 = vector.load %arg1[%c0_138, %c0_139, %c224_140] : memref<1x8x1024xf32, #tpu.memory_space<vmem>>, vector<1x8x480xf32>
    %136 = vector.shape_cast %135 : vector<1x8x480xf32> to vector<8x480xf32>
    %c360 = arith.constant 360 : index
    %c0_141 = arith.constant 0 : index
    %137 = vector.load %arg6[%c360, %c0_141] : memref<392x480xf32, #tpu.memory_space<vmem>>, vector<8x480xf32>
    tpu.vector_store %arg6[%c360, %c0_141], %136 {strides = array<i32>} : memref<392x480xf32, #tpu.memory_space<vmem>>, vector<8x480xf32>,
    %c0_142 = arith.constant 0 : index
    %c0_143 = arith.constant 0 : index
    %c420 = arith.constant 420 : index
    %138 = vector.load %arg1[%c0_142, %c0_143, %c420] : memref<1x8x1024xf32, #tpu.memory_space<vmem>>, vector<1x8x480xf32>
    %139 = vector.shape_cast %138 : vector<1x8x480xf32> to vector<8x480xf32>
    %c368 = arith.constant 368 : index
    %c0_144 = arith.constant 0 : index
    %140 = vector.load %arg6[%c368, %c0_144] : memref<392x480xf32, #tpu.memory_space<vmem>>, vector<8x480xf32>
    tpu.vector_store %arg6[%c368, %c0_144], %139 {strides = array<i32>} : memref<392x480xf32, #tpu.memory_space<vmem>>, vector<8x480xf32>,
    %c0_145 = arith.constant 0 : index
    %c0_146 = arith.constant 0 : index
    %c427 = arith.constant 427 : index
    %141 = vector.load %arg1[%c0_145, %c0_146, %c427] : memref<1x8x1024xf32, #tpu.memory_space<vmem>>, vector<1x8x480xf32>
    %142 = vector.shape_cast %141 : vector<1x8x480xf32> to vector<8x480xf32>
    %c376 = arith.constant 376 : index
    %c0_147 = arith.constant 0 : index
    %143 = vector.load %arg6[%c376, %c0_147] : memref<392x480xf32, #tpu.memory_space<vmem>>, vector<8x480xf32>
    tpu.vector_store %arg6[%c376, %c0_147], %142 {strides = array<i32>} : memref<392x480xf32, #tpu.memory_space<vmem>>, vector<8x480xf32>,
    %c0_148 = arith.constant 0 : index
    %c0_149 = arith.constant 0 : index
    %c434 = arith.constant 434 : index
    %144 = vector.load %arg1[%c0_148, %c0_149, %c434] : memref<1x8x1024xf32, #tpu.memory_space<vmem>>, vector<1x8x480xf32>
    %145 = vector.shape_cast %144 : vector<1x8x480xf32> to vector<8x480xf32>
    %c384 = arith.constant 384 : index
    %c0_150 = arith.constant 0 : index
    %146 = vector.load %arg6[%c384, %c0_150] : memref<392x480xf32, #tpu.memory_space<vmem>>, vector<8x480xf32>
    tpu.vector_store %arg6[%c384, %c0_150], %145 {strides = array<i32>} : memref<392x480xf32, #tpu.memory_space<vmem>>, vector<8x480xf32>,
    %c0_151 = arith.constant 0 : index
    %c0_152 = arith.constant 0 : index
    %147 = vector.load %arg2[%c0_151, %c0_152] : memref<48x392xf32, #tpu.memory_space<vmem>>, vector<48x392xf32>
    %c0_153 = arith.constant 0 : index
    %c0_154 = arith.constant 0 : index
    %148 = vector.load %arg6[%c0_153, %c0_154] : memref<392x480xf32, #tpu.memory_space<vmem>>, vector<392x480xf32>
    %cst = arith.constant dense<0.000000e+00> : vector<48x480xf32>
    %149 = tpu.matmul %147, %148, %cst {dimension_numbers = #tpu.dot_dimension_numbers<[1], [0], [0], [1], [0, 0, 1, 1], [], []>} : vector<48x392xf32>, vector<392x480xf32>, vector<48x480xf32> -> vector<48x480xf32>
    %c0_155 = arith.constant 0 : index
    %c0_156 = arith.constant 0 : index
    %150 = vector.load %arg4[%c0_155, %c0_156] : memref<480x256xf32, #tpu.memory_space<vmem>>, vector<480x256xf32>
    %cst_157 = arith.constant dense<0.000000e+00> : vector<48x256xf32>
    %151 = tpu.matmul %149, %150, %cst_157 {dimension_numbers = #tpu.dot_dimension_numbers<[1], [0], [0], [1], [0, 0, 1, 1], [], []>} : vector<48x480xf32>, vector<480x256xf32>, vector<48x256xf32> -> vector<48x256xf32>
    %c0_158 = arith.constant 0 : index
    %c0_159 = arith.constant 0 : index
    %152 = vector.load %arg3[%c0_158, %c0_159] : memref<48x1xf32, #tpu.memory_space<vmem>>, vector<48x1xf32>
    %153 = vector.broadcast %152 : vector<48x1xf32> to vector<48x256xf32>
    %154 = arith.addf %151, %153 : vector<48x256xf32>
    %cst_160 = arith.constant 0.000000e+00 : f32
    %155 = vector.broadcast %cst_160 : f32 to vector<48x256xf32>
    %156 = arith.maximumf %154, %155 : vector<48x256xf32>
    %c0_161 = arith.constant 0 : index
    %c0_162 = arith.constant 0 : index
    %c0_163 = arith.constant 0 : index
    %157 = vector.load %arg5[%c0_161, %c0_162, %c0_163] : memref<1x48x256xf32, #tpu.memory_space<vmem>>, vector<1x48x256xf32>
    %158 = vector.shape_cast %157 : vector<1x48x256xf32> to vector<48x256xf32>
    %159 = vector.shape_cast %156 : vector<48x256xf32> to vector<1x48x256xf32>
    tpu.vector_store %arg5[%c0_161, %c0_162, %c0_163], %159 {strides = array<i32>} : memref<1x48x256xf32, #tpu.memory_space<vmem>>, vector<1x48x256xf32>,
    return
  }
  func.func @transform_0(%arg0: i32) -> (i32, i32, i32) {
    %c0_i32 = arith.constant 0 : i32
    %c0_i32_0 = arith.constant 0 : i32
    %c0_i32_1 = arith.constant 0 : i32
    return %arg0, %c0_i32, %c0_i32_0 : i32, i32, i32
  }
  func.func @transform_1(%arg0: i32) -> (i32, i32) {
    %c0_i32 = arith.constant 0 : i32
    %c0_i32_0 = arith.constant 0 : i32
    %c0_i32_1 = arith.constant 0 : i32
    return %c0_i32, %c0_i32_0 : i32, i32
  }
  func.func @transform_2(%arg0: i32) -> (i32, i32) {
    %c0_i32 = arith.constant 0 : i32
    %c0_i32_0 = arith.constant 0 : i32
    %c0_i32_1 = arith.constant 0 : i32
    return %c0_i32, %c0_i32_0 : i32, i32
  }
  func.func @transform_3(%arg0: i32) -> (i32, i32) {
    %c0_i32 = arith.constant 0 : i32
    %c0_i32_0 = arith.constant 0 : i32
    %c0_i32_1 = arith.constant 0 : i32
    return %c0_i32, %c0_i32_0 : i32, i32
  }
  func.func @transform_4(%arg0: i32) -> (i32, i32, i32) {
    %c0_i32 = arith.constant 0 : i32
    %c0_i32_0 = arith.constant 0 : i32
    %c0_i32_1 = arith.constant 0 : i32
    return %arg0, %c0_i32, %c0_i32_0 : i32, i32, i32
  }
}

</mosaic_0001>

<llo_original>
// kernel: dilate_merge_pallas.1
$region0: #{dilate_merge_pallas.1}
  #allocation0 [shape = 'u32[]', space=smem, size = 0x4, offset = 0x4, fixed_abs, tag = 'smem constant byte address 0x4 - core index']
  #allocation1 [shape = 'u32[144,128]{1,0:T(1,128)}', space=vmem, size = 0x12000, scoped, tag = 'internal scratch']
  #allocation2 [shape = 'f32[392,480]{1,0:T(8,128)}', space=vmem, size = 0xc4000, scoped, tag = 'scratch operand']
  %s0 = inlined_call_operand.vmem [shape: f32[2,8,1024], index: 0, kind: input, shape index: {}]
  %s1 = inlined_call_operand.vmem [shape: f32[48,392], index: 1, kind: input, shape index: {}]
  %s2 = inlined_call_operand.vmem [shape: f32[48,1], index: 2, kind: input, shape index: {}]
  %s3 = inlined_call_operand.vmem [shape: f32[480,256], index: 3, kind: input, shape index: {}]
  %s4 = inlined_call_operand.vmem [shape: f32[2,48,256], index: 4, kind: output, shape index: {}]
  %s5 = sld [smem:[#allocation0]]
  $region49: #{dilate_merge_pallas.1} parent=0
    _
  %s7 = ssub.s32 1, %s5
  %s8 = scalar_select 0, %s7, %s5
  loop: start=0, step=1, limit=4
  $region2: #{dilate_merge_pallas.1} parent=0 // loop_pre_header
    _
  $region3: #{dilate_merge_pallas.1} parent=0 // loop_header
    %s10 = sphi 0, %s14
    %p11 = scmp.ge.s32.totalorder %s10, 4
    %s20 = sphi 0, %s22
    %s23 = sphi 0, %s20
    %s24 = sphi 0, %s23
    %s40 = sphi 0, %s24
    %s44 = sphi 0, %s44
    %s46 = sphi 0, %s44
    %s47 = sphi 0, %s46
    %s61 = sphi 0, %s47
    %s65 = sphi 0, %s65
    %s67 = sphi 0, %s65
    %s68 = sphi 0, %s67
    %s82 = sphi 0, %s68
    %s86 = sphi 0, %s86
    %s88 = sphi 0, %s86
    %s89 = sphi 0, %s88
    %s103 = sphi 0, %s89
    %s109 = sphi 0, %s111
    %s112 = sphi 0, %s109
    %s113 = sphi 0, %s112
    %s129 = sphi 0, %s113
  $region4: #{dilate_merge_pallas.1} parent=0 // loop_header_branch
    %13 = sbr.rel (%p11) target = $region8
  $region5: #{dilate_merge_pallas.1} parent=0 // loop_body
    %s15 = ssub.s32 %s10, 1
    %s16 = ssub.s32 %s10, 2
    %s17 = sadd.s32 %s10, 1
    %s18 = ssub.s32 %s10, %s17
    %p19 = scmp.eq.s32.totalorder %s18, 0
    %s21 = sadd.s32 %s20, 1
    %s22 = scalar_select %p19, %s20, %s21
    %p25 = pneg %p19
    %p26 = scmp.eq.s32.totalorder %s10, 1
    %p27 = por %p25, %p26
    %p28 = scmp.ne.s32.totalorder %s20, %s23
    %p29 = scmp.eq.s32.totalorder %s10, 0
    %p30 = por %p28, %p29
    %p31 = scmp.ne.s32.totalorder %s20, %s23
    %p32 = scmp.eq.s32.totalorder %s15, 1
    %p33 = por %p31, %p32
    %p34 = scmp.ne.s32.totalorder %s23, %s24
    %p35 = scmp.eq.s32.totalorder %s15, 0
    %p36 = por %p34, %p35
    %p37 = scmp.ne.s32.totalorder %s23, %s24
    %p38 = scmp.eq.s32.totalorder %s16, 1
    %p39 = por %p37, %p38
    %p41 = scmp.ne.s32.totalorder %s24, %s40
    %p42 = scmp.eq.s32.totalorder %s16, 0
    %p43 = por %p41, %p42
    %s45 = sadd.s32 %s44, 1
    %p48 = scmp.eq.s32.totalorder %s10, 1
    %p49 = scmp.ne.s32.totalorder %s44, %s46
    %p50 = scmp.eq.s32.totalorder %s10, 0
    %p51 = por %p49, %p50
    %p52 = scmp.ne.s32.totalorder %s44, %s46
    %p53 = scmp.eq.s32.totalorder %s15, 1
    %p54 = por %p52, %p53
    %p55 = scmp.ne.s32.totalorder %s46, %s47
    %p56 = scmp.eq.s32.totalorder %s15, 0
    %p57 = por %p55, %p56
    %p58 = scmp.ne.s32.totalorder %s46, %s47
    %p59 = scmp.eq.s32.totalorder %s16, 1
    %p60 = por %p58, %p59
    %p62 = scmp.ne.s32.totalorder %s47, %s61
    %p63 = scmp.eq.s32.totalorder %s16, 0
    %p64 = por %p62, %p63
    %s66 = sadd.s32 %s65, 1
    %p69 = scmp.eq.s32.totalorder %s10, 1
    %p70 = scmp.ne.s32.totalorder %s65, %s67
    %p71 = scmp.eq.s32.totalorder %s10, 0
    %p72 = por %p70, %p71
    %p73 = scmp.ne.s32.totalorder %s65, %s67
    %p74 = scmp.eq.s32.totalorder %s15, 1
    %p75 = por %p73, %p74
    %p76 = scmp.ne.s32.totalorder %s67, %s68
    %p77 = scmp.eq.s32.totalorder %s15, 0
    %p78 = por %p76, %p77
    %p79 = scmp.ne.s32.totalorder %s67, %s68
    %p80 = scmp.eq.s32.totalorder %s16, 1
    %p81 = por %p79, %p80
    %p83 = scmp.ne.s32.totalorder %s68, %s82
    %p84 = scmp.eq.s32.totalorder %s16, 0
    %p85 = por %p83, %p84
    %s87 = sadd.s32 %s86, 1
    %p90 = scmp.eq.s32.totalorder %s10, 1
    %p91 = scmp.ne.s32.totalorder %s86, %s88
    %p92 = scmp.eq.s32.totalorder %s10, 0
    %p93 = por %p91, %p92
    %p94 = scmp.ne.s32.totalorder %s86, %s88
    %p95 = scmp.eq.s32.totalorder %s15, 1
    %p96 = por %p94, %p95
    %p97 = scmp.ne.s32.totalorder %s88, %s89
    %p98 = scmp.eq.s32.totalorder %s15, 0
    %p99 = por %p97, %p98
    %p100 = scmp.ne.s32.totalorder %s88, %s89
    %p101 = scmp.eq.s32.totalorder %s16, 1
    %p102 = por %p100, %p101
    %p104 = scmp.ne.s32.totalorder %s89, %s103
    %p105 = scmp.eq.s32.totalorder %s16, 0
    %p106 = por %p104, %p105
    %s107 = ssub.s32 %s10, %s17
    %p108 = scmp.eq.s32.totalorder %s107, 0
    %s110 = sadd.s32 %s109, 1
    %s111 = scalar_select %p108, %s109, %s110
    %p114 = pneg %p108
    %p115 = scmp.eq.s32.totalorder %s10, 1
    %p116 = por %p114, %p115
    %p117 = scmp.ne.s32.totalorder %s109, %s112
    %p118 = scmp.eq.s32.totalorder %s10, 0
    %p119 = por %p117, %p118
    %p120 = scmp.ne.s32.totalorder %s109, %s112
    %p121 = scmp.eq.s32.totalorder %s15, 1
    %p122 = por %p120, %p121
    %p123 = scmp.ne.s32.totalorder %s112, %s113
    %p124 = scmp.eq.s32.totalorder %s15, 0
    %p125 = por %p123, %p124
    %p126 = scmp.ne.s32.totalorder %s112, %s113
    %p127 = scmp.eq.s32.totalorder %s16, 1
    %p128 = por %p126, %p127
    %p130 = scmp.ne.s32.totalorder %s113, %s129
    %p131 = scmp.eq.s32.totalorder %s16, 0
    %p132 = por %p130, %p131
    %p133 = scmp.le.s32.totalorder 1, %s10
    %p134 = scmp.lt.s32.totalorder %s10, 3
    %p135 = pnand %p133, %p134
    %p136 = pneg %p135
    // Predicated region
    $region9: #{dilate_merge_pallas.1} parent=5 // pred_check
      _
    $region10: #{dilate_merge_pallas.1} parent=5 // pred_check_branch
      %138 = sbr.rel (%p135) target = $region12
    $region11: #{dilate_merge_pallas.1} parent=5 // pred_region
      %s139 = ssub.s32 %s10, 1
      // Predicated region
      $region13: #{dilate_merge_pallas.1} parent=11 // pred_check
        %p140 = pneg %p57
      $region14: #{dilate_merge_pallas.1} parent=11 // pred_check_branch
        %142 = sbr.rel (%p140) target = $region16
      $region15: #{dilate_merge_pallas.1} parent=11 // pred_region
        _
      $region16: #{dilate_merge_pallas.1} parent=11 // pred_fallthru
        _
      // Predicated region
      $region17: #{dilate_merge_pallas.1} parent=11 // pred_check
        %p143 = pneg %p78
      $region18: #{dilate_merge_pallas.1} parent=11 // pred_check_branch
        %145 = sbr.rel (%p143) target = $region20
      $region19: #{dilate_merge_pallas.1} parent=11 // pred_region
        _
      $region20: #{dilate_merge_pallas.1} parent=11 // pred_fallthru
        _
      // Predicated region
      $region21: #{dilate_merge_pallas.1} parent=11 // pred_check
        %p146 = pneg %p99
      $region22: #{dilate_merge_pallas.1} parent=11 // pred_check_branch
        %148 = sbr.rel (%p146) target = $region24
      $region23: #{dilate_merge_pallas.1} parent=11 // pred_region
        _
      $region24: #{dilate_merge_pallas.1} parent=11 // pred_fallthru
        _
    $region12: #{dilate_merge_pallas.1} parent=5 // pred_fallthru
      _
    %p149 = scmp.lt.s32.totalorder %s10, 2
    // Predicated region
    $region25: #{dilate_merge_pallas.1} parent=5 // pred_check
      %p150 = pneg %p149
    $region26: #{dilate_merge_pallas.1} parent=5 // pred_check_branch
      %152 = sbr.rel (%p150) target = $region28
    $region27: #{dilate_merge_pallas.1} parent=5 // pred_region
      // Predicated region
      $region29: #{dilate_merge_pallas.1} parent=27 // pred_check
        %p153 = pneg %p30
      $region30: #{dilate_merge_pallas.1} parent=27 // pred_check_branch
        %155 = sbr.rel (%p153) target = $region32
      $region31: #{dilate_merge_pallas.1} parent=27 // pred_region
        %p156 = scmp.lt.s32.totalorder %s10, 1
        %s157 = scalar_select %p156, %s10, 1
        %s158 = smul.addr %s157, 8
        %s159 = smul.addr %s158, 8
        %s160 = scalar_lea.vmem %s0, %s159
      $region32: #{dilate_merge_pallas.1} parent=27 // pred_fallthru
        _
    $region28: #{dilate_merge_pallas.1} parent=5 // pred_fallthru
      _
    %p161 = scmp.le.s32.totalorder 1, %s10
    %p162 = scmp.lt.s32.totalorder %s10, 3
    %p163 = pnand %p161, %p162
    %p164 = pneg %p163
    // Predicated region
    $region33: #{dilate_merge_pallas.1} parent=5 // pred_check
      _
    $region34: #{dilate_merge_pallas.1} parent=5 // pred_check_branch
      %166 = sbr.rel (%p163) target = $region36
    $region35: #{dilate_merge_pallas.1} parent=5 // pred_region
      %s167 = ssub.s32 %s10, 1
      %p168 = scmp.lt.s32.totalorder %s15, 1
      %s169 = scalar_select %p168, %s15, 1
      %s170 = smul.addr %s169, 8
      %s171 = smul.addr %s170, 8
      %s172 = scalar_lea.vmem %s0, %s171
      %p173 = pneg %p36
      %p174 = pneg %p33
      %p175 = pneg %p57
      %p176 = pneg %p54
      %p177 = pneg %p78
      %p178 = pneg %p75
      %p179 = pneg %p99
      %p180 = pneg %p96
      %p181 = pneg %p125
      %p182 = pneg %p122
      %p183 = scmp.lt.s32.totalorder %s15, 1
      %s184 = scalar_select %p183, %s15, 1
      %s185 = smul.addr %s184, 12
      %s186 = smul.addr %s185, 8
      %s187 = scalar_lea.vmem %s4, %s186
      %p188 = scmp.lt.s32.totalorder %s15, 1
      %s189 = scalar_select %p188, %s15, 1
      %s190 = smul.addr %s189, 8
      %s191 = smul.addr %s190, 8
      %s192 = scalar_lea.vmem %s0, %s191
      %p193 = scmp.lt.s32.totalorder %s15, 1
      %s194 = scalar_select %p193, %s15, 1
      %s195 = smul.addr %s194, 12
      %s196 = smul.addr %s195, 8
      %s197 = scalar_lea.vmem %s4, %s196
      %v198 = vld [vmem:[%s192 + $0x8] sm:$0xff]
      %v199 = vld [vmem:[%s192 + $0x10] sm:$0xff]
      %v200 = vld [vmem:[%s192 + $0x18] sm:$0xff]
      %v201 = vld [vmem:[%s192 + $0x20] sm:$0xff]
      %v202 = vld [vmem:[%s192 + $0x28] sm:$0xff]
      %208 = vrot.lane.b32.xlu0 %v198, 39
      %v209 = vpop.permute.xlu0 %208
      %210 = vrot.lane.b32.xlu0 %v199, 39
      %v211 = vpop.permute.xlu0 %210
      %212 = vrot.lane.b32.xlu0 %v200, 39
      %v213 = vpop.permute.xlu0 %212
      %214 = vrot.lane.b32.xlu0 %v201, 39
      %v215 = vpop.permute.xlu0 %214
      %216 = vrot.lane.b32.xlu0 %v202, 39
      %v217 = vpop.permute.xlu0 %216
      %vm218 = vcmask 318464
      %v219 = vsel %vm218, %v209, %v211
      %v220 = vsel %vm218, %v211, %v213
      %v221 = vsel %vm218, %v213, %v215
      %v222 = vsel %vm218, %v215, %v217
      %227 = vst [vmem:[#allocation2] sm:$0xff] %v219
      %228 = vst [vmem:[#allocation2 + $0x8] sm:$0xff] %v220
      %229 = vst [vmem:[#allocation2 + $0x10] sm:$0xff] %v221
      %vm230 = vcmask 785408
      %231 = vst.msk [vmem:[#allocation2 + $0x18] sm:$0xff] %vm230, %v222
      %v232 = vld [vmem:[%s192 + $0x8] sm:$0xff]
      %v233 = vld [vmem:[%s192 + $0x10] sm:$0xff]
      %v234 = vld [vmem:[%s192 + $0x18] sm:$0xff]
      %v235 = vld [vmem:[%s192 + $0x20] sm:$0xff]
      %240 = vrot.lane.b32.xlu0 %v232, 101
      %v241 = vpop.permute.xlu0 %240
      %242 = vrot.lane.b32.xlu0 %v233, 101
      %v243 = vpop.permute.xlu0 %242
      %244 = vrot.lane.b32.xlu0 %v234, 101
      %v245 = vpop.permute.xlu0 %244
      %246 = vrot.lane.b32.xlu0 %v235, 101
      %v247 = vpop.permute.xlu0 %246
      %vm248 = vcmask 826368
      %v249 = vsel %vm248, %v241, %v243
      %v250 = vsel %vm248, %v243, %v245
      %v251 = vsel %vm248, %v245, %v247
      %256 = vst [vmem:[#allocation2 + $0x20] sm:$0xff] %v249
      %257 = vst [vmem:[#allocation2 + $0x28] sm:$0xff] %v250
      %258 = vst [vmem:[#allocation2 + $0x30] sm:$0xff] %v251
      %259 = vst.msk [vmem:[#allocation2 + $0x38] sm:$0xff] %vm230, %v247
      %v260 = vld [vmem:[%s192 + $0x8] sm:$0xff]
      %v261 = vld [vmem:[%s192 + $0x10] sm:$0xff]
      %v262 = vld [vmem:[%s192 + $0x18] sm:$0xff]
      %v263 = vld [vmem:[%s192 + $0x20] sm:$0xff]
      %268 = vrot.lane.b32.xlu0 %v260, 99
      %v269 = vpop.permute.xlu0 %268
      %270 = vrot.lane.b32.xlu0 %v261, 99
      %v271 = vpop.permute.xlu0 %270
      %272 = vrot.lane.b32.xlu0 %v262, 99
      %v273 = vpop.permute.xlu0 %272
      %274 = vrot.lane.b32.xlu0 %v263, 99
      %v275 = vpop.permute.xlu0 %274
      %vm276 = vcmask 809984
      %v277 = vsel %vm276, %v269, %v271
      %v278 = vsel %vm276, %v271, %v273
      %v279 = vsel %vm276, %v273, %v275
      %284 = vst [vmem:[#allocation2 + $0x40] sm:$0xff] %v277
      %285 = vst [vmem:[#allocation2 + $0x48] sm:$0xff] %v278
      %286 = vst [vmem:[#allocation2 + $0x50] sm:$0xff] %v279
      %287 = vst.msk [vmem:[#allocation2 + $0x58] sm:$0xff] %vm230, %v275
      %v288 = vld [vmem:[%s192 + $0x8] sm:$0xff]
      %v289 = vld [vmem:[%s192 + $0x10] sm:$0xff]
      %v290 = vld [vmem:[%s192 + $0x18] sm:$0xff]
      %v291 = vld [vmem:[%s192 + $0x20] sm:$0xff]
      %296 = vrot.lane.b32.xlu0 %v288, 97
      %v297 = vpop.permute.xlu0 %296
      %298 = vrot.lane.b32.xlu0 %v289, 97
      %v299 = vpop.permute.xlu0 %298
      %300 = vrot.lane.b32.xlu0 %v290, 97
      %v301 = vpop.permute.xlu0 %300
      %302 = vrot.lane.b32.xlu0 %v291, 97
      %v303 = vpop.permute.xlu0 %302
      %vm304 = vcmask 793600
      %v305 = vsel %vm304, %v297, %v299
      %v306 = vsel %vm304, %v299, %v301
      %v307 = vsel %vm304, %v301, %v303
      %312 = vst [vmem:[#allocation2 + $0x60] sm:$0xff] %v305
      %313 = vst [vmem:[#allocation2 + $0x68] sm:$0xff] %v306
      %314 = vst [vmem:[#allocation2 + $0x70] sm:$0xff] %v307
      %315 = vst.msk [vmem:[#allocation2 + $0x78] sm:$0xff] %vm230, %v303
      %v316 = vld [vmem:[%s192 + $0x8] sm:$0xff]
      %v317 = vld [vmem:[%s192 + $0x10] sm:$0xff]
      %v318 = vld [vmem:[%s192 + $0x18] sm:$0xff]
      %v319 = vld [vmem:[%s192 + $0x20] sm:$0xff]
      %v320 = vld [vmem:[%s192 + $0x28] sm:$0xff]
      %326 = vrot.lane.b32.xlu0 %v316, 41
      %v327 = vpop.permute.xlu0 %326
      %328 = vrot.lane.b32.xlu0 %v317, 41
      %v329 = vpop.permute.xlu0 %328
      %330 = vrot.lane.b32.xlu0 %v318, 41
      %v331 = vpop.permute.xlu0 %330
      %332 = vrot.lane.b32.xlu0 %v319, 41
      %v333 = vpop.permute.xlu0 %332
      %334 = vrot.lane.b32.xlu0 %v320, 41
      %v335 = vpop.permute.xlu0 %334
      %vm336 = vcmask 334848
      %v337 = vsel %vm336, %v327, %v329
      %v338 = vsel %vm336, %v329, %v331
      %v339 = vsel %vm336, %v331, %v333
      %v340 = vsel %vm336, %v333, %v335
      %345 = vst [vmem:[#allocation2 + $0x80] sm:$0xff] %v337
      %346 = vst [vmem:[#allocation2 + $0x88] sm:$0xff] %v338
      %347 = vst [vmem:[#allocation2 + $0x90] sm:$0xff] %v339
      %348 = vst.msk [vmem:[#allocation2 + $0x98] sm:$0xff] %vm230, %v340
      %v349 = vld [vmem:[%s192 + $0x8] sm:$0xff]
      %v350 = vld [vmem:[%s192 + $0x10] sm:$0xff]
      %v351 = vld [vmem:[%s192 + $0x18] sm:$0xff]
      %v352 = vld [vmem:[%s192 + $0x20] sm:$0xff]
      %v353 = vld [vmem:[%s192 + $0x28] sm:$0xff]
      %359 = vrot.lane.b32.xlu0 %v349, 37
      %v360 = vpop.permute.xlu0 %359
      %361 = vrot.lane.b32.xlu0 %v350, 37
      %v362 = vpop.permute.xlu0 %361
      %363 = vrot.lane.b32.xlu0 %v351, 37
      %v364 = vpop.permute.xlu0 %363
      %365 = vrot.lane.b32.xlu0 %v352, 37
      %v366 = vpop.permute.xlu0 %365
      %367 = vrot.lane.b32.xlu0 %v353, 37
      %v368 = vpop.permute.xlu0 %367
      %vm369 = vcmask 302080
      %v370 = vsel %vm369, %v360, %v362
      %v371 = vsel %vm369, %v362, %v364
      %v372 = vsel %vm369, %v364, %v366
      %v373 = vsel %vm369, %v366, %v368
      %378 = vst [vmem:[#allocation2 + $0xa0] sm:$0xff] %v370
      %379 = vst [vmem:[#allocation2 + $0xa8] sm:$0xff] %v371
      %380 = vst [vmem:[#allocation2 + $0xb0] sm:$0xff] %v372
      %381 = vst.msk [vmem:[#allocation2 + $0xb8] sm:$0xff] %vm230, %v373
      %v382 = vld [vmem:[%s192 + $0x10] sm:$0xff]
      %v383 = vld [vmem:[%s192 + $0x18] sm:$0xff]
      %v384 = vld [vmem:[%s192 + $0x20] sm:$0xff]
      %v385 = vld [vmem:[%s192 + $0x28] sm:$0xff]
      %390 = vrot.lane.b32.xlu0 %v382, 109
      %v391 = vpop.permute.xlu0 %390
      %392 = vrot.lane.b32.xlu0 %v383, 109
      %v393 = vpop.permute.xlu0 %392
      %394 = vrot.lane.b32.xlu0 %v384, 109
      %v395 = vpop.permute.xlu0 %394
      %396 = vrot.lane.b32.xlu0 %v385, 109
      %v397 = vpop.permute.xlu0 %396
      %vm398 = vcmask 891904
      %v399 = vsel %vm398, %v391, %v393
      %v400 = vsel %vm398, %v393, %v395
      %v401 = vsel %vm398, %v395, %v397
      %406 = vst [vmem:[#allocation2 + $0xc0] sm:$0xff] %v399
      %407 = vst [vmem:[#allocation2 + $0xc8] sm:$0xff] %v400
      %408 = vst [vmem:[#allocation2 + $0xd0] sm:$0xff] %v401
      %409 = vst.msk [vmem:[#allocation2 + $0xd8] sm:$0xff] %vm230, %v397
      %v410 = vld [vmem:[%s192 + $0x10] sm:$0xff]
      %v411 = vld [vmem:[%s192 + $0x18] sm:$0xff]
      %v412 = vld [vmem:[%s192 + $0x20] sm:$0xff]
      %v413 = vld [vmem:[%s192 + $0x28] sm:$0xff]
      %418 = vrot.lane.b32.xlu0 %v410, 107
      %v419 = vpop.permute.xlu0 %418
      %420 = vrot.lane.b32.xlu0 %v411, 107
      %v421 = vpop.permute.xlu0 %420
      %422 = vrot.lane.b32.xlu0 %v412, 107
      %v423 = vpop.permute.xlu0 %422
      %424 = vrot.lane.b32.xlu0 %v413, 107
      %v425 = vpop.permute.xlu0 %424
      %vm426 = vcmask 875520
      %v427 = vsel %vm426, %v419, %v421
      %v428 = vsel %vm426, %v421, %v423
      %v429 = vsel %vm426, %v423, %v425
      %434 = vst [vmem:[#allocation2 + $0xe0] sm:$0xff] %v427
      %435 = vst [vmem:[#allocation2 + $0xe8] sm:$0xff] %v428
      %436 = vst [vmem:[#allocation2 + $0xf0] sm:$0xff] %v429
      %437 = vst.msk [vmem:[#allocation2 + $0xf8] sm:$0xff] %vm230, %v425
      %v438 = vld [vmem:[%s192 + $0x10] sm:$0xff]
      %v439 = vld [vmem:[%s192 + $0x18] sm:$0xff]
      %v440 = vld [vmem:[%s192 + $0x20] sm:$0xff]
      %v441 = vld [vmem:[%s192 + $0x28] sm:$0xff]
      %446 = vrot.lane.b32.xlu0 %v438, 105
      %v447 = vpop.permute.xlu0 %446
      %448 = vrot.lane.b32.xlu0 %v439, 105
      %v449 = vpop.permute.xlu0 %448
      %450 = vrot.lane.b32.xlu0 %v440, 105
      %v451 = vpop.permute.xlu0 %450
      %452 = vrot.lane.b32.xlu0 %v441, 105
      %v453 = vpop.permute.xlu0 %452
      %vm454 = vcmask 859136
      %v455 = vsel %vm454, %v447, %v449
      %v456 = vsel %vm454, %v449, %v451
      %v457 = vsel %vm454, %v451, %v453
      %462 = vst [vmem:[#allocation2 + $0x100] sm:$0xff] %v455
      %463 = vst [vmem:[#allocation2 + $0x108] sm:$0xff] %v456
      %464 = vst [vmem:[#allocation2 + $0x110] sm:$0xff] %v457
      %465 = vst.msk [vmem:[#allocation2 + $0x118] sm:$0xff] %vm230, %v453
      %v466 = vld [vmem:[%s192] sm:$0xff]
      %v467 = vld [vmem:[%s192 + $0x8] sm:$0xff]
      %v468 = vld [vmem:[%s192 + $0x10] sm:$0xff]
      %v469 = vld [vmem:[%s192 + $0x18] sm:$0xff]
      %v470 = vld [vmem:[%s192 + $0x20] sm:$0xff]
      %476 = vrot.lane.b32.xlu0 %v466, 4
      %v477 = vpop.permute.xlu0 %476
      %478 = vrot.lane.b32.xlu0 %v467, 4
      %v479 = vpop.permute.xlu0 %478
      %480 = vrot.lane.b32.xlu0 %v468, 4
      %v481 = vpop.permute.xlu0 %480
      %482 = vrot.lane.b32.xlu0 %v469, 4
      %v483 = vpop.permute.xlu0 %482
      %484 = vrot.lane.b32.xlu0 %v470, 4
      %v485 = vpop.permute.xlu0 %484
      %vm486 = vcmask 31744
      %v487 = vsel %vm486, %v477, %v479
      %v488 = vsel %vm486, %v479, %v481
      %v489 = vsel %vm486, %v481, %v483
      %v490 = vsel %vm486, %v483, %v485
      %495 = vst [vmem:[#allocation2 + $0x120] sm:$0xff] %v487
      %496 = vst [vmem:[#allocation2 + $0x128] sm:$0xff] %v488
      %497 = vst [vmem:[#allocation2 + $0x130] sm:$0xff] %v489
      %498 = vst.msk [vmem:[#allocation2 + $0x138] sm:$0xff] %vm230, %v490
      %v499 = vld [vmem:[%s192] sm:$0xff]
      %v500 = vld [vmem:[%s192 + $0x8] sm:$0xff]
      %v501 = vld [vmem:[%s192 + $0x10] sm:$0xff]
      %v502 = vld [vmem:[%s192 + $0x18] sm:$0xff]
      %v503 = vld [vmem:[%s192 + $0x20] sm:$0xff]
      %509 = vrot.lane.b32.xlu0 %v499, 1
      %v510 = vpop.permute.xlu0 %509
      %511 = vrot.lane.b32.xlu0 %v500, 1
      %v512 = vpop.permute.xlu0 %511
      %513 = vrot.lane.b32.xlu0 %v501, 1
      %v514 = vpop.permute.xlu0 %513
      %515 = vrot.lane.b32.xlu0 %v502, 1
      %v516 = vpop.permute.xlu0 %515
      %517 = vrot.lane.b32.xlu0 %v503, 1
      %v518 = vpop.permute.xlu0 %517
      %vm519 = vcmask 7168
      %v520 = vsel %vm519, %v510, %v512
      %v521 = vsel %vm519, %v512, %v514
      %v522 = vsel %vm519, %v514, %v516
      %v523 = vsel %vm519, %v516, %v518
      %528 = vst [vmem:[#allocation2 + $0x140] sm:$0xff] %v520
      %529 = vst [vmem:[#allocation2 + $0x148] sm:$0xff] %v521
      %530 = vst [vmem:[#allocation2 + $0x150] sm:$0xff] %v522
      %531 = vst.msk [vmem:[#allocation2 + $0x158] sm:$0xff] %vm230, %v523
      %v532 = vld [vmem:[%s192 + $0x8] sm:$0xff]
      %v533 = vld [vmem:[%s192 + $0x10] sm:$0xff]
      %v534 = vld [vmem:[%s192 + $0x18] sm:$0xff]
      %v535 = vld [vmem:[%s192 + $0x20] sm:$0xff]
      %540 = vrot.lane.b32.xlu0 %v532, 126
      %v541 = vpop.permute.xlu0 %540
      %542 = vrot.lane.b32.xlu0 %v533, 126
      %v543 = vpop.permute.xlu0 %542
      %544 = vrot.lane.b32.xlu0 %v534, 126
      %v545 = vpop.permute.xlu0 %544
      %546 = vrot.lane.b32.xlu0 %v535, 126
      %v547 = vpop.permute.xlu0 %546
      %vm548 = vcmask 1031168
      %v549 = vsel %vm548, %v541, %v543
      %v550 = vsel %vm548, %v543, %v545
      %v551 = vsel %vm548, %v545, %v547
      %556 = vst [vmem:[#allocation2 + $0x160] sm:$0xff] %v549
      %557 = vst [vmem:[#allocation2 + $0x168] sm:$0xff] %v550
      %558 = vst [vmem:[#allocation2 + $0x170] sm:$0xff] %v551
      %559 = vst.msk [vmem:[#allocation2 + $0x178] sm:$0xff] %vm230, %v547
      %v560 = vld [vmem:[%s192 + $0x8] sm:$0xff]
      %v561 = vld [vmem:[%s192 + $0x10] sm:$0xff]
      %v562 = vld [vmem:[%s192 + $0x18] sm:$0xff]
      %v563 = vld [vmem:[%s192 + $0x20] sm:$0xff]
      %v564 = vld [vmem:[%s192 + $0x28] sm:$0xff]
      %570 = vrot.lane.b32.xlu0 %v560, 42
      %v571 = vpop.permute.xlu0 %570
      %572 = vrot.lane.b32.xlu0 %v561, 42
      %v573 = vpop.permute.xlu0 %572
      %574 = vrot.lane.b32.xlu0 %v562, 42
      %v575 = vpop.permute.xlu0 %574
      %576 = vrot.lane.b32.xlu0 %v563, 42
      %v577 = vpop.permute.xlu0 %576
      %578 = vrot.lane.b32.xlu0 %v564, 42
      %v579 = vpop.permute.xlu0 %578
      %vm580 = vcmask 343040
      %v581 = vsel %vm580, %v571, %v573
      %v582 = vsel %vm580, %v573, %v575
      %v583 = vsel %vm580, %v575, %v577
      %v584 = vsel %vm580, %v577, %v579
      %589 = vst [vmem:[#allocation2 + $0x180] sm:$0xff] %v581
      %590 = vst [vmem:[#allocation2 + $0x188] sm:$0xff] %v582
      %591 = vst [vmem:[#allocation2 + $0x190] sm:$0xff] %v583
      %592 = vst.msk [vmem:[#allocation2 + $0x198] sm:$0xff] %vm230, %v584
      %v593 = vld [vmem:[%s192 + $0x8] sm:$0xff]
      %v594 = vld [vmem:[%s192 + $0x10] sm:$0xff]
      %v595 = vld [vmem:[%s192 + $0x18] sm:$0xff]
      %v596 = vld [vmem:[%s192 + $0x20] sm:$0xff]
      %v597 = vld [vmem:[%s192 + $0x28] sm:$0xff]
      %603 = vrot.lane.b32.xlu0 %v593, 36
      %v604 = vpop.permute.xlu0 %603
      %605 = vrot.lane.b32.xlu0 %v594, 36
      %v606 = vpop.permute.xlu0 %605
      %607 = vrot.lane.b32.xlu0 %v595, 36
      %v608 = vpop.permute.xlu0 %607
      %609 = vrot.lane.b32.xlu0 %v596, 36
      %v610 = vpop.permute.xlu0 %609
      %611 = vrot.lane.b32.xlu0 %v597, 36
      %v612 = vpop.permute.xlu0 %611
      %vm613 = vcmask 293888
      %v614 = vsel %vm613, %v604, %v606
      %v615 = vsel %vm613, %v606, %v608
      %v616 = vsel %vm613, %v608, %v610
      %v617 = vsel %vm613, %v610, %v612
      %622 = vst [vmem:[#allocation2 + $0x1a0] sm:$0xff] %v614
      %623 = vst [vmem:[#allocation2 + $0x1a8] sm:$0xff] %v615
      %624 = vst [vmem:[#allocation2 + $0x1b0] sm:$0xff] %v616
      %625 = vst.msk [vmem:[#allocation2 + $0x1b8] sm:$0xff] %vm230, %v617
      %v626 = vld [vmem:[%s192 + $0x10] sm:$0xff]
      %v627 = vld [vmem:[%s192 + $0x18] sm:$0xff]
      %v628 = vld [vmem:[%s192 + $0x20] sm:$0xff]
      %v629 = vld [vmem:[%s192 + $0x28] sm:$0xff]
      %v630 = vld [vmem:[%s192 + $0x30] sm:$0xff]
      %636 = vrot.lane.b32.xlu0 %v626, 80
      %v637 = vpop.permute.xlu0 %636
      %638 = vrot.lane.b32.xlu0 %v627, 80
      %v639 = vpop.permute.xlu0 %638
      %640 = vrot.lane.b32.xlu0 %v628, 80
      %v641 = vpop.permute.xlu0 %640
      %642 = vrot.lane.b32.xlu0 %v629, 80
      %v643 = vpop.permute.xlu0 %642
      %644 = vrot.lane.b32.xlu0 %v630, 80
      %v645 = vpop.permute.xlu0 %644
      %vm646 = vcmask 654336
      %v647 = vsel %vm646, %v637, %v639
      %v648 = vsel %vm646, %v639, %v641
      %v649 = vsel %vm646, %v641, %v643
      %v650 = vsel %vm646, %v643, %v645
      %655 = vst [vmem:[#allocation2 + $0x1c0] sm:$0xff] %v647
      %656 = vst [vmem:[#allocation2 + $0x1c8] sm:$0xff] %v648
      %657 = vst [vmem:[#allocation2 + $0x1d0] sm:$0xff] %v649
      %658 = vst.msk [vmem:[#allocation2 + $0x1d8] sm:$0xff] %vm230, %v650
      %v659 = vld [vmem:[%s192 + $0x10] sm:$0xff]
      %v660 = vld [vmem:[%s192 + $0x18] sm:$0xff]
      %v661 = vld [vmem:[%s192 + $0x20] sm:$0xff]
      %v662 = vld [vmem:[%s192 + $0x28] sm:$0xff]
      %v663 = vld [vmem:[%s192 + $0x30] sm:$0xff]
      %669 = vrot.lane.b32.xlu0 %v659, 77
      %v670 = vpop.permute.xlu0 %669
      %671 = vrot.lane.b32.xlu0 %v660, 77
      %v672 = vpop.permute.xlu0 %671
      %673 = vrot.lane.b32.xlu0 %v661, 77
      %v674 = vpop.permute.xlu0 %673
      %675 = vrot.lane.b32.xlu0 %v662, 77
      %v676 = vpop.permute.xlu0 %675
      %677 = vrot.lane.b32.xlu0 %v663, 77
      %v678 = vpop.permute.xlu0 %677
      %vm679 = vcmask 629760
      %v680 = vsel %vm679, %v670, %v672
      %v681 = vsel %vm679, %v672, %v674
      %v682 = vsel %vm679, %v674, %v676
      %v683 = vsel %vm679, %v676, %v678
      %688 = vst [vmem:[#allocation2 + $0x1e0] sm:$0xff] %v680
      %689 = vst [vmem:[#allocation2 + $0x1e8] sm:$0xff] %v681
      %690 = vst [vmem:[#allocation2 + $0x1f0] sm:$0xff] %v682
      %691 = vst.msk [vmem:[#allocation2 + $0x1f8] sm:$0xff] %vm230, %v683
      %v692 = vld [vmem:[%s192 + $0x10] sm:$0xff]
      %v693 = vld [vmem:[%s192 + $0x18] sm:$0xff]
      %v694 = vld [vmem:[%s192 + $0x20] sm:$0xff]
      %v695 = vld [vmem:[%s192 + $0x28] sm:$0xff]
      %v696 = vld [vmem:[%s192 + $0x30] sm:$0xff]
      %702 = vrot.lane.b32.xlu0 %v692, 74
      %v703 = vpop.permute.xlu0 %702
      %704 = vrot.lane.b32.xlu0 %v693, 74
      %v705 = vpop.permute.xlu0 %704
      %706 = vrot.lane.b32.xlu0 %v694, 74
      %v707 = vpop.permute.xlu0 %706
      %708 = vrot.lane.b32.xlu0 %v695, 74
      %v709 = vpop.permute.xlu0 %708
      %710 = vrot.lane.b32.xlu0 %v696, 74
      %v711 = vpop.permute.xlu0 %710
      %vm712 = vcmask 605184
      %v713 = vsel %vm712, %v703, %v705
      %v714 = vsel %vm712, %v705, %v707
      %v715 = vsel %vm712, %v707, %v709
      %v716 = vsel %vm712, %v709, %v711
      %721 = vst [vmem:[#allocation2 + $0x200] sm:$0xff] %v713
      %722 = vst [vmem:[#allocation2 + $0x208] sm:$0xff] %v714
      %723 = vst [vmem:[#allocation2 + $0x210] sm:$0xff] %v715
      %724 = vst.msk [vmem:[#allocation2 + $0x218] sm:$0xff] %vm230, %v716
      %v725 = vld [vmem:[%s192] sm:$0xff]
      %v726 = vld [vmem:[%s192 + $0x8] sm:$0xff]
      %v727 = vld [vmem:[%s192 + $0x10] sm:$0xff]
      %v728 = vld [vmem:[%s192 + $0x18] sm:$0xff]
      %v729 = vld [vmem:[%s192 + $0x20] sm:$0xff]
      %735 = vrot.lane.b32.xlu0 %v725, 35
      %v736 = vpop.permute.xlu0 %735
      %737 = vrot.lane.b32.xlu0 %v726, 35
      %v738 = vpop.permute.xlu0 %737
      %739 = vrot.lane.b32.xlu0 %v727, 35
      %v740 = vpop.permute.xlu0 %739
      %741 = vrot.lane.b32.xlu0 %v728, 35
      %v742 = vpop.permute.xlu0 %741
      %743 = vrot.lane.b32.xlu0 %v729, 35
      %v744 = vpop.permute.xlu0 %743
      %vm745 = vcmask 285696
      %v746 = vsel %vm745, %v736, %v738
      %v747 = vsel %vm745, %v738, %v740
      %v748 = vsel %vm745, %v740, %v742
      %v749 = vsel %vm745, %v742, %v744
      %754 = vst [vmem:[#allocation2 + $0x220] sm:$0xff] %v746
      %755 = vst [vmem:[#allocation2 + $0x228] sm:$0xff] %v747
      %756 = vst [vmem:[#allocation2 + $0x230] sm:$0xff] %v748
      %757 = vst.msk [vmem:[#allocation2 + $0x238] sm:$0xff] %vm230, %v749
      %v758 = vld [vmem:[%s192] sm:$0xff]
      %v759 = vld [vmem:[%s192 + $0x8] sm:$0xff]
      %v760 = vld [vmem:[%s192 + $0x10] sm:$0xff]
      %v761 = vld [vmem:[%s192 + $0x18] sm:$0xff]
      %v762 = vld [vmem:[%s192 + $0x20] sm:$0xff]
      %768 = vrot.lane.b32.xlu0 %v758, 31
      %v769 = vpop.permute.xlu0 %768
      %770 = vrot.lane.b32.xlu0 %v759, 31
      %v771 = vpop.permute.xlu0 %770
      %772 = vrot.lane.b32.xlu0 %v760, 31
      %v773 = vpop.permute.xlu0 %772
      %774 = vrot.lane.b32.xlu0 %v761, 31
      %v775 = vpop.permute.xlu0 %774
      %776 = vrot.lane.b32.xlu0 %v762, 31
      %v777 = vpop.permute.xlu0 %776
      %vm778 = vcmask 252928
      %v779 = vsel %vm778, %v769, %v771
      %v780 = vsel %vm778, %v771, %v773
      %v781 = vsel %vm778, %v773, %v775
      %v782 = vsel %vm778, %v775, %v777
      %787 = vst [vmem:[#allocation2 + $0x240] sm:$0xff] %v779
      %788 = vst [vmem:[#allocation2 + $0x248] sm:$0xff] %v780
      %789 = vst [vmem:[#allocation2 + $0x250] sm:$0xff] %v781
      %790 = vst.msk [vmem:[#allocation2 + $0x258] sm:$0xff] %vm230, %v782
      %v791 = vld [vmem:[%s192] sm:$0xff]
      %v792 = vld [vmem:[%s192 + $0x8] sm:$0xff]
      %v793 = vld [vmem:[%s192 + $0x10] sm:$0xff]
      %v794 = vld [vmem:[%s192 + $0x18] sm:$0xff]
      %v795 = vld [vmem:[%s192 + $0x20] sm:$0xff]
      %801 = vrot.lane.b32.xlu0 %v791, 27
      %v802 = vpop.permute.xlu0 %801
      %803 = vrot.lane.b32.xlu0 %v792, 27
      %v804 = vpop.permute.xlu0 %803
      %805 = vrot.lane.b32.xlu0 %v793, 27
      %v806 = vpop.permute.xlu0 %805
      %807 = vrot.lane.b32.xlu0 %v794, 27
      %v808 = vpop.permute.xlu0 %807
      %809 = vrot.lane.b32.xlu0 %v795, 27
      %v810 = vpop.permute.xlu0 %809
      %vm811 = vcmask 220160
      %v812 = vsel %vm811, %v802, %v804
      %v813 = vsel %vm811, %v804, %v806
      %v814 = vsel %vm811, %v806, %v808
      %v815 = vsel %vm811, %v808, %v810
      %820 = vst [vmem:[#allocation2 + $0x260] sm:$0xff] %v812
      %821 = vst [vmem:[#allocation2 + $0x268] sm:$0xff] %v813
      %822 = vst [vmem:[#allocation2 + $0x270] sm:$0xff] %v814
      %823 = vst.msk [vmem:[#allocation2 + $0x278] sm:$0xff] %vm230, %v815
      %v824 = vld [vmem:[%s192 + $0x8] sm:$0xff]
      %v825 = vld [vmem:[%s192 + $0x10] sm:$0xff]
      %v826 = vld [vmem:[%s192 + $0x18] sm:$0xff]
      %v827 = vld [vmem:[%s192 + $0x20] sm:$0xff]
      %v828 = vld [vmem:[%s192 + $0x28] sm:$0xff]
      %834 = vrot.lane.b32.xlu0 %v824, 43
      %v835 = vpop.permute.xlu0 %834
      %836 = vrot.lane.b32.xlu0 %v825, 43
      %v837 = vpop.permute.xlu0 %836
      %838 = vrot.lane.b32.xlu0 %v826, 43
      %v839 = vpop.permute.xlu0 %838
      %840 = vrot.lane.b32.xlu0 %v827, 43
      %v841 = vpop.permute.xlu0 %840
      %842 = vrot.lane.b32.xlu0 %v828, 43
      %v843 = vpop.permute.xlu0 %842
      %vm844 = vcmask 351232
      %v845 = vsel %vm844, %v835, %v837
      %v846 = vsel %vm844, %v837, %v839
      %v847 = vsel %vm844, %v839, %v841
      %v848 = vsel %vm844, %v841, %v843
      %853 = vst [vmem:[#allocation2 + $0x280] sm:$0xff] %v845
      %854 = vst [vmem:[#allocation2 + $0x288] sm:$0xff] %v846
      %855 = vst [vmem:[#allocation2 + $0x290] sm:$0xff] %v847
      %856 = vst.msk [vmem:[#allocation2 + $0x298] sm:$0xff] %vm230, %v848
      %v857 = vld [vmem:[%s192 + $0x8] sm:$0xff]
      %v858 = vld [vmem:[%s192 + $0x10] sm:$0xff]
      %v859 = vld [vmem:[%s192 + $0x18] sm:$0xff]
      %v860 = vld [vmem:[%s192 + $0x20] sm:$0xff]
      %v861 = vld [vmem:[%s192 + $0x28] sm:$0xff]
      %867 = vrot.lane.b32.xlu0 %v857, 35
      %v868 = vpop.permute.xlu0 %867
      %869 = vrot.lane.b32.xlu0 %v858, 35
      %v870 = vpop.permute.xlu0 %869
      %871 = vrot.lane.b32.xlu0 %v859, 35
      %v872 = vpop.permute.xlu0 %871
      %873 = vrot.lane.b32.xlu0 %v860, 35
      %v874 = vpop.permute.xlu0 %873
      %875 = vrot.lane.b32.xlu0 %v861, 35
      %v876 = vpop.permute.xlu0 %875
      %v877 = vsel %vm745, %v868, %v870
      %v878 = vsel %vm745, %v870, %v872
      %v879 = vsel %vm745, %v872, %v874
      %v880 = vsel %vm745, %v874, %v876
      %885 = vst [vmem:[#allocation2 + $0x2a0] sm:$0xff] %v877
      %886 = vst [vmem:[#allocation2 + $0x2a8] sm:$0xff] %v878
      %887 = vst [vmem:[#allocation2 + $0x2b0] sm:$0xff] %v879
      %888 = vst.msk [vmem:[#allocation2 + $0x2b8] sm:$0xff] %vm230, %v880
      %v889 = vld [vmem:[%s192 + $0x10] sm:$0xff]
      %v890 = vld [vmem:[%s192 + $0x18] sm:$0xff]
      %v891 = vld [vmem:[%s192 + $0x20] sm:$0xff]
      %v892 = vld [vmem:[%s192 + $0x28] sm:$0xff]
      %v893 = vld [vmem:[%s192 + $0x30] sm:$0xff]
      %899 = vrot.lane.b32.xlu0 %v889, 51
      %v900 = vpop.permute.xlu0 %899
      %901 = vrot.lane.b32.xlu0 %v890, 51
      %v902 = vpop.permute.xlu0 %901
      %903 = vrot.lane.b32.xlu0 %v891, 51
      %v904 = vpop.permute.xlu0 %903
      %905 = vrot.lane.b32.xlu0 %v892, 51
      %v906 = vpop.permute.xlu0 %905
      %907 = vrot.lane.b32.xlu0 %v893, 51
      %v908 = vpop.permute.xlu0 %907
      %vm909 = vcmask 416768
      %v910 = vsel %vm909, %v900, %v902
      %v911 = vsel %vm909, %v902, %v904
      %v912 = vsel %vm909, %v904, %v906
      %v913 = vsel %vm909, %v906, %v908
      %918 = vst [vmem:[#allocation2 + $0x2c0] sm:$0xff] %v910
      %919 = vst [vmem:[#allocation2 + $0x2c8] sm:$0xff] %v911
      %920 = vst [vmem:[#allocation2 + $0x2d0] sm:$0xff] %v912
      %921 = vst.msk [vmem:[#allocation2 + $0x2d8] sm:$0xff] %vm230, %v913
      %v922 = vld [vmem:[%s192 + $0x10] sm:$0xff]
      %v923 = vld [vmem:[%s192 + $0x18] sm:$0xff]
      %v924 = vld [vmem:[%s192 + $0x20] sm:$0xff]
      %v925 = vld [vmem:[%s192 + $0x28] sm:$0xff]
      %v926 = vld [vmem:[%s192 + $0x30] sm:$0xff]
      %932 = vrot.lane.b32.xlu0 %v922, 47
      %v933 = vpop.permute.xlu0 %932
      %934 = vrot.lane.b32.xlu0 %v923, 47
      %v935 = vpop.permute.xlu0 %934
      %936 = vrot.lane.b32.xlu0 %v924, 47
      %v937 = vpop.permute.xlu0 %936
      %938 = vrot.lane.b32.xlu0 %v925, 47
      %v939 = vpop.permute.xlu0 %938
      %940 = vrot.lane.b32.xlu0 %v926, 47
      %v941 = vpop.permute.xlu0 %940
      %vm942 = vcmask 384000
      %v943 = vsel %vm942, %v933, %v935
      %v944 = vsel %vm942, %v935, %v937
      %v945 = vsel %vm942, %v937, %v939
      %v946 = vsel %vm942, %v939, %v941
      %951 = vst [vmem:[#allocation2 + $0x2e0] sm:$0xff] %v943
      %952 = vst [vmem:[#allocation2 + $0x2e8] sm:$0xff] %v944
      %953 = vst [vmem:[#allocation2 + $0x2f0] sm:$0xff] %v945
      %954 = vst.msk [vmem:[#allocation2 + $0x2f8] sm:$0xff] %vm230, %v946
      %v955 = vld [vmem:[%s192 + $0x10] sm:$0xff]
      %v956 = vld [vmem:[%s192 + $0x18] sm:$0xff]
      %v957 = vld [vmem:[%s192 + $0x20] sm:$0xff]
      %v958 = vld [vmem:[%s192 + $0x28] sm:$0xff]
      %v959 = vld [vmem:[%s192 + $0x30] sm:$0xff]
      %965 = vrot.lane.b32.xlu0 %v955, 43
      %v966 = vpop.permute.xlu0 %965
      %967 = vrot.lane.b32.xlu0 %v956, 43
      %v968 = vpop.permute.xlu0 %967
      %969 = vrot.lane.b32.xlu0 %v957, 43
      %v970 = vpop.permute.xlu0 %969
      %971 = vrot.lane.b32.xlu0 %v958, 43
      %v972 = vpop.permute.xlu0 %971
      %973 = vrot.lane.b32.xlu0 %v959, 43
      %v974 = vpop.permute.xlu0 %973
      %v975 = vsel %vm844, %v966, %v968
      %v976 = vsel %vm844, %v968, %v970
      %v977 = vsel %vm844, %v970, %v972
      %v978 = vsel %vm844, %v972, %v974
      %983 = vst [vmem:[#allocation2 + $0x300] sm:$0xff] %v975
      %984 = vst [vmem:[#allocation2 + $0x308] sm:$0xff] %v976
      %985 = vst [vmem:[#allocation2 + $0x310] sm:$0xff] %v977
      %986 = vst.msk [vmem:[#allocation2 + $0x318] sm:$0xff] %vm230, %v978
      %v987 = vld [vmem:[%s192] sm:$0xff]
      %v988 = vld [vmem:[%s192 + $0x8] sm:$0xff]
      %v989 = vld [vmem:[%s192 + $0x10] sm:$0xff]
      %v990 = vld [vmem:[%s192 + $0x18] sm:$0xff]
      %v991 = vld [vmem:[%s192 + $0x20] sm:$0xff]
      %997 = vrot.lane.b32.xlu0 %v987, 66
      %v998 = vpop.permute.xlu0 %997
      %999 = vrot.lane.b32.xlu0 %v988, 66
      %v1000 = vpop.permute.xlu0 %999
      %1001 = vrot.lane.b32.xlu0 %v989, 66
      %v1002 = vpop.permute.xlu0 %1001
      %1003 = vrot.lane.b32.xlu0 %v990, 66
      %v1004 = vpop.permute.xlu0 %1003
      %1005 = vrot.lane.b32.xlu0 %v991, 66
      %v1006 = vpop.permute.xlu0 %1005
      %vm1007 = vcmask 539648
      %v1008 = vsel %vm1007, %v998, %v1000
      %v1009 = vsel %vm1007, %v1000, %v1002
      %v1010 = vsel %vm1007, %v1002, %v1004
      %v1011 = vsel %vm1007, %v1004, %v1006
      %1016 = vst [vmem:[#allocation2 + $0x320] sm:$0xff] %v1008
      %1017 = vst [vmem:[#allocation2 + $0x328] sm:$0xff] %v1009
      %1018 = vst [vmem:[#allocation2 + $0x330] sm:$0xff] %v1010
      %1019 = vst.msk [vmem:[#allocation2 + $0x338] sm:$0xff] %vm230, %v1011
      %v1020 = vld [vmem:[%s192] sm:$0xff]
      %v1021 = vld [vmem:[%s192 + $0x8] sm:$0xff]
      %v1022 = vld [vmem:[%s192 + $0x10] sm:$0xff]
      %v1023 = vld [vmem:[%s192 + $0x18] sm:$0xff]
      %v1024 = vld [vmem:[%s192 + $0x20] sm:$0xff]
      %1030 = vrot.lane.b32.xlu0 %v1020, 61
      %v1031 = vpop.permute.xlu0 %1030
      %1032 = vrot.lane.b32.xlu0 %v1021, 61
      %v1033 = vpop.permute.xlu0 %1032
      %1034 = vrot.lane.b32.xlu0 %v1022, 61
      %v1035 = vpop.permute.xlu0 %1034
      %1036 = vrot.lane.b32.xlu0 %v1023, 61
      %v1037 = vpop.permute.xlu0 %1036
      %1038 = vrot.lane.b32.xlu0 %v1024, 61
      %v1039 = vpop.permute.xlu0 %1038
      %vm1040 = vcmask 498688
      %v1041 = vsel %vm1040, %v1031, %v1033
      %v1042 = vsel %vm1040, %v1033, %v1035
      %v1043 = vsel %vm1040, %v1035, %v1037
      %v1044 = vsel %vm1040, %v1037, %v1039
      %1049 = vst [vmem:[#allocation2 + $0x340] sm:$0xff] %v1041
      %1050 = vst [vmem:[#allocation2 + $0x348] sm:$0xff] %v1042
      %1051 = vst [vmem:[#allocation2 + $0x350] sm:$0xff] %v1043
      %1052 = vst.msk [vmem:[#allocation2 + $0x358] sm:$0xff] %vm230, %v1044
      %v1053 = vld [vmem:[%s192] sm:$0xff]
      %v1054 = vld [vmem:[%s192 + $0x8] sm:$0xff]
      %v1055 = vld [vmem:[%s192 + $0x10] sm:$0xff]
      %v1056 = vld [vmem:[%s192 + $0x18] sm:$0xff]
      %v1057 = vld [vmem:[%s192 + $0x20] sm:$0xff]
      %1063 = vrot.lane.b32.xlu0 %v1053, 56
      %v1064 = vpop.permute.xlu0 %1063
      %1065 = vrot.lane.b32.xlu0 %v1054, 56
      %v1066 = vpop.permute.xlu0 %1065
      %1067 = vrot.lane.b32.xlu0 %v1055, 56
      %v1068 = vpop.permute.xlu0 %1067
      %1069 = vrot.lane.b32.xlu0 %v1056, 56
      %v1070 = vpop.permute.xlu0 %1069
      %1071 = vrot.lane.b32.xlu0 %v1057, 56
      %v1072 = vpop.permute.xlu0 %1071
      %vm1073 = vcmask 457728
      %v1074 = vsel %vm1073, %v1064, %v1066
      %v1075 = vsel %vm1073, %v1066, %v1068
      %v1076 = vsel %vm1073, %v1068, %v1070
      %v1077 = vsel %vm1073, %v1070, %v1072
      %1082 = vst [vmem:[#allocation2 + $0x360] sm:$0xff] %v1074
      %1083 = vst [vmem:[#allocation2 + $0x368] sm:$0xff] %v1075
      %1084 = vst [vmem:[#allocation2 + $0x370] sm:$0xff] %v1076
      %1085 = vst.msk [vmem:[#allocation2 + $0x378] sm:$0xff] %vm230, %v1077
      %v1086 = vld [vmem:[%s192 + $0x8] sm:$0xff]
      %v1087 = vld [vmem:[%s192 + $0x10] sm:$0xff]
      %v1088 = vld [vmem:[%s192 + $0x18] sm:$0xff]
      %v1089 = vld [vmem:[%s192 + $0x20] sm:$0xff]
      %v1090 = vld [vmem:[%s192 + $0x28] sm:$0xff]
      %1096 = vrot.lane.b32.xlu0 %v1086, 44
      %v1097 = vpop.permute.xlu0 %1096
      %1098 = vrot.lane.b32.xlu0 %v1087, 44
      %v1099 = vpop.permute.xlu0 %1098
      %1100 = vrot.lane.b32.xlu0 %v1088, 44
      %v1101 = vpop.permute.xlu0 %1100
      %1102 = vrot.lane.b32.xlu0 %v1089, 44
      %v1103 = vpop.permute.xlu0 %1102
      %1104 = vrot.lane.b32.xlu0 %v1090, 44
      %v1105 = vpop.permute.xlu0 %1104
      %vm1106 = vcmask 359424
      %v1107 = vsel %vm1106, %v1097, %v1099
      %v1108 = vsel %vm1106, %v1099, %v1101
      %v1109 = vsel %vm1106, %v1101, %v1103
      %v1110 = vsel %vm1106, %v1103, %v1105
      %1115 = vst [vmem:[#allocation2 + $0x380] sm:$0xff] %v1107
      %1116 = vst [vmem:[#allocation2 + $0x388] sm:$0xff] %v1108
      %1117 = vst [vmem:[#allocation2 + $0x390] sm:$0xff] %v1109
      %1118 = vst.msk [vmem:[#allocation2 + $0x398] sm:$0xff] %vm230, %v1110
      %v1119 = vld [vmem:[%s192 + $0x8] sm:$0xff]
      %v1120 = vld [vmem:[%s192 + $0x10] sm:$0xff]
      %v1121 = vld [vmem:[%s192 + $0x18] sm:$0xff]
      %v1122 = vld [vmem:[%s192 + $0x20] sm:$0xff]
      %v1123 = vld [vmem:[%s192 + $0x28] sm:$0xff]
      %1129 = vrot.lane.b32.xlu0 %v1119, 34
      %v1130 = vpop.permute.xlu0 %1129
      %1131 = vrot.lane.b32.xlu0 %v1120, 34
      %v1132 = vpop.permute.xlu0 %1131
      %1133 = vrot.lane.b32.xlu0 %v1121, 34
      %v1134 = vpop.permute.xlu0 %1133
      %1135 = vrot.lane.b32.xlu0 %v1122, 34
      %v1136 = vpop.permute.xlu0 %1135
      %1137 = vrot.lane.b32.xlu0 %v1123, 34
      %v1138 = vpop.permute.xlu0 %1137
      %vm1139 = vcmask 277504
      %v1140 = vsel %vm1139, %v1130, %v1132
      %v1141 = vsel %vm1139, %v1132, %v1134
      %v1142 = vsel %vm1139, %v1134, %v1136
      %v1143 = vsel %vm1139, %v1136, %v1138
      %1148 = vst [vmem:[#allocation2 + $0x3a0] sm:$0xff] %v1140
      %1149 = vst [vmem:[#allocation2 + $0x3a8] sm:$0xff] %v1141
      %1150 = vst [vmem:[#allocation2 + $0x3b0] sm:$0xff] %v1142
      %1151 = vst.msk [vmem:[#allocation2 + $0x3b8] sm:$0xff] %vm230, %v1143
      %v1152 = vld [vmem:[%s192 + $0x10] sm:$0xff]
      %v1153 = vld [vmem:[%s192 + $0x18] sm:$0xff]
      %v1154 = vld [vmem:[%s192 + $0x20] sm:$0xff]
      %v1155 = vld [vmem:[%s192 + $0x28] sm:$0xff]
      %v1156 = vld [vmem:[%s192 + $0x30] sm:$0xff]
      %1162 = vrot.lane.b32.xlu0 %v1152, 22
      %v1163 = vpop.permute.xlu0 %1162
      %1164 = vrot.lane.b32.xlu0 %v1153, 22
      %v1165 = vpop.permute.xlu0 %1164
      %1166 = vrot.lane.b32.xlu0 %v1154, 22
      %v1167 = vpop.permute.xlu0 %1166
      %1168 = vrot.lane.b32.xlu0 %v1155, 22
      %v1169 = vpop.permute.xlu0 %1168
      %1170 = vrot.lane.b32.xlu0 %v1156, 22
      %v1171 = vpop.permute.xlu0 %1170
      %vm1172 = vcmask 179200
      %v1173 = vsel %vm1172, %v1163, %v1165
      %v1174 = vsel %vm1172, %v1165, %v1167
      %v1175 = vsel %vm1172, %v1167, %v1169
      %v1176 = vsel %vm1172, %v1169, %v1171
      %1181 = vst [vmem:[#allocation2 + $0x3c0] sm:$0xff] %v1173
      %1182 = vst [vmem:[#allocation2 + $0x3c8] sm:$0xff] %v1174
      %1183 = vst [vmem:[#allocation2 + $0x3d0] sm:$0xff] %v1175
      %1184 = vst.msk [vmem:[#allocation2 + $0x3d8] sm:$0xff] %vm230, %v1176
      %v1185 = vld [vmem:[%s192 + $0x10] sm:$0xff]
      %v1186 = vld [vmem:[%s192 + $0x18] sm:$0xff]
      %v1187 = vld [vmem:[%s192 + $0x20] sm:$0xff]
      %v1188 = vld [vmem:[%s192 + $0x28] sm:$0xff]
      %v1189 = vld [vmem:[%s192 + $0x30] sm:$0xff]
      %1195 = vrot.lane.b32.xlu0 %v1185, 17
      %v1196 = vpop.permute.xlu0 %1195
      %1197 = vrot.lane.b32.xlu0 %v1186, 17
      %v1198 = vpop.permute.xlu0 %1197
      %1199 = vrot.lane.b32.xlu0 %v1187, 17
      %v1200 = vpop.permute.xlu0 %1199
      %1201 = vrot.lane.b32.xlu0 %v1188, 17
      %v1202 = vpop.permute.xlu0 %1201
      %1203 = vrot.lane.b32.xlu0 %v1189, 17
      %v1204 = vpop.permute.xlu0 %1203
      %vm1205 = vcmask 138240
      %v1206 = vsel %vm1205, %v1196, %v1198
      %v1207 = vsel %vm1205, %v1198, %v1200
      %v1208 = vsel %vm1205, %v1200, %v1202
      %v1209 = vsel %vm1205, %v1202, %v1204
      %1214 = vst [vmem:[#allocation2 + $0x3e0] sm:$0xff] %v1206
      %1215 = vst [vmem:[#allocation2 + $0x3e8] sm:$0xff] %v1207
      %1216 = vst [vmem:[#allocation2 + $0x3f0] sm:$0xff] %v1208
      %1217 = vst.msk [vmem:[#allocation2 + $0x3f8] sm:$0xff] %vm230, %v1209
      %v1218 = vld [vmem:[%s192 + $0x10] sm:$0xff]
      %v1219 = vld [vmem:[%s192 + $0x18] sm:$0xff]
      %v1220 = vld [vmem:[%s192 + $0x20] sm:$0xff]
      %v1221 = vld [vmem:[%s192 + $0x28] sm:$0xff]
      %v1222 = vld [vmem:[%s192 + $0x30] sm:$0xff]
      %1228 = vrot.lane.b32.xlu0 %v1218, 12
      %v1229 = vpop.permute.xlu0 %1228
      %1230 = vrot.lane.b32.xlu0 %v1219, 12
      %v1231 = vpop.permute.xlu0 %1230
      %1232 = vrot.lane.b32.xlu0 %v1220, 12
      %v1233 = vpop.permute.xlu0 %1232
      %1234 = vrot.lane.b32.xlu0 %v1221, 12
      %v1235 = vpop.permute.xlu0 %1234
      %1236 = vrot.lane.b32.xlu0 %v1222, 12
      %v1237 = vpop.permute.xlu0 %1236
      %vm1238 = vcmask 97280
      %v1239 = vsel %vm1238, %v1229, %v1231
      %v1240 = vsel %vm1238, %v1231, %v1233
      %v1241 = vsel %vm1238, %v1233, %v1235
      %v1242 = vsel %vm1238, %v1235, %v1237
      %1247 = vst [vmem:[#allocation2 + $0x400] sm:$0xff] %v1239
      %1248 = vst [vmem:[#allocation2 + $0x408] sm:$0xff] %v1240
      %1249 = vst [vmem:[#allocation2 + $0x410] sm:$0xff] %v1241
      %1250 = vst.msk [vmem:[#allocation2 + $0x418] sm:$0xff] %vm230, %v1242
      %v1251 = vld [vmem:[%s192] sm:$0xff]
      %v1252 = vld [vmem:[%s192 + $0x8] sm:$0xff]
      %v1253 = vld [vmem:[%s192 + $0x10] sm:$0xff]
      %v1254 = vld [vmem:[%s192 + $0x18] sm:$0xff]
      %1259 = vrot.lane.b32.xlu0 %v1251, 97
      %v1260 = vpop.permute.xlu0 %1259
      %1261 = vrot.lane.b32.xlu0 %v1252, 97
      %v1262 = vpop.permute.xlu0 %1261
      %1263 = vrot.lane.b32.xlu0 %v1253, 97
      %v1264 = vpop.permute.xlu0 %1263
      %1265 = vrot.lane.b32.xlu0 %v1254, 97
      %v1266 = vpop.permute.xlu0 %1265
      %v1267 = vsel %vm304, %v1260, %v1262
      %v1268 = vsel %vm304, %v1262, %v1264
      %v1269 = vsel %vm304, %v1264, %v1266
      %1274 = vst [vmem:[#allocation2 + $0x420] sm:$0xff] %v1267
      %1275 = vst [vmem:[#allocation2 + $0x428] sm:$0xff] %v1268
      %1276 = vst [vmem:[#allocation2 + $0x430] sm:$0xff] %v1269
      %1277 = vst.msk [vmem:[#allocation2 + $0x438] sm:$0xff] %vm230, %v1266
      %v1278 = vld [vmem:[%s192] sm:$0xff]
      %v1279 = vld [vmem:[%s192 + $0x8] sm:$0xff]
      %v1280 = vld [vmem:[%s192 + $0x10] sm:$0xff]
      %v1281 = vld [vmem:[%s192 + $0x18] sm:$0xff]
      %v1282 = vld [vmem:[%s192 + $0x20] sm:$0xff]
      %1288 = vrot.lane.b32.xlu0 %v1278, 91
      %v1289 = vpop.permute.xlu0 %1288
      %1290 = vrot.lane.b32.xlu0 %v1279, 91
      %v1291 = vpop.permute.xlu0 %1290
      %1292 = vrot.lane.b32.xlu0 %v1280, 91
      %v1293 = vpop.permute.xlu0 %1292
      %1294 = vrot.lane.b32.xlu0 %v1281, 91
      %v1295 = vpop.permute.xlu0 %1294
      %1296 = vrot.lane.b32.xlu0 %v1282, 91
      %v1297 = vpop.permute.xlu0 %1296
      %vm1298 = vcmask 744448
      %v1299 = vsel %vm1298, %v1289, %v1291
      %v1300 = vsel %vm1298, %v1291, %v1293
      %v1301 = vsel %vm1298, %v1293, %v1295
      %v1302 = vsel %vm1298, %v1295, %v1297
      %1307 = vst [vmem:[#allocation2 + $0x440] sm:$0xff] %v1299
      %1308 = vst [vmem:[#allocation2 + $0x448] sm:$0xff] %v1300
      %1309 = vst [vmem:[#allocation2 + $0x450] sm:$0xff] %v1301
      %1310 = vst.msk [vmem:[#allocation2 + $0x458] sm:$0xff] %vm230, %v1302
      %v1311 = vld [vmem:[%s192] sm:$0xff]
      %v1312 = vld [vmem:[%s192 + $0x8] sm:$0xff]
      %v1313 = vld [vmem:[%s192 + $0x10] sm:$0xff]
      %v1314 = vld [vmem:[%s192 + $0x18] sm:$0xff]
      %v1315 = vld [vmem:[%s192 + $0x20] sm:$0xff]
      %1321 = vrot.lane.b32.xlu0 %v1311, 85
      %v1322 = vpop.permute.xlu0 %1321
      %1323 = vrot.lane.b32.xlu0 %v1312, 85
      %v1324 = vpop.permute.xlu0 %1323
      %1325 = vrot.lane.b32.xlu0 %v1313, 85
      %v1326 = vpop.permute.xlu0 %1325
      %1327 = vrot.lane.b32.xlu0 %v1314, 85
      %v1328 = vpop.permute.xlu0 %1327
      %1329 = vrot.lane.b32.xlu0 %v1315, 85
      %v1330 = vpop.permute.xlu0 %1329
      %vm1331 = vcmask 695296
      %v1332 = vsel %vm1331, %v1322, %v1324
      %v1333 = vsel %vm1331, %v1324, %v1326
      %v1334 = vsel %vm1331, %v1326, %v1328
      %v1335 = vsel %vm1331, %v1328, %v1330
      %1340 = vst [vmem:[#allocation2 + $0x460] sm:$0xff] %v1332
      %1341 = vst [vmem:[#allocation2 + $0x468] sm:$0xff] %v1333
      %1342 = vst [vmem:[#allocation2 + $0x470] sm:$0xff] %v1334
      %1343 = vst.msk [vmem:[#allocation2 + $0x478] sm:$0xff] %vm230, %v1335
      %v1344 = vld [vmem:[%s192 + $0x8] sm:$0xff]
      %v1345 = vld [vmem:[%s192 + $0x10] sm:$0xff]
      %v1346 = vld [vmem:[%s192 + $0x18] sm:$0xff]
      %v1347 = vld [vmem:[%s192 + $0x20] sm:$0xff]
      %v1348 = vld [vmem:[%s192 + $0x28] sm:$0xff]
      %1354 = vrot.lane.b32.xlu0 %v1344, 45
      %v1355 = vpop.permute.xlu0 %1354
      %1356 = vrot.lane.b32.xlu0 %v1345, 45
      %v1357 = vpop.permute.xlu0 %1356
      %1358 = vrot.lane.b32.xlu0 %v1346, 45
      %v1359 = vpop.permute.xlu0 %1358
      %1360 = vrot.lane.b32.xlu0 %v1347, 45
      %v1361 = vpop.permute.xlu0 %1360
      %1362 = vrot.lane.b32.xlu0 %v1348, 45
      %v1363 = vpop.permute.xlu0 %1362
      %vm1364 = vcmask 367616
      %v1365 = vsel %vm1364, %v1355, %v1357
      %v1366 = vsel %vm1364, %v1357, %v1359
      %v1367 = vsel %vm1364, %v1359, %v1361
      %v1368 = vsel %vm1364, %v1361, %v1363
      %1373 = vst [vmem:[#allocation2 + $0x480] sm:$0xff] %v1365
      %1374 = vst [vmem:[#allocation2 + $0x488] sm:$0xff] %v1366
      %1375 = vst [vmem:[#allocation2 + $0x490] sm:$0xff] %v1367
      %1376 = vst.msk [vmem:[#allocation2 + $0x498] sm:$0xff] %vm230, %v1368
      %v1377 = vld [vmem:[%s192 + $0x8] sm:$0xff]
      %v1378 = vld [vmem:[%s192 + $0x10] sm:$0xff]
      %v1379 = vld [vmem:[%s192 + $0x18] sm:$0xff]
      %v1380 = vld [vmem:[%s192 + $0x20] sm:$0xff]
      %v1381 = vld [vmem:[%s192 + $0x28] sm:$0xff]
      %1387 = vrot.lane.b32.xlu0 %v1377, 33
      %v1388 = vpop.permute.xlu0 %1387
      %1389 = vrot.lane.b32.xlu0 %v1378, 33
      %v1390 = vpop.permute.xlu0 %1389
      %1391 = vrot.lane.b32.xlu0 %v1379, 33
      %v1392 = vpop.permute.xlu0 %1391
      %1393 = vrot.lane.b32.xlu0 %v1380, 33
      %v1394 = vpop.permute.xlu0 %1393
      %1395 = vrot.lane.b32.xlu0 %v1381, 33
      %v1396 = vpop.permute.xlu0 %1395
      %vm1397 = vcmask 269312
      %v1398 = vsel %vm1397, %v1388, %v1390
      %v1399 = vsel %vm1397, %v1390, %v1392
      %v1400 = vsel %vm1397, %v1392, %v1394
      %v1401 = vsel %vm1397, %v1394, %v1396
      %1406 = vst [vmem:[#allocation2 + $0x4a0] sm:$0xff] %v1398
      %1407 = vst [vmem:[#allocation2 + $0x4a8] sm:$0xff] %v1399
      %1408 = vst [vmem:[#allocation2 + $0x4b0] sm:$0xff] %v1400
      %1409 = vst.msk [vmem:[#allocation2 + $0x4b8] sm:$0xff] %vm230, %v1401
      %v1410 = vld [vmem:[%s192 + $0x18] sm:$0xff]
      %v1411 = vld [vmem:[%s192 + $0x20] sm:$0xff]
      %v1412 = vld [vmem:[%s192 + $0x28] sm:$0xff]
      %v1413 = vld [vmem:[%s192 + $0x30] sm:$0xff]
      %1418 = vrot.lane.b32.xlu0 %v1410, 121
      %v1419 = vpop.permute.xlu0 %1418
      %1420 = vrot.lane.b32.xlu0 %v1411, 121
      %v1421 = vpop.permute.xlu0 %1420
      %1422 = vrot.lane.b32.xlu0 %v1412, 121
      %v1423 = vpop.permute.xlu0 %1422
      %1424 = vrot.lane.b32.xlu0 %v1413, 121
      %v1425 = vpop.permute.xlu0 %1424
      %vm1426 = vcmask 990208
      %v1427 = vsel %vm1426, %v1419, %v1421
      %v1428 = vsel %vm1426, %v1421, %v1423
      %v1429 = vsel %vm1426, %v1423, %v1425
      %1434 = vst [vmem:[#allocation2 + $0x4c0] sm:$0xff] %v1427
      %1435 = vst [vmem:[#allocation2 + $0x4c8] sm:$0xff] %v1428
      %1436 = vst [vmem:[#allocation2 + $0x4d0] sm:$0xff] %v1429
      %1437 = vst.msk [vmem:[#allocation2 + $0x4d8] sm:$0xff] %vm230, %v1425
      %v1438 = vld [vmem:[%s192 + $0x18] sm:$0xff]
      %v1439 = vld [vmem:[%s192 + $0x20] sm:$0xff]
      %v1440 = vld [vmem:[%s192 + $0x28] sm:$0xff]
      %v1441 = vld [vmem:[%s192 + $0x30] sm:$0xff]
      %1446 = vrot.lane.b32.xlu0 %v1438, 115
      %v1447 = vpop.permute.xlu0 %1446
      %1448 = vrot.lane.b32.xlu0 %v1439, 115
      %v1449 = vpop.permute.xlu0 %1448
      %1450 = vrot.lane.b32.xlu0 %v1440, 115
      %v1451 = vpop.permute.xlu0 %1450
      %1452 = vrot.lane.b32.xlu0 %v1441, 115
      %v1453 = vpop.permute.xlu0 %1452
      %vm1454 = vcmask 941056
      %v1455 = vsel %vm1454, %v1447, %v1449
      %v1456 = vsel %vm1454, %v1449, %v1451
      %v1457 = vsel %vm1454, %v1451, %v1453
      %1462 = vst [vmem:[#allocation2 + $0x4e0] sm:$0xff] %v1455
      %1463 = vst [vmem:[#allocation2 + $0x4e8] sm:$0xff] %v1456
      %1464 = vst [vmem:[#allocation2 + $0x4f0] sm:$0xff] %v1457
      %1465 = vst.msk [vmem:[#allocation2 + $0x4f8] sm:$0xff] %vm230, %v1453
      %v1466 = vld [vmem:[%s192 + $0x18] sm:$0xff]
      %v1467 = vld [vmem:[%s192 + $0x20] sm:$0xff]
      %v1468 = vld [vmem:[%s192 + $0x28] sm:$0xff]
      %v1469 = vld [vmem:[%s192 + $0x30] sm:$0xff]
      %1474 = vrot.lane.b32.xlu0 %v1466, 109
      %v1475 = vpop.permute.xlu0 %1474
      %1476 = vrot.lane.b32.xlu0 %v1467, 109
      %v1477 = vpop.permute.xlu0 %1476
      %1478 = vrot.lane.b32.xlu0 %v1468, 109
      %v1479 = vpop.permute.xlu0 %1478
      %1480 = vrot.lane.b32.xlu0 %v1469, 109
      %v1481 = vpop.permute.xlu0 %1480
      %v1482 = vsel %vm398, %v1475, %v1477
      %v1483 = vsel %vm398, %v1477, %v1479
      %v1484 = vsel %vm398, %v1479, %v1481
      %1489 = vst [vmem:[#allocation2 + $0x500] sm:$0xff] %v1482
      %1490 = vst [vmem:[#allocation2 + $0x508] sm:$0xff] %v1483
      %1491 = vst [vmem:[#allocation2 + $0x510] sm:$0xff] %v1484
      %1492 = vst.msk [vmem:[#allocation2 + $0x518] sm:$0xff] %vm230, %v1481
      %v1493 = vld [vmem:[%s192] sm:$0xff]
      %v1494 = vld [vmem:[%s192 + $0x8] sm:$0xff]
      %v1495 = vld [vmem:[%s192 + $0x10] sm:$0xff]
      %v1496 = vld [vmem:[%s192 + $0x18] sm:$0xff]
      %1497 = vst [vmem:[#allocation2 + $0x520] sm:$0xff] %v1493
      %1498 = vst [vmem:[#allocation2 + $0x528] sm:$0xff] %v1494
      %1499 = vst [vmem:[#allocation2 + $0x530] sm:$0xff] %v1495
      %1500 = vst.msk [vmem:[#allocation2 + $0x538] sm:$0xff] %vm230, %v1496
      %v1501 = vld [vmem:[%s192] sm:$0xff]
      %v1502 = vld [vmem:[%s192 + $0x8] sm:$0xff]
      %v1503 = vld [vmem:[%s192 + $0x10] sm:$0xff]
      %v1504 = vld [vmem:[%s192 + $0x18] sm:$0xff]
      %1509 = vrot.lane.b32.xlu0 %v1501, 121
      %v1510 = vpop.permute.xlu0 %1509
      %1511 = vrot.lane.b32.xlu0 %v1502, 121
      %v1512 = vpop.permute.xlu0 %1511
      %1513 = vrot.lane.b32.xlu0 %v1503, 121
      %v1514 = vpop.permute.xlu0 %1513
      %1515 = vrot.lane.b32.xlu0 %v1504, 121
      %v1516 = vpop.permute.xlu0 %1515
      %v1517 = vsel %vm1426, %v1510, %v1512
      %v1518 = vsel %vm1426, %v1512, %v1514
      %v1519 = vsel %vm1426, %v1514, %v1516
      %1524 = vst [vmem:[#allocation2 + $0x540] sm:$0xff] %v1517
      %1525 = vst [vmem:[#allocation2 + $0x548] sm:$0xff] %v1518
      %1526 = vst [vmem:[#allocation2 + $0x550] sm:$0xff] %v1519
      %1527 = vst.msk [vmem:[#allocation2 + $0x558] sm:$0xff] %vm230, %v1516
      %v1528 = vld [vmem:[%s192] sm:$0xff]
      %v1529 = vld [vmem:[%s192 + $0x8] sm:$0xff]
      %v1530 = vld [vmem:[%s192 + $0x10] sm:$0xff]
      %v1531 = vld [vmem:[%s192 + $0x18] sm:$0xff]
      %1536 = vrot.lane.b32.xlu0 %v1528, 114
      %v1537 = vpop.permute.xlu0 %1536
      %1538 = vrot.lane.b32.xlu0 %v1529, 114
      %v1539 = vpop.permute.xlu0 %1538
      %1540 = vrot.lane.b32.xlu0 %v1530, 114
      %v1541 = vpop.permute.xlu0 %1540
      %1542 = vrot.lane.b32.xlu0 %v1531, 114
      %v1543 = vpop.permute.xlu0 %1542
      %vm1544 = vcmask 932864
      %v1545 = vsel %vm1544, %v1537, %v1539
      %v1546 = vsel %vm1544, %v1539, %v1541
      %v1547 = vsel %vm1544, %v1541, %v1543
      %1552 = vst [vmem:[#allocation2 + $0x560] sm:$0xff] %v1545
      %1553 = vst [vmem:[#allocation2 + $0x568] sm:$0xff] %v1546
      %1554 = vst [vmem:[#allocation2 + $0x570] sm:$0xff] %v1547
      %1555 = vst.msk [vmem:[#allocation2 + $0x578] sm:$0xff] %vm230, %v1543
      %v1556 = vld [vmem:[%s192 + $0x8] sm:$0xff]
      %v1557 = vld [vmem:[%s192 + $0x10] sm:$0xff]
      %v1558 = vld [vmem:[%s192 + $0x18] sm:$0xff]
      %v1559 = vld [vmem:[%s192 + $0x20] sm:$0xff]
      %v1560 = vld [vmem:[%s192 + $0x28] sm:$0xff]
      %1566 = vrot.lane.b32.xlu0 %v1556, 46
      %v1567 = vpop.permute.xlu0 %1566
      %1568 = vrot.lane.b32.xlu0 %v1557, 46
      %v1569 = vpop.permute.xlu0 %1568
      %1570 = vrot.lane.b32.xlu0 %v1558, 46
      %v1571 = vpop.permute.xlu0 %1570
      %1572 = vrot.lane.b32.xlu0 %v1559, 46
      %v1573 = vpop.permute.xlu0 %1572
      %1574 = vrot.lane.b32.xlu0 %v1560, 46
      %v1575 = vpop.permute.xlu0 %1574
      %vm1576 = vcmask 375808
      %v1577 = vsel %vm1576, %v1567, %v1569
      %v1578 = vsel %vm1576, %v1569, %v1571
      %v1579 = vsel %vm1576, %v1571, %v1573
      %v1580 = vsel %vm1576, %v1573, %v1575
      %1585 = vst [vmem:[#allocation2 + $0x580] sm:$0xff] %v1577
      %1586 = vst [vmem:[#allocation2 + $0x588] sm:$0xff] %v1578
      %1587 = vst [vmem:[#allocation2 + $0x590] sm:$0xff] %v1579
      %1588 = vst.msk [vmem:[#allocation2 + $0x598] sm:$0xff] %vm230, %v1580
      %v1589 = vld [vmem:[%s192 + $0x8] sm:$0xff]
      %v1590 = vld [vmem:[%s192 + $0x10] sm:$0xff]
      %v1591 = vld [vmem:[%s192 + $0x18] sm:$0xff]
      %v1592 = vld [vmem:[%s192 + $0x20] sm:$0xff]
      %v1593 = vld [vmem:[%s192 + $0x28] sm:$0xff]
      %1599 = vrot.lane.b32.xlu0 %v1589, 32
      %v1600 = vpop.permute.xlu0 %1599
      %1601 = vrot.lane.b32.xlu0 %v1590, 32
      %v1602 = vpop.permute.xlu0 %1601
      %1603 = vrot.lane.b32.xlu0 %v1591, 32
      %v1604 = vpop.permute.xlu0 %1603
      %1605 = vrot.lane.b32.xlu0 %v1592, 32
      %v1606 = vpop.permute.xlu0 %1605
      %1607 = vrot.lane.b32.xlu0 %v1593, 32
      %v1608 = vpop.permute.xlu0 %1607
      %vm1609 = vcmask 261120
      %v1610 = vsel %vm1609, %v1600, %v1602
      %v1611 = vsel %vm1609, %v1602, %v1604
      %v1612 = vsel %vm1609, %v1604, %v1606
      %v1613 = vsel %vm1609, %v1606, %v1608
      %1618 = vst [vmem:[#allocation2 + $0x5a0] sm:$0xff] %v1610
      %1619 = vst [vmem:[#allocation2 + $0x5a8] sm:$0xff] %v1611
      %1620 = vst [vmem:[#allocation2 + $0x5b0] sm:$0xff] %v1612
      %1621 = vst.msk [vmem:[#allocation2 + $0x5b8] sm:$0xff] %vm230, %v1613
      %v1622 = vld [vmem:[%s192 + $0x18] sm:$0xff]
      %v1623 = vld [vmem:[%s192 + $0x20] sm:$0xff]
      %v1624 = vld [vmem:[%s192 + $0x28] sm:$0xff]
      %v1625 = vld [vmem:[%s192 + $0x30] sm:$0xff]
      %v1626 = vld [vmem:[%s192 + $0x38] sm:$0xff]
      %1632 = vrot.lane.b32.xlu0 %v1622, 92
      %v1633 = vpop.permute.xlu0 %1632
      %1634 = vrot.lane.b32.xlu0 %v1623, 92
      %v1635 = vpop.permute.xlu0 %1634
      %1636 = vrot.lane.b32.xlu0 %v1624, 92
      %v1637 = vpop.permute.xlu0 %1636
      %1638 = vrot.lane.b32.xlu0 %v1625, 92
      %v1639 = vpop.permute.xlu0 %1638
      %1640 = vrot.lane.b32.xlu0 %v1626, 92
      %v1641 = vpop.permute.xlu0 %1640
      %vm1642 = vcmask 752640
      %v1643 = vsel %vm1642, %v1633, %v1635
      %v1644 = vsel %vm1642, %v1635, %v1637
      %v1645 = vsel %vm1642, %v1637, %v1639
      %v1646 = vsel %vm1642, %v1639, %v1641
      %1651 = vst [vmem:[#allocation2 + $0x5c0] sm:$0xff] %v1643
      %1652 = vst [vmem:[#allocation2 + $0x5c8] sm:$0xff] %v1644
      %1653 = vst [vmem:[#allocation2 + $0x5d0] sm:$0xff] %v1645
      %1654 = vst.msk [vmem:[#allocation2 + $0x5d8] sm:$0xff] %vm230, %v1646
      %v1655 = vld [vmem:[%s192 + $0x18] sm:$0xff]
      %v1656 = vld [vmem:[%s192 + $0x20] sm:$0xff]
      %v1657 = vld [vmem:[%s192 + $0x28] sm:$0xff]
      %v1658 = vld [vmem:[%s192 + $0x30] sm:$0xff]
      %v1659 = vld [vmem:[%s192 + $0x38] sm:$0xff]
      %1665 = vrot.lane.b32.xlu0 %v1655, 85
      %v1666 = vpop.permute.xlu0 %1665
      %1667 = vrot.lane.b32.xlu0 %v1656, 85
      %v1668 = vpop.permute.xlu0 %1667
      %1669 = vrot.lane.b32.xlu0 %v1657, 85
      %v1670 = vpop.permute.xlu0 %1669
      %1671 = vrot.lane.b32.xlu0 %v1658, 85
      %v1672 = vpop.permute.xlu0 %1671
      %1673 = vrot.lane.b32.xlu0 %v1659, 85
      %v1674 = vpop.permute.xlu0 %1673
      %v1675 = vsel %vm1331, %v1666, %v1668
      %v1676 = vsel %vm1331, %v1668, %v1670
      %v1677 = vsel %vm1331, %v1670, %v1672
      %v1678 = vsel %vm1331, %v1672, %v1674
      %1683 = vst [vmem:[#allocation2 + $0x5e0] sm:$0xff] %v1675
      %1684 = vst [vmem:[#allocation2 + $0x5e8] sm:$0xff] %v1676
      %1685 = vst [vmem:[#allocation2 + $0x5f0] sm:$0xff] %v1677
      %1686 = vst.msk [vmem:[#allocation2 + $0x5f8] sm:$0xff] %vm230, %v1678
      %v1687 = vld [vmem:[%s192 + $0x18] sm:$0xff]
      %v1688 = vld [vmem:[%s192 + $0x20] sm:$0xff]
      %v1689 = vld [vmem:[%s192 + $0x28] sm:$0xff]
      %v1690 = vld [vmem:[%s192 + $0x30] sm:$0xff]
      %v1691 = vld [vmem:[%s192 + $0x38] sm:$0xff]
      %1697 = vrot.lane.b32.xlu0 %v1687, 78
      %v1698 = vpop.permute.xlu0 %1697
      %1699 = vrot.lane.b32.xlu0 %v1688, 78
      %v1700 = vpop.permute.xlu0 %1699
      %1701 = vrot.lane.b32.xlu0 %v1689, 78
      %v1702 = vpop.permute.xlu0 %1701
      %1703 = vrot.lane.b32.xlu0 %v1690, 78
      %v1704 = vpop.permute.xlu0 %1703
      %1705 = vrot.lane.b32.xlu0 %v1691, 78
      %v1706 = vpop.permute.xlu0 %1705
      %vm1707 = vcmask 637952
      %v1708 = vsel %vm1707, %v1698, %v1700
      %v1709 = vsel %vm1707, %v1700, %v1702
      %v1710 = vsel %vm1707, %v1702, %v1704
      %v1711 = vsel %vm1707, %v1704, %v1706
      %1716 = vst [vmem:[#allocation2 + $0x600] sm:$0xff] %v1708
      %1717 = vst [vmem:[#allocation2 + $0x608] sm:$0xff] %v1709
      %1718 = vst [vmem:[#allocation2 + $0x610] sm:$0xff] %v1710
      %1719 = vst.msk [vmem:[#allocation2 + $0x618] sm:$0xff] %vm230, %v1711
      %v1720 = vld [vmem:[%s1] sm:$0xff]
      %v1721 = vld [vmem:[%s1 + $0x8] sm:$0xff]
      %v1722 = vld [vmem:[%s1 + $0x10] sm:$0xff]
      %v1723 = vld [vmem:[%s1 + $0x18] sm:$0xff]
      %v1724 = vld [vmem:[%s1 + $0x20] sm:$0xff]
      %v1725 = vld [vmem:[%s1 + $0x28] sm:$0xff]
      %v1726 = vld [vmem:[%s1 + $0x30] sm:$0xff]
      %v1727 = vld [vmem:[%s1 + $0x38] sm:$0xff]
      %v1728 = vld [vmem:[%s1 + $0x40] sm:$0xff]
      %v1729 = vld [vmem:[%s1 + $0x48] sm:$0xff]
      %v1730 = vld [vmem:[%s1 + $0x50] sm:$0xff]
      %v1731 = vld [vmem:[%s1 + $0x58] sm:$0xff]
      %v1732 = vld [vmem:[%s1 + $0x60] sm:$0xff]
      %v1733 = vld [vmem:[%s1 + $0x68] sm:$0xff]
      %v1734 = vld [vmem:[%s1 + $0x70] sm:$0xff]
      %v1735 = vld [vmem:[%s1 + $0x78] sm:$0xff]
      %v1736 = vld [vmem:[%s1 + $0x80] sm:$0xff]
      %v1737 = vld [vmem:[%s1 + $0x88] sm:$0xff]
      %v1738 = vld [vmem:[%s1 + $0x90] sm:$0xff]
      %v1739 = vld [vmem:[%s1 + $0x98] sm:$0xff]
      %v1740 = vld [vmem:[%s1 + $0xa0] sm:$0xff]
      %v1741 = vld [vmem:[%s1 + $0xa8] sm:$0xff]
      %v1742 = vld [vmem:[%s1 + $0xb0] sm:$0xff]
      %v1743 = vld [vmem:[%s1 + $0xb8] sm:$0xff]
      %v1744 = vld [vmem:[#allocation2] sm:$0xff]
      %v1745 = vld [vmem:[#allocation2 + $0x8] sm:$0xff]
      %v1746 = vld [vmem:[#allocation2 + $0x10] sm:$0xff]
      %v1747 = vld [vmem:[#allocation2 + $0x18] sm:$0xff]
      %v1748 = vld [vmem:[#allocation2 + $0x20] sm:$0xff]
      %v1749 = vld [vmem:[#allocation2 + $0x28] sm:$0xff]
      %v1750 = vld [vmem:[#allocation2 + $0x30] sm:$0xff]
      %v1751 = vld [vmem:[#allocation2 + $0x38] sm:$0xff]
      %v1752 = vld [vmem:[#allocation2 + $0x40] sm:$0xff]
      %v1753 = vld [vmem:[#allocation2 + $0x48] sm:$0xff]
      %v1754 = vld [vmem:[#allocation2 + $0x50] sm:$0xff]
      %v1755 = vld [vmem:[#allocation2 + $0x58] sm:$0xff]
      %v1756 = vld [vmem:[#allocation2 + $0x60] sm:$0xff]
      %v1757 = vld [vmem:[#allocation2 + $0x68] sm:$0xff]
      %v1758 = vld [vmem:[#allocation2 + $0x70] sm:$0xff]
      %v1759 = vld [vmem:[#allocation2 + $0x78] sm:$0xff]
      %v1760 = vld [vmem:[#allocation2 + $0x80] sm:$0xff]
      %v1761 = vld [vmem:[#allocation2 + $0x88] sm:$0xff]
      %v1762 = vld [vmem:[#allocation2 + $0x90] sm:$0xff]
      %v1763 = vld [vmem:[#allocation2 + $0x98] sm:$0xff]
      %v1764 = vld [vmem:[#allocation2 + $0xa0] sm:$0xff]
      %v1765 = vld [vmem:[#allocation2 + $0xa8] sm:$0xff]
      %v1766 = vld [vmem:[#allocation2 + $0xb0] sm:$0xff]
      %v1767 = vld [vmem:[#allocation2 + $0xb8] sm:$0xff]
      %v1768 = vld [vmem:[#allocation2 + $0xc0] sm:$0xff]
      %v1769 = vld [vmem:[#allocation2 + $0xc8] sm:$0xff]
      %v1770 = vld [vmem:[#allocation2 + $0xd0] sm:$0xff]
      %v1771 = vld [vmem:[#allocation2 + $0xd8] sm:$0xff]
      %v1772 = vld [vmem:[#allocation2 + $0xe0] sm:$0xff]
      %v1773 = vld [vmem:[#allocation2 + $0xe8] sm:$0xff]
      %v1774 = vld [vmem:[#allocation2 + $0xf0] sm:$0xff]
      %v1775 = vld [vmem:[#allocation2 + $0xf8] sm:$0xff]
      %v1776 = vld [vmem:[#allocation2 + $0x100] sm:$0xff]
      %v1777 = vld [vmem:[#allocation2 + $0x108] sm:$0xff]
      %v1778 = vld [vmem:[#allocation2 + $0x110] sm:$0xff]
      %v1779 = vld [vmem:[#allocation2 + $0x118] sm:$0xff]
      %v1780 = vld [vmem:[#allocation2 + $0x120] sm:$0xff]
      %v1781 = vld [vmem:[#allocation2 + $0x128] sm:$0xff]
      %v1782 = vld [vmem:[#allocation2 + $0x130] sm:$0xff]
      %v1783 = vld [vmem:[#allocation2 + $0x138] sm:$0xff]
      %v1784 = vld [vmem:[#allocation2 + $0x140] sm:$0xff]
      %v1785 = vld [vmem:[#allocation2 + $0x148] sm:$0xff]
      %v1786 = vld [vmem:[#allocation2 + $0x150] sm:$0xff]
      %v1787 = vld [vmem:[#allocation2 + $0x158] sm:$0xff]
      %v1788 = vld [vmem:[#allocation2 + $0x160] sm:$0xff]
      %v1789 = vld [vmem:[#allocation2 + $0x168] sm:$0xff]
      %v1790 = vld [vmem:[#allocation2 + $0x170] sm:$0xff]
      %v1791 = vld [vmem:[#allocation2 + $0x178] sm:$0xff]
      %v1792 = vld [vmem:[#allocation2 + $0x180] sm:$0xff]
      %v1793 = vld [vmem:[#allocation2 + $0x188] sm:$0xff]
      %v1794 = vld [vmem:[#allocation2 + $0x190] sm:$0xff]
      %v1795 = vld [vmem:[#allocation2 + $0x198] sm:$0xff]
      %v1796 = vld [vmem:[#allocation2 + $0x1a0] sm:$0xff]
      %v1797 = vld [vmem:[#allocation2 + $0x1a8] sm:$0xff]
      %v1798 = vld [vmem:[#allocation2 + $0x1b0] sm:$0xff]
      %v1799 = vld [vmem:[#allocation2 + $0x1b8] sm:$0xff]
      %v1800 = vld [vmem:[#allocation2 + $0x1c0] sm:$0xff]
      %v1801 = vld [vmem:[#allocation2 + $0x1c8] sm:$0xff]
      %v1802 = vld [vmem:[#allocation2 + $0x1d0] sm:$0xff]
      %v1803 = vld [vmem:[#allocation2 + $0x1d8] sm:$0xff]
      %v1804 = vld [vmem:[#allocation2 + $0x1e0] sm:$0xff]
      %v1805 = vld [vmem:[#allocation2 + $0x1e8] sm:$0xff]
      %v1806 = vld [vmem:[#allocation2 + $0x1f0] sm:$0xff]
      %v1807 = vld [vmem:[#allocation2 + $0x1f8] sm:$0xff]
      %v1808 = vld [vmem:[#allocation2 + $0x200] sm:$0xff]
      %v1809 = vld [vmem:[#allocation2 + $0x208] sm:$0xff]
      %v1810 = vld [vmem:[#allocation2 + $0x210] sm:$0xff]
      %v1811 = vld [vmem:[#allocation2 + $0x218] sm:$0xff]
      %v1812 = vld [vmem:[#allocation2 + $0x220] sm:$0xff]
      %v1813 = vld [vmem:[#allocation2 + $0x228] sm:$0xff]
      %v1814 = vld [vmem:[#allocation2 + $0x230] sm:$0xff]
      %v1815 = vld [vmem:[#allocation2 + $0x238] sm:$0xff]
      %v1816 = vld [vmem:[#allocation2 + $0x240] sm:$0xff]
      %v1817 = vld [vmem:[#allocation2 + $0x248] sm:$0xff]
      %v1818 = vld [vmem:[#allocation2 + $0x250] sm:$0xff]
      %v1819 = vld [vmem:[#allocation2 + $0x258] sm:$0xff]
      %v1820 = vld [vmem:[#allocation2 + $0x260] sm:$0xff]
      %v1821 = vld [vmem:[#allocation2 + $0x268] sm:$0xff]
      %v1822 = vld [vmem:[#allocation2 + $0x270] sm:$0xff]
      %v1823 = vld [vmem:[#allocation2 + $0x278] sm:$0xff]
      %v1824 = vld [vmem:[#allocation2 + $0x280] sm:$0xff]
      %v1825 = vld [vmem:[#allocation2 + $0x288] sm:$0xff]
      %v1826 = vld [vmem:[#allocation2 + $0x290] sm:$0xff]
      %v1827 = vld [vmem:[#allocation2 + $0x298] sm:$0xff]
      %v1828 = vld [vmem:[#allocation2 + $0x2a0] sm:$0xff]
      %v1829 = vld [vmem:[#allocation2 + $0x2a8] sm:$0xff]
      %v1830 = vld [vmem:[#allocation2 + $0x2b0] sm:$0xff]
      %v1831 = vld [vmem:[#allocation2 + $0x2b8] sm:$0xff]
      %v1832 = vld [vmem:[#allocation2 + $0x2c0] sm:$0xff]
      %v1833 = vld [vmem:[#allocation2 + $0x2c8] sm:$0xff]
      %v1834 = vld [vmem:[#allocation2 + $0x2d0] sm:$0xff]
      %v1835 = vld [vmem:[#allocation2 + $0x2d8] sm:$0xff]
      %v1836 = vld [vmem:[#allocation2 + $0x2e0] sm:$0xff]
      %v1837 = vld [vmem:[#allocation2 + $0x2e8] sm:$0xff]
      %v1838 = vld [vmem:[#allocation2 + $0x2f0] sm:$0xff]
      %v1839 = vld [vmem:[#allocation2 + $0x2f8] sm:$0xff]
      %v1840 = vld [vmem:[#allocation2 + $0x300] sm:$0xff]
      %v1841 = vld [vmem:[#allocation2 + $0x308] sm:$0xff]
      %v1842 = vld [vmem:[#allocation2 + $0x310] sm:$0xff]
      %v1843 = vld [vmem:[#allocation2 + $0x318] sm:$0xff]
      %v1844 = vld [vmem:[#allocation2 + $0x320] sm:$0xff]
      %v1845 = vld [vmem:[#allocation2 + $0x328] sm:$0xff]
      %v1846 = vld [vmem:[#allocation2 + $0x330] sm:$0xff]
      %v1847 = vld [vmem:[#allocation2 + $0x338] sm:$0xff]
      %v1848 = vld [vmem:[#allocation2 + $0x340] sm:$0xff]
      %v1849 = vld [vmem:[#allocation2 + $0x348] sm:$0xff]
      %v1850 = vld [vmem:[#allocation2 + $0x350] sm:$0xff]
      %v1851 = vld [vmem:[#allocation2 + $0x358] sm:$0xff]
      %v1852 = vld [vmem:[#allocation2 + $0x360] sm:$0xff]
      %v1853 = vld [vmem:[#allocation2 + $0x368] sm:$0xff]
      %v1854 = vld [vmem:[#allocation2 + $0x370] sm:$0xff]
      %v1855 = vld [vmem:[#allocation2 + $0x378] sm:$0xff]
      %v1856 = vld [vmem:[#allocation2 + $0x380] sm:$0xff]
      %v1857 = vld [vmem:[#allocation2 + $0x388] sm:$0xff]
      %v1858 = vld [vmem:[#allocation2 + $0x390] sm:$0xff]
      %v1859 = vld [vmem:[#allocation2 + $0x398] sm:$0xff]
      %v1860 = vld [vmem:[#allocation2 + $0x3a0] sm:$0xff]
      %v1861 = vld [vmem:[#allocation2 + $0x3a8] sm:$0xff]
      %v1862 = vld [vmem:[#allocation2 + $0x3b0] sm:$0xff]
      %v1863 = vld [vmem:[#allocation2 + $0x3b8] sm:$0xff]
      %v1864 = vld [vmem:[#allocation2 + $0x3c0] sm:$0xff]
      %v1865 = vld [vmem:[#allocation2 + $0x3c8] sm:$0xff]
      %v1866 = vld [vmem:[#allocation2 + $0x3d0] sm:$0xff]
      %v1867 = vld [vmem:[#allocation2 + $0x3d8] sm:$0xff]
      %v1868 = vld [vmem:[#allocation2 + $0x3e0] sm:$0xff]
      %v1869 = vld [vmem:[#allocation2 + $0x3e8] sm:$0xff]
      %v1870 = vld [vmem:[#allocation2 + $0x3f0] sm:$0xff]
      %v1871 = vld [vmem:[#allocation2 + $0x3f8] sm:$0xff]
      %v1872 = vld [vmem:[#allocation2 + $0x400] sm:$0xff]
      %v1873 = vld [vmem:[#allocation2 + $0x408] sm:$0xff]
      %v1874 = vld [vmem:[#allocation2 + $0x410] sm:$0xff]
      %v1875 = vld [vmem:[#allocation2 + $0x418] sm:$0xff]
      %v1876 = vld [vmem:[#allocation2 + $0x420] sm:$0xff]
      %v1877 = vld [vmem:[#allocation2 + $0x428] sm:$0xff]
      %v1878 = vld [vmem:[#allocation2 + $0x430] sm:$0xff]
      %v1879 = vld [vmem:[#allocation2 + $0x438] sm:$0xff]
      %v1880 = vld [vmem:[#allocation2 + $0x440] sm:$0xff]
      %v1881 = vld [vmem:[#allocation2 + $0x448] sm:$0xff]
      %v1882 = vld [vmem:[#allocation2 + $0x450] sm:$0xff]
      %v1883 = vld [vmem:[#allocation2 + $0x458] sm:$0xff]
      %v1884 = vld [vmem:[#allocation2 + $0x460] sm:$0xff]
      %v1885 = vld [vmem:[#allocation2 + $0x468] sm:$0xff]
      %v1886 = vld [vmem:[#allocation2 + $0x470] sm:$0xff]
      %v1887 = vld [vmem:[#allocation2 + $0x478] sm:$0xff]
      %v1888 = vld [vmem:[#allocation2 + $0x480] sm:$0xff]
      %v1889 = vld [vmem:[#allocation2 + $0x488] sm:$0xff]
      %v1890 = vld [vmem:[#allocation2 + $0x490] sm:$0xff]
      %v1891 = vld [vmem:[#allocation2 + $0x498] sm:$0xff]
      %v1892 = vld [vmem:[#allocation2 + $0x4a0] sm:$0xff]
      %v1893 = vld [vmem:[#allocation2 + $0x4a8] sm:$0xff]
      %v1894 = vld [vmem:[#allocation2 + $0x4b0] sm:$0xff]
      %v1895 = vld [vmem:[#allocation2 + $0x4b8] sm:$0xff]
      %v1896 = vld [vmem:[#allocation2 + $0x4c0] sm:$0xff]
      %v1897 = vld [vmem:[#allocation2 + $0x4c8] sm:$0xff]
      %v1898 = vld [vmem:[#allocation2 + $0x4d0] sm:$0xff]
      %v1899 = vld [vmem:[#allocation2 + $0x4d8] sm:$0xff]
      %v1900 = vld [vmem:[#allocation2 + $0x4e0] sm:$0xff]
      %v1901 = vld [vmem:[#allocation2 + $0x4e8] sm:$0xff]
      %v1902 = vld [vmem:[#allocation2 + $0x4f0] sm:$0xff]
      %v1903 = vld [vmem:[#allocation2 + $0x4f8] sm:$0xff]
      %v1904 = vld [vmem:[#allocation2 + $0x500] sm:$0xff]
      %v1905 = vld [vmem:[#allocation2 + $0x508] sm:$0xff]
      %v1906 = vld [vmem:[#allocation2 + $0x510] sm:$0xff]
      %v1907 = vld [vmem:[#allocation2 + $0x518] sm:$0xff]
      %v1908 = vld [vmem:[#allocation2 + $0x520] sm:$0xff]
      %v1909 = vld [vmem:[#allocation2 + $0x528] sm:$0xff]
      %v1910 = vld [vmem:[#allocation2 + $0x530] sm:$0xff]
      %v1911 = vld [vmem:[#allocation2 + $0x538] sm:$0xff]
      %v1912 = vld [vmem:[#allocation2 + $0x540] sm:$0xff]
      %v1913 = vld [vmem:[#allocation2 + $0x548] sm:$0xff]
      %v1914 = vld [vmem:[#allocation2 + $0x550] sm:$0xff]
      %v1915 = vld [vmem:[#allocation2 + $0x558] sm:$0xff]
      %v1916 = vld [vmem:[#allocation2 + $0x560] sm:$0xff]
      %v1917 = vld [vmem:[#allocation2 + $0x568] sm:$0xff]
      %v1918 = vld [vmem:[#allocation2 + $0x570] sm:$0xff]
      %v1919 = vld [vmem:[#allocation2 + $0x578] sm:$0xff]
      %v1920 = vld [vmem:[#allocation2 + $0x580] sm:$0xff]
      %v1921 = vld [vmem:[#allocation2 + $0x588] sm:$0xff]
      %v1922 = vld [vmem:[#allocation2 + $0x590] sm:$0xff]
      %v1923 = vld [vmem:[#allocation2 + $0x598] sm:$0xff]
      %v1924 = vld [vmem:[#allocation2 + $0x5a0] sm:$0xff]
      %v1925 = vld [vmem:[#allocation2 + $0x5a8] sm:$0xff]
      %v1926 = vld [vmem:[#allocation2 + $0x5b0] sm:$0xff]
      %v1927 = vld [vmem:[#allocation2 + $0x5b8] sm:$0xff]
      %v1928 = vld [vmem:[#allocation2 + $0x5c0] sm:$0xff]
      %v1929 = vld [vmem:[#allocation2 + $0x5c8] sm:$0xff]
      %v1930 = vld [vmem:[#allocation2 + $0x5d0] sm:$0xff]
      %v1931 = vld [vmem:[#allocation2 + $0x5d8] sm:$0xff]
      %v1932 = vld [vmem:[#allocation2 + $0x5e0] sm:$0xff]
      %v1933 = vld [vmem:[#allocation2 + $0x5e8] sm:$0xff]
      %v1934 = vld [vmem:[#allocation2 + $0x5f0] sm:$0xff]
      %v1935 = vld [vmem:[#allocation2 + $0x5f8] sm:$0xff]
      %v1936 = vld [vmem:[#allocation2 + $0x600] sm:$0xff]
      %v1937 = vld [vmem:[#allocation2 + $0x608] sm:$0xff]
      %v1938 = vld [vmem:[#allocation2 + $0x610] sm:$0xff]
      %v1939 = vld [vmem:[#allocation2 + $0x618] sm:$0xff]
      %vm1940 = vcmask 64512
      %v1942 = vsel %vm1940, %v1723, 0
      %v1945 = vsel %vm1940, %v1727, 0
      %v1948 = vsel %vm1940, %v1731, 0
      %v1951 = vsel %vm1940, %v1735, 0
      %v1954 = vsel %vm1940, %v1739, 0
      %v1957 = vsel %vm1940, %v1743, 0
      %1959 = vmatprep.subr.mxu0 %v1805
      %1960 = vmatpush1.msra.mxu0 %v1804
      %1961 = vmatprep.subr.mxu0 %v1801
      %1962 = vmatpush1.msra.mxu0 %v1800
      %1963 = vmatprep.subr.mxu0 %v1797
      %1964 = vmatpush1.msra.mxu0 %v1796
      %1965 = vmatprep.subr.mxu0 %v1793
      %1966 = vmatpush1.msra.mxu0 %v1792
      %1967 = vmatprep.subr.mxu0 %v1789
      %1968 = vmatpush1.msra.mxu0 %v1788
      %1969 = vmatprep.subr.mxu0 %v1785
      %1970 = vmatpush1.msra.mxu0 %v1784
      %1971 = vmatprep.subr.mxu0 %v1781
      %1972 = vmatpush1.msra.mxu0 %v1780
      %1973 = vmatprep.subr.mxu0 %v1777
      %1974 = vmatpush1.msra.mxu0 %v1776
      %1975 = vmatprep.subr.mxu0 %v1773
      %1976 = vmatpush1.msra.mxu0 %v1772
      %1977 = vmatprep.subr.mxu0 %v1769
      %1978 = vmatpush1.msra.mxu0 %v1768
      %1979 = vmatprep.subr.mxu0 %v1765
      %1980 = vmatpush1.msra.mxu0 %v1764
      %1981 = vmatprep.subr.mxu0 %v1761
      %1982 = vmatpush1.msra.mxu0 %v1760
      %1983 = vmatprep.subr.mxu0 %v1757
      %1984 = vmatpush1.msra.mxu0 %v1756
      %1985 = vmatprep.subr.mxu0 %v1753
      %1986 = vmatpush1.msra.mxu0 %v1752
      %1987 = vmatprep.subr.mxu0 %v1749
      %1988 = vmatpush1.msra.mxu0 %v1748
      %1989 = vmatprep.subr.mxu0 %v1745
      %1990 = vmatpush1.msra.mxu0 %v1744
      %1991 = vmatprep.subr.mxu0 %v1869
      %1992 = vmatpush2.msra.mxu0 %v1868
      %1993 = vmatprep.subr.mxu0 %v1865
      %1994 = vmatpush2.msra.mxu0 %v1864
      %1995 = vmatprep.subr.mxu0 %v1861
      %1996 = vmatpush2.msra.mxu0 %v1860
      %1997 = vmatprep.subr.mxu0 %v1857
      %1998 = vmatpush2.msra.mxu0 %v1856
      %1999 = vmatprep.subr.mxu0 %v1853
      %2000 = vmatpush2.msra.mxu0 %v1852
      %2001 = vmatprep.subr.mxu0 %v1849
      %2002 = vmatpush2.msra.mxu0 %v1848
      %2003 = vmatprep.subr.mxu0 %v1845
      %2004 = vmatpush2.msra.mxu0 %v1844
      %2005 = vmatprep.subr.mxu0 %v1841
      %2006 = vmatpush2.msra.mxu0 %v1840
      %2007 = vmatprep.subr.mxu0 %v1837
      %2008 = vmatpush2.msra.mxu0 %v1836
      %2009 = vmatprep.subr.mxu0 %v1833
      %2010 = vmatpush2.msra.mxu0 %v1832
      %2011 = vmatprep.subr.mxu0 %v1829
      %2012 = vmatpush2.msra.mxu0 %v1828
      %2013 = vmatprep.subr.mxu0 %v1825
      %2014 = vmatpush2.msra.mxu0 %v1824
      %2015 = vmatprep.subr.mxu0 %v1821
      %2016 = vmatpush2.msra.mxu0 %v1820
      %2017 = vmatprep.subr.mxu0 %v1817
      %2018 = vmatpush2.msra.mxu0 %v1816
      %2019 = vmatprep.subr.mxu0 %v1813
      %2020 = vmatpush2.msra.mxu0 %v1812
      %2021 = vmatprep.subr.mxu0 %v1809
      %2022 = vmatpush2.msra.mxu0 %v1808
      %2023 = vmatprep.mubr.f32.mxu0 %v1721
      %2024 = vmatmul.mubr.f32.gmra.mxu0 %v1720
      %v2025 = vpop.f32.mrf.mxu0
      %v2026 = vadd.f32 0.0, %v2025
      %v2027 = vpop.f32.mrf.mxu0
      %v2028 = vadd.f32 0.0, %v2027
      %2029 = vmatprep.mubr.f32.mxu0 %v1725
      %2030 = vmatmul.mubr.f32.gmra.mxu0 %v1724
      %v2031 = vpop.f32.mrf.mxu0
      %v2032 = vadd.f32 0.0, %v2031
      %v2033 = vpop.f32.mrf.mxu0
      %v2034 = vadd.f32 0.0, %v2033
      %2035 = vmatprep.mubr.f32.mxu0 %v1729
      %2036 = vmatmul.mubr.f32.gmra.mxu0 %v1728
      %v2037 = vpop.f32.mrf.mxu0
      %v2038 = vadd.f32 0.0, %v2037
      %v2039 = vpop.f32.mrf.mxu0
      %v2040 = vadd.f32 0.0, %v2039
      %2041 = vmatprep.mubr.f32.mxu0 %v1733
      %2042 = vmatmul.mubr.f32.gmra.mxu0 %v1732
      %v2043 = vpop.f32.mrf.mxu0
      %v2044 = vadd.f32 0.0, %v2043
      %v2045 = vpop.f32.mrf.mxu0
      %v2046 = vadd.f32 0.0, %v2045
      %2047 = vmatprep.mubr.f32.mxu0 %v1737
      %2048 = vmatmul.mubr.f32.gmra.mxu0 %v1736
      %v2049 = vpop.f32.mrf.mxu0
      %v2050 = vadd.f32 0.0, %v2049
      %v2051 = vpop.f32.mrf.mxu0
      %v2052 = vadd.f32 0.0, %v2051
      %2053 = vmatprep.mubr.f32.mxu0 %v1741
      %2054 = vmatmul.mubr.f32.gmra.mxu0 %v1740
      %v2055 = vpop.f32.mrf.mxu0
      %v2056 = vadd.f32 0.0, %v2055
      %v2057 = vpop.f32.mrf.mxu0
      %v2058 = vadd.f32 0.0, %v2057
      %2059 = vdwg.mxu0
      %2060 = vmatprep.subr.mxu0 %v1933
      %2061 = vmatpush1.msra.mxu0 %v1932
      %2062 = vmatprep.subr.mxu0 %v1929
      %2063 = vmatpush1.msra.mxu0 %v1928
      %2064 = vmatprep.subr.mxu0 %v1925
      %2065 = vmatpush1.msra.mxu0 %v1924
      %2066 = vmatprep.subr.mxu0 %v1921
      %2067 = vmatpush1.msra.mxu0 %v1920
      %2068 = vmatprep.subr.mxu0 %v1917
      %2069 = vmatpush1.msra.mxu0 %v1916
      %2070 = vmatprep.subr.mxu0 %v1913
      %2071 = vmatpush1.msra.mxu0 %v1912
      %2072 = vmatprep.subr.mxu0 %v1909
      %2073 = vmatpush1.msra.mxu0 %v1908
      %2074 = vmatprep.subr.mxu0 %v1905
      %2075 = vmatpush1.msra.mxu0 %v1904
      %2076 = vmatprep.subr.mxu0 %v1901
      %2077 = vmatpush1.msra.mxu0 %v1900
      %2078 = vmatprep.subr.mxu0 %v1897
      %2079 = vmatpush1.msra.mxu0 %v1896
      %2080 = vmatprep.subr.mxu0 %v1893
      %2081 = vmatpush1.msra.mxu0 %v1892
      %2082 = vmatprep.subr.mxu0 %v1889
      %2083 = vmatpush1.msra.mxu0 %v1888
      %2084 = vmatprep.subr.mxu0 %v1885
      %2085 = vmatpush1.msra.mxu0 %v1884
      %2086 = vmatprep.subr.mxu0 %v1881
      %2087 = vmatpush1.msra.mxu0 %v1880
      %2088 = vmatprep.subr.mxu0 %v1877
      %2089 = vmatpush1.msra.mxu0 %v1876
      %2090 = vmatprep.subr.mxu0 %v1873
      %2091 = vmatpush1.msra.mxu0 %v1872
      %2092 = vmatprep.subr.mxu0 0.0
      %2093 = vmatpush2.msra.mxu0 0.0
      %2094 = vmatprep.subr.mxu0 0.0
      %2095 = vmatpush2.msra.mxu0 0.0
      %2096 = vmatprep.subr.mxu0 0.0
      %2097 = vmatpush2.msra.mxu0 0.0
      %2098 = vmatprep.subr.mxu0 0.0
      %2099 = vmatpush2.msra.mxu0 0.0
      %2100 = vmatprep.subr.mxu0 0.0
      %2101 = vmatpush2.msra.mxu0 0.0
      %2102 = vmatprep.subr.mxu0 0.0
      %2103 = vmatpush2.msra.mxu0 0.0
      %2104 = vmatprep.subr.mxu0 0.0
      %2105 = vmatpush2.msra.mxu0 0.0
      %2106 = vmatprep.subr.mxu0 0.0
      %2107 = vmatpush2.msra.mxu0 0.0
      %2108 = vmatprep.subr.mxu0 0.0
      %2109 = vmatpush2.msra.mxu0 0.0
      %2110 = vmatprep.subr.mxu0 0.0
      %2111 = vmatpush2.msra.mxu0 0.0
      %2112 = vmatprep.subr.mxu0 0.0
      %2113 = vmatpush2.msra.mxu0 0.0
      %2114 = vmatprep.subr.mxu0 0.0
      %2115 = vmatpush2.msra.mxu0 0.0
      %2116 = vmatprep.subr.mxu0 0.0
      %2117 = vmatpush2.msra.mxu0 0.0
      %2118 = vmatprep.subr.mxu0 0.0
      %2119 = vmatpush2.msra.mxu0 0.0
      %2120 = vmatprep.subr.mxu0 0.0
      %2121 = vmatpush2.msra.mxu0 0.0
      %2122 = vmatprep.subr.mxu0 %v1937
      %2123 = vmatpush2.msra.mxu0 %v1936
      %2124 = vmatprep.mubr.f32.mxu0 %v1942
      %2125 = vmatmul.mubr.f32.gmra.mxu0 %v1722
      %v2126 = vpop.f32.mrf.mxu0
      %v2127 = vadd.f32 %v2026, %v2126
      %v2128 = vpop.f32.mrf.mxu0
      %v2129 = vadd.f32 %v2028, %v2128
      %2130 = vmatprep.mubr.f32.mxu0 %v1945
      %2131 = vmatmul.mubr.f32.gmra.mxu0 %v1726
      %v2132 = vpop.f32.mrf.mxu0
      %v2133 = vadd.f32 %v2032, %v2132
      %v2134 = vpop.f32.mrf.mxu0
      %v2135 = vadd.f32 %v2034, %v2134
      %2136 = vmatprep.mubr.f32.mxu0 %v1948
      %2137 = vmatmul.mubr.f32.gmra.mxu0 %v1730
      %v2138 = vpop.f32.mrf.mxu0
      %v2139 = vadd.f32 %v2038, %v2138
      %v2140 = vpop.f32.mrf.mxu0
      %v2141 = vadd.f32 %v2040, %v2140
      %2142 = vmatprep.mubr.f32.mxu0 %v1951
      %2143 = vmatmul.mubr.f32.gmra.mxu0 %v1734
      %v2144 = vpop.f32.mrf.mxu0
      %v2145 = vadd.f32 %v2044, %v2144
      %v2146 = vpop.f32.mrf.mxu0
      %v2147 = vadd.f32 %v2046, %v2146
      %2148 = vmatprep.mubr.f32.mxu0 %v1954
      %2149 = vmatmul.mubr.f32.gmra.mxu0 %v1738
      %v2150 = vpop.f32.mrf.mxu0
      %v2151 = vadd.f32 %v2050, %v2150
      %v2152 = vpop.f32.mrf.mxu0
      %v2153 = vadd.f32 %v2052, %v2152
      %2154 = vmatprep.mubr.f32.mxu0 %v1957
      %2155 = vmatmul.mubr.f32.gmra.mxu0 %v1742
      %v2156 = vpop.f32.mrf.mxu0
      %v2157 = vadd.f32 %v2056, %v2156
      %v2158 = vpop.f32.mrf.mxu0
      %v2159 = vadd.f32 %v2058, %v2158
      %2160 = vdwg.mxu0
      %2161 = vmatprep.subr.mxu0 %v1807
      %2162 = vmatpush1.msra.mxu0 %v1806
      %2163 = vmatprep.subr.mxu0 %v1803
      %2164 = vmatpush1.msra.mxu0 %v1802
      %2165 = vmatprep.subr.mxu0 %v1799
      %2166 = vmatpush1.msra.mxu0 %v1798
      %2167 = vmatprep.subr.mxu0 %v1795
      %2168 = vmatpush1.msra.mxu0 %v1794
      %2169 = vmatprep.subr.mxu0 %v1791
      %2170 = vmatpush1.msra.mxu0 %v1790
      %2171 = vmatprep.subr.mxu0 %v1787
      %2172 = vmatpush1.msra.mxu0 %v1786
      %2173 = vmatprep.subr.mxu0 %v1783
      %2174 = vmatpush1.msra.mxu0 %v1782
      %2175 = vmatprep.subr.mxu0 %v1779
      %2176 = vmatpush1.msra.mxu0 %v1778
      %2177 = vmatprep.subr.mxu0 %v1775
      %2178 = vmatpush1.msra.mxu0 %v1774
      %2179 = vmatprep.subr.mxu0 %v1771
      %2180 = vmatpush1.msra.mxu0 %v1770
      %2181 = vmatprep.subr.mxu0 %v1767
      %2182 = vmatpush1.msra.mxu0 %v1766
      %2183 = vmatprep.subr.mxu0 %v1763
      %2184 = vmatpush1.msra.mxu0 %v1762
      %2185 = vmatprep.subr.mxu0 %v1759
      %2186 = vmatpush1.msra.mxu0 %v1758
      %2187 = vmatprep.subr.mxu0 %v1755
      %2188 = vmatpush1.msra.mxu0 %v1754
      %2189 = vmatprep.subr.mxu0 %v1751
      %2190 = vmatpush1.msra.mxu0 %v1750
      %2191 = vmatprep.subr.mxu0 %v1747
      %2192 = vmatpush1.msra.mxu0 %v1746
      %2193 = vmatprep.subr.mxu0 %v1871
      %2194 = vmatpush2.msra.mxu0 %v1870
      %2195 = vmatprep.subr.mxu0 %v1867
      %2196 = vmatpush2.msra.mxu0 %v1866
      %2197 = vmatprep.subr.mxu0 %v1863
      %2198 = vmatpush2.msra.mxu0 %v1862
      %2199 = vmatprep.subr.mxu0 %v1859
      %2200 = vmatpush2.msra.mxu0 %v1858
      %2201 = vmatprep.subr.mxu0 %v1855
      %2202 = vmatpush2.msra.mxu0 %v1854
      %2203 = vmatprep.subr.mxu0 %v1851
      %2204 = vmatpush2.msra.mxu0 %v1850
      %2205 = vmatprep.subr.mxu0 %v1847
      %2206 = vmatpush2.msra.mxu0 %v1846
      %2207 = vmatprep.subr.mxu0 %v1843
      %2208 = vmatpush2.msra.mxu0 %v1842
      %2209 = vmatprep.subr.mxu0 %v1839
      %2210 = vmatpush2.msra.mxu0 %v1838
      %2211 = vmatprep.subr.mxu0 %v1835
      %2212 = vmatpush2.msra.mxu0 %v1834
      %2213 = vmatprep.subr.mxu0 %v1831
      %2214 = vmatpush2.msra.mxu0 %v1830
      %2215 = vmatprep.subr.mxu0 %v1827
      %2216 = vmatpush2.msra.mxu0 %v1826
      %2217 = vmatprep.subr.mxu0 %v1823
      %2218 = vmatpush2.msra.mxu0 %v1822
      %2219 = vmatprep.subr.mxu0 %v1819
      %2220 = vmatpush2.msra.mxu0 %v1818
      %2221 = vmatprep.subr.mxu0 %v1815
      %2222 = vmatpush2.msra.mxu0 %v1814
      %2223 = vmatprep.subr.mxu0 %v1811
      %2224 = vmatpush2.msra.mxu0 %v1810
      %2225 = vmatprep.mubr.f32.mxu0 %v1721
      %2226 = vmatmul.mubr.f32.gmra.mxu0 %v1720
      %v2227 = vpop.f32.mrf.mxu0
      %v2228 = vadd.f32 0.0, %v2227
      %v2229 = vpop.f32.mrf.mxu0
      %v2230 = vadd.f32 0.0, %v2229
      %2231 = vmatprep.mubr.f32.mxu0 %v1725
      %2232 = vmatmul.mubr.f32.gmra.mxu0 %v1724
      %v2233 = vpop.f32.mrf.mxu0
      %v2234 = vadd.f32 0.0, %v2233
      %v2235 = vpop.f32.mrf.mxu0
      %v2236 = vadd.f32 0.0, %v2235
      %2237 = vmatprep.mubr.f32.mxu0 %v1729
      %2238 = vmatmul.mubr.f32.gmra.mxu0 %v1728
      %v2239 = vpop.f32.mrf.mxu0
      %v2240 = vadd.f32 0.0, %v2239
      %v2241 = vpop.f32.mrf.mxu0
      %v2242 = vadd.f32 0.0, %v2241
      %2243 = vmatprep.mubr.f32.mxu0 %v1733
      %2244 = vmatmul.mubr.f32.gmra.mxu0 %v1732
      %v2245 = vpop.f32.mrf.mxu0
      %v2246 = vadd.f32 0.0, %v2245
      %v2247 = vpop.f32.mrf.mxu0
      %v2248 = vadd.f32 0.0, %v2247
      %2249 = vmatprep.mubr.f32.mxu0 %v1737
      %2250 = vmatmul.mubr.f32.gmra.mxu0 %v1736
      %v2251 = vpop.f32.mrf.mxu0
      %v2252 = vadd.f32 0.0, %v2251
      %v2253 = vpop.f32.mrf.mxu0
      %v2254 = vadd.f32 0.0, %v2253
      %2255 = vmatprep.mubr.f32.mxu0 %v1741
      %2256 = vmatmul.mubr.f32.gmra.mxu0 %v1740
      %v2257 = vpop.f32.mrf.mxu0
      %v2258 = vadd.f32 0.0, %v2257
      %v2259 = vpop.f32.mrf.mxu0
      %v2260 = vadd.f32 0.0, %v2259
      %2261 = vdwg.mxu0
      %2262 = vmatprep.subr.mxu0 %v1935
      %2263 = vmatpush1.msra.mxu0 %v1934
      %2264 = vmatprep.subr.mxu0 %v1931
      %2265 = vmatpush1.msra.mxu0 %v1930
      %2266 = vmatprep.subr.mxu0 %v1927
      %2267 = vmatpush1.msra.mxu0 %v1926
      %2268 = vmatprep.subr.mxu0 %v1923
      %2269 = vmatpush1.msra.mxu0 %v1922
      %2270 = vmatprep.subr.mxu0 %v1919
      %2271 = vmatpush1.msra.mxu0 %v1918
      %2272 = vmatprep.subr.mxu0 %v1915
      %2273 = vmatpush1.msra.mxu0 %v1914
      %2274 = vmatprep.subr.mxu0 %v1911
      %2275 = vmatpush1.msra.mxu0 %v1910
      %2276 = vmatprep.subr.mxu0 %v1907
      %2277 = vmatpush1.msra.mxu0 %v1906
      %2278 = vmatprep.subr.mxu0 %v1903
      %2279 = vmatpush1.msra.mxu0 %v1902
      %2280 = vmatprep.subr.mxu0 %v1899
      %2281 = vmatpush1.msra.mxu0 %v1898
      %2282 = vmatprep.subr.mxu0 %v1895
      %2283 = vmatpush1.msra.mxu0 %v1894
      %2284 = vmatprep.subr.mxu0 %v1891
      %2285 = vmatpush1.msra.mxu0 %v1890
      %2286 = vmatprep.subr.mxu0 %v1887
      %2287 = vmatpush1.msra.mxu0 %v1886
      %2288 = vmatprep.subr.mxu0 %v1883
      %2289 = vmatpush1.msra.mxu0 %v1882
      %2290 = vmatprep.subr.mxu0 %v1879
      %2291 = vmatpush1.msra.mxu0 %v1878
      %2292 = vmatprep.subr.mxu0 %v1875
      %2293 = vmatpush1.msra.mxu0 %v1874
      %2294 = vmatprep.subr.mxu0 0.0
      %2295 = vmatpush2.msra.mxu0 0.0
      %2296 = vmatprep.subr.mxu0 0.0
      %2297 = vmatpush2.msra.mxu0 0.0
      %2298 = vmatprep.subr.mxu0 0.0
      %2299 = vmatpush2.msra.mxu0 0.0
      %2300 = vmatprep.subr.mxu0 0.0
      %2301 = vmatpush2.msra.mxu0 0.0
      %2302 = vmatprep.subr.mxu0 0.0
      %2303 = vmatpush2.msra.mxu0 0.0
      %2304 = vmatprep.subr.mxu0 0.0
      %2305 = vmatpush2.msra.mxu0 0.0
      %2306 = vmatprep.subr.mxu0 0.0
      %2307 = vmatpush2.msra.mxu0 0.0
      %2308 = vmatprep.subr.mxu0 0.0
      %2309 = vmatpush2.msra.mxu0 0.0
      %2310 = vmatprep.subr.mxu0 0.0
      %2311 = vmatpush2.msra.mxu0 0.0
      %2312 = vmatprep.subr.mxu0 0.0
      %2313 = vmatpush2.msra.mxu0 0.0
      %2314 = vmatprep.subr.mxu0 0.0
      %2315 = vmatpush2.msra.mxu0 0.0
      %2316 = vmatprep.subr.mxu0 0.0
      %2317 = vmatpush2.msra.mxu0 0.0
      %2318 = vmatprep.subr.mxu0 0.0
      %2319 = vmatpush2.msra.mxu0 0.0
      %2320 = vmatprep.subr.mxu0 0.0
      %2321 = vmatpush2.msra.mxu0 0.0
      %2322 = vmatprep.subr.mxu0 0.0
      %2323 = vmatpush2.msra.mxu0 0.0
      %2324 = vmatprep.subr.mxu0 %v1939
      %2325 = vmatpush2.msra.mxu0 %v1938
      %2326 = vmatprep.mubr.f32.mxu0 %v1942
      %2327 = vmatmul.mubr.f32.gmra.mxu0 %v1722
      %v2328 = vpop.f32.mrf.mxu0
      %v2329 = vadd.f32 %v2228, %v2328
      %v2330 = vpop.f32.mrf.mxu0
      %v2331 = vadd.f32 %v2230, %v2330
      %2332 = vmatprep.mubr.f32.mxu0 %v1945
      %2333 = vmatmul.mubr.f32.gmra.mxu0 %v1726
      %v2334 = vpop.f32.mrf.mxu0
      %v2335 = vadd.f32 %v2234, %v2334
      %v2336 = vpop.f32.mrf.mxu0
      %v2337 = vadd.f32 %v2236, %v2336
      %2338 = vmatprep.mubr.f32.mxu0 %v1948
      %2339 = vmatmul.mubr.f32.gmra.mxu0 %v1730
      %v2340 = vpop.f32.mrf.mxu0
      %v2341 = vadd.f32 %v2240, %v2340
      %v2342 = vpop.f32.mrf.mxu0
      %v2343 = vadd.f32 %v2242, %v2342
      %2344 = vmatprep.mubr.f32.mxu0 %v1951
      %2345 = vmatmul.mubr.f32.gmra.mxu0 %v1734
      %v2346 = vpop.f32.mrf.mxu0
      %v2347 = vadd.f32 %v2246, %v2346
      %v2348 = vpop.f32.mrf.mxu0
      %v2349 = vadd.f32 %v2248, %v2348
      %2350 = vmatprep.mubr.f32.mxu0 %v1954
      %2351 = vmatmul.mubr.f32.gmra.mxu0 %v1738
      %v2352 = vpop.f32.mrf.mxu0
      %v2353 = vadd.f32 %v2252, %v2352
      %v2354 = vpop.f32.mrf.mxu0
      %v2355 = vadd.f32 %v2254, %v2354
      %2356 = vmatprep.mubr.f32.mxu0 %v1957
      %2357 = vmatmul.mubr.f32.gmra.mxu0 %v1742
      %v2358 = vpop.f32.mrf.mxu0
      %v2359 = vadd.f32 %v2258, %v2358
      %v2360 = vpop.f32.mrf.mxu0
      %v2361 = vadd.f32 %v2260, %v2360
      %2362 = vdwg.mxu0
      %v2363 = vld [vmem:[%s3] sm:$0xff]
      %v2364 = vld [vmem:[%s3 + $0x8] sm:$0xff]
      %v2365 = vld [vmem:[%s3 + $0x10] sm:$0xff]
      %v2366 = vld [vmem:[%s3 + $0x18] sm:$0xff]
      %v2367 = vld [vmem:[%s3 + $0x20] sm:$0xff]
      %v2368 = vld [vmem:[%s3 + $0x28] sm:$0xff]
      %v2369 = vld [vmem:[%s3 + $0x30] sm:$0xff]
      %v2370 = vld [vmem:[%s3 + $0x38] sm:$0xff]
      %v2371 = vld [vmem:[%s3 + $0x40] sm:$0xff]
      %v2372 = vld [vmem:[%s3 + $0x48] sm:$0xff]
      %v2373 = vld [vmem:[%s3 + $0x50] sm:$0xff]
      %v2374 = vld [vmem:[%s3 + $0x58] sm:$0xff]
      %v2375 = vld [vmem:[%s3 + $0x60] sm:$0xff]
      %v2376 = vld [vmem:[%s3 + $0x68] sm:$0xff]
      %v2377 = vld [vmem:[%s3 + $0x70] sm:$0xff]
      %v2378 = vld [vmem:[%s3 + $0x78] sm:$0xff]
      %v2379 = vld [vmem:[%s3 + $0x80] sm:$0xff]
      %v2380 = vld [vmem:[%s3 + $0x88] sm:$0xff]
      %v2381 = vld [vmem:[%s3 + $0x90] sm:$0xff]
      %v2382 = vld [vmem:[%s3 + $0x98] sm:$0xff]
      %v2383 = vld [vmem:[%s3 + $0xa0] sm:$0xff]
      %v2384 = vld [vmem:[%s3 + $0xa8] sm:$0xff]
      %v2385 = vld [vmem:[%s3 + $0xb0] sm:$0xff]
      %v2386 = vld [vmem:[%s3 + $0xb8] sm:$0xff]
      %v2387 = vld [vmem:[%s3 + $0xc0] sm:$0xff]
      %v2388 = vld [vmem:[%s3 + $0xc8] sm:$0xff]
      %v2389 = vld [vmem:[%s3 + $0xd0] sm:$0xff]
      %v2390 = vld [vmem:[%s3 + $0xd8] sm:$0xff]
      %v2391 = vld [vmem:[%s3 + $0xe0] sm:$0xff]
      %v2392 = vld [vmem:[%s3 + $0xe8] sm:$0xff]
      %v2393 = vld [vmem:[%s3 + $0xf0] sm:$0xff]
      %v2394 = vld [vmem:[%s3 + $0xf8] sm:$0xff]
      %v2395 = vld [vmem:[%s3 + $0x100] sm:$0xff]
      %v2396 = vld [vmem:[%s3 + $0x108] sm:$0xff]
      %v2397 = vld [vmem:[%s3 + $0x110] sm:$0xff]
      %v2398 = vld [vmem:[%s3 + $0x118] sm:$0xff]
      %v2399 = vld [vmem:[%s3 + $0x120] sm:$0xff]
      %v2400 = vld [vmem:[%s3 + $0x128] sm:$0xff]
      %v2401 = vld [vmem:[%s3 + $0x130] sm:$0xff]
      %v2402 = vld [vmem:[%s3 + $0x138] sm:$0xff]
      %v2403 = vld [vmem:[%s3 + $0x140] sm:$0xff]
      %v2404 = vld [vmem:[%s3 + $0x148] sm:$0xff]
      %v2405 = vld [vmem:[%s3 + $0x150] sm:$0xff]
      %v2406 = vld [vmem:[%s3 + $0x158] sm:$0xff]
      %v2407 = vld [vmem:[%s3 + $0x160] sm:$0xff]
      %v2408 = vld [vmem:[%s3 + $0x168] sm:$0xff]
      %v2409 = vld [vmem:[%s3 + $0x170] sm:$0xff]
      %v2410 = vld [vmem:[%s3 + $0x178] sm:$0xff]
      %v2411 = vld [vmem:[%s3 + $0x180] sm:$0xff]
      %v2412 = vld [vmem:[%s3 + $0x188] sm:$0xff]
      %v2413 = vld [vmem:[%s3 + $0x190] sm:$0xff]
      %v2414 = vld [vmem:[%s3 + $0x198] sm:$0xff]
      %v2415 = vld [vmem:[%s3 + $0x1a0] sm:$0xff]
      %v2416 = vld [vmem:[%s3 + $0x1a8] sm:$0xff]
      %v2417 = vld [vmem:[%s3 + $0x1b0] sm:$0xff]
      %v2418 = vld [vmem:[%s3 + $0x1b8] sm:$0xff]
      %v2419 = vld [vmem:[%s3 + $0x1c0] sm:$0xff]
      %v2420 = vld [vmem:[%s3 + $0x1c8] sm:$0xff]
      %v2421 = vld [vmem:[%s3 + $0x1d0] sm:$0xff]
      %v2422 = vld [vmem:[%s3 + $0x1d8] sm:$0xff]
      %v2423 = vld [vmem:[%s3 + $0x1e0] sm:$0xff]
      %v2424 = vld [vmem:[%s3 + $0x1e8] sm:$0xff]
      %v2425 = vld [vmem:[%s3 + $0x1f0] sm:$0xff]
      %v2426 = vld [vmem:[%s3 + $0x1f8] sm:$0xff]
      %v2427 = vld [vmem:[%s3 + $0x200] sm:$0xff]
      %v2428 = vld [vmem:[%s3 + $0x208] sm:$0xff]
      %v2429 = vld [vmem:[%s3 + $0x210] sm:$0xff]
      %v2430 = vld [vmem:[%s3 + $0x218] sm:$0xff]
      %v2431 = vld [vmem:[%s3 + $0x220] sm:$0xff]
      %v2432 = vld [vmem:[%s3 + $0x228] sm:$0xff]
      %v2433 = vld [vmem:[%s3 + $0x230] sm:$0xff]
      %v2434 = vld [vmem:[%s3 + $0x238] sm:$0xff]
      %v2435 = vld [vmem:[%s3 + $0x240] sm:$0xff]
      %v2436 = vld [vmem:[%s3 + $0x248] sm:$0xff]
      %v2437 = vld [vmem:[%s3 + $0x250] sm:$0xff]
      %v2438 = vld [vmem:[%s3 + $0x258] sm:$0xff]
      %v2439 = vld [vmem:[%s3 + $0x260] sm:$0xff]
      %v2440 = vld [vmem:[%s3 + $0x268] sm:$0xff]
      %v2441 = vld [vmem:[%s3 + $0x270] sm:$0xff]
      %v2442 = vld [vmem:[%s3 + $0x278] sm:$0xff]
      %v2443 = vld [vmem:[%s3 + $0x280] sm:$0xff]
      %v2444 = vld [vmem:[%s3 + $0x288] sm:$0xff]
      %v2445 = vld [vmem:[%s3 + $0x290] sm:$0xff]
      %v2446 = vld [vmem:[%s3 + $0x298] sm:$0xff]
      %v2447 = vld [vmem:[%s3 + $0x2a0] sm:$0xff]
      %v2448 = vld [vmem:[%s3 + $0x2a8] sm:$0xff]
      %v2449 = vld [vmem:[%s3 + $0x2b0] sm:$0xff]
      %v2450 = vld [vmem:[%s3 + $0x2b8] sm:$0xff]
      %v2451 = vld [vmem:[%s3 + $0x2c0] sm:$0xff]
      %v2452 = vld [vmem:[%s3 + $0x2c8] sm:$0xff]
      %v2453 = vld [vmem:[%s3 + $0x2d0] sm:$0xff]
      %v2454 = vld [vmem:[%s3 + $0x2d8] sm:$0xff]
      %v2455 = vld [vmem:[%s3 + $0x2e0] sm:$0xff]
      %v2456 = vld [vmem:[%s3 + $0x2e8] sm:$0xff]
      %v2457 = vld [vmem:[%s3 + $0x2f0] sm:$0xff]
      %v2458 = vld [vmem:[%s3 + $0x2f8] sm:$0xff]
      %v2459 = vld [vmem:[%s3 + $0x300] sm:$0xff]
      %v2460 = vld [vmem:[%s3 + $0x308] sm:$0xff]
      %v2461 = vld [vmem:[%s3 + $0x310] sm:$0xff]
      %v2462 = vld [vmem:[%s3 + $0x318] sm:$0xff]
      %v2463 = vld [vmem:[%s3 + $0x320] sm:$0xff]
      %v2464 = vld [vmem:[%s3 + $0x328] sm:$0xff]
      %v2465 = vld [vmem:[%s3 + $0x330] sm:$0xff]
      %v2466 = vld [vmem:[%s3 + $0x338] sm:$0xff]
      %v2467 = vld [vmem:[%s3 + $0x340] sm:$0xff]
      %v2468 = vld [vmem:[%s3 + $0x348] sm:$0xff]
      %v2469 = vld [vmem:[%s3 + $0x350] sm:$0xff]
      %v2470 = vld [vmem:[%s3 + $0x358] sm:$0xff]
      %v2471 = vld [vmem:[%s3 + $0x360] sm:$0xff]
      %v2472 = vld [vmem:[%s3 + $0x368] sm:$0xff]
      %v2473 = vld [vmem:[%s3 + $0x370] sm:$0xff]
      %v2474 = vld [vmem:[%s3 + $0x378] sm:$0xff]
      %v2475 = vld [vmem:[%s3 + $0x380] sm:$0xff]
      %v2476 = vld [vmem:[%s3 + $0x388] sm:$0xff]
      %v2477 = vld [vmem:[%s3 + $0x390] sm:$0xff]
      %v2478 = vld [vmem:[%s3 + $0x398] sm:$0xff]
      %v2479 = vld [vmem:[%s3 + $0x3a0] sm:$0xff]
      %v2480 = vld [vmem:[%s3 + $0x3a8] sm:$0xff]
      %v2481 = vld [vmem:[%s3 + $0x3b0] sm:$0xff]
      %v2482 = vld [vmem:[%s3 + $0x3b8] sm:$0xff]
      %v2483 = vld [vmem:[%s2] sm:$0xff]
      %v2484 = vld [vmem:[%s2 + $0x8] sm:$0xff]
      %v2485 = vld [vmem:[%s2 + $0x10] sm:$0xff]
      %v2486 = vld [vmem:[%s2 + $0x18] sm:$0xff]
      %v2487 = vld [vmem:[%s2 + $0x20] sm:$0xff]
      %v2488 = vld [vmem:[%s2 + $0x28] sm:$0xff]
      %2490 = vset.pattern.permute.xlu0 0
      %2491 = vperm.xlu0 %2490, %v2483
      %v2492 = vpop.permute.xlu0 %2491
      %2495 = vset.pattern.permute.xlu0 0
      %2496 = vperm.xlu0 %2495, %v2484
      %v2497 = vpop.permute.xlu0 %2496
      %2500 = vset.pattern.permute.xlu0 0
      %2501 = vperm.xlu0 %2500, %v2485
      %v2502 = vpop.permute.xlu0 %2501
      %2505 = vset.pattern.permute.xlu0 0
      %2506 = vperm.xlu0 %2505, %v2486
      %v2507 = vpop.permute.xlu0 %2506
      %2510 = vset.pattern.permute.xlu0 0
      %2511 = vperm.xlu0 %2510, %v2487
      %v2512 = vpop.permute.xlu0 %2511
      %2515 = vset.pattern.permute.xlu0 0
      %2516 = vperm.xlu0 %2515, %v2488
      %v2517 = vpop.permute.xlu0 %2516
      %v2520 = vsel %vm230, %v2331, 0
      %v2523 = vsel %vm230, %v2337, 0
      %v2526 = vsel %vm230, %v2343, 0
      %v2529 = vsel %vm230, %v2349, 0
      %v2532 = vsel %vm230, %v2355, 0
      %v2535 = vsel %vm230, %v2361, 0
      %2537 = vmatprep.subr.mxu0 %v2394
      %2538 = vmatpush1.msra.mxu0 %v2393
      %2539 = vmatprep.subr.mxu0 %v2392
      %2540 = vmatpush1.msra.mxu0 %v2391
      %2541 = vmatprep.subr.mxu0 %v2390
      %2542 = vmatpush1.msra.mxu0 %v2389
      %2543 = vmatprep.subr.mxu0 %v2388
      %2544 = vmatpush1.msra.mxu0 %v2387
      %2545 = vmatprep.subr.mxu0 %v2386
      %2546 = vmatpush1.msra.mxu0 %v2385
      %2547 = vmatprep.subr.mxu0 %v2384
      %2548 = vmatpush1.msra.mxu0 %v2383
      %2549 = vmatprep.subr.mxu0 %v2382
      %2550 = vmatpush1.msra.mxu0 %v2381
      %2551 = vmatprep.subr.mxu0 %v2380
      %2552 = vmatpush1.msra.mxu0 %v2379
      %2553 = vmatprep.subr.mxu0 %v2378
      %2554 = vmatpush1.msra.mxu0 %v2377
      %2555 = vmatprep.subr.mxu0 %v2376
      %2556 = vmatpush1.msra.mxu0 %v2375
      %2557 = vmatprep.subr.mxu0 %v2374
      %2558 = vmatpush1.msra.mxu0 %v2373
      %2559 = vmatprep.subr.mxu0 %v2372
      %2560 = vmatpush1.msra.mxu0 %v2371
      %2561 = vmatprep.subr.mxu0 %v2370
      %2562 = vmatpush1.msra.mxu0 %v2369
      %2563 = vmatprep.subr.mxu0 %v2368
      %2564 = vmatpush1.msra.mxu0 %v2367
      %2565 = vmatprep.subr.mxu0 %v2366
      %2566 = vmatpush1.msra.mxu0 %v2365
      %2567 = vmatprep.subr.mxu0 %v2364
      %2568 = vmatpush1.msra.mxu0 %v2363
      %2569 = vmatprep.subr.mxu0 %v2426
      %2570 = vmatpush2.msra.mxu0 %v2425
      %2571 = vmatprep.subr.mxu0 %v2424
      %2572 = vmatpush2.msra.mxu0 %v2423
      %2573 = vmatprep.subr.mxu0 %v2422
      %2574 = vmatpush2.msra.mxu0 %v2421
      %2575 = vmatprep.subr.mxu0 %v2420
      %2576 = vmatpush2.msra.mxu0 %v2419
      %2577 = vmatprep.subr.mxu0 %v2418
      %2578 = vmatpush2.msra.mxu0 %v2417
      %2579 = vmatprep.subr.mxu0 %v2416
      %2580 = vmatpush2.msra.mxu0 %v2415
      %2581 = vmatprep.subr.mxu0 %v2414
      %2582 = vmatpush2.msra.mxu0 %v2413
      %2583 = vmatprep.subr.mxu0 %v2412
      %2584 = vmatpush2.msra.mxu0 %v2411
      %2585 = vmatprep.subr.mxu0 %v2410
      %2586 = vmatpush2.msra.mxu0 %v2409
      %2587 = vmatprep.subr.mxu0 %v2408
      %2588 = vmatpush2.msra.mxu0 %v2407
      %2589 = vmatprep.subr.mxu0 %v2406
      %2590 = vmatpush2.msra.mxu0 %v2405
      %2591 = vmatprep.subr.mxu0 %v2404
      %2592 = vmatpush2.msra.mxu0 %v2403
      %2593 = vmatprep.subr.mxu0 %v2402
      %2594 = vmatpush2.msra.mxu0 %v2401
      %2595 = vmatprep.subr.mxu0 %v2400
      %2596 = vmatpush2.msra.mxu0 %v2399
      %2597 = vmatprep.subr.mxu0 %v2398
      %2598 = vmatpush2.msra.mxu0 %v2397
      %2599 = vmatprep.subr.mxu0 %v2396
      %2600 = vmatpush2.msra.mxu0 %v2395
      %2601 = vmatprep.mubr.f32.mxu0 %v2129
      %2602 = vmatmul.mubr.f32.gmra.mxu0 %v2127
      %v2603 = vpop.f32.mrf.mxu0
      %v2604 = vadd.f32 %v2492, %v2603
      %v2605 = vpop.f32.mrf.mxu0
      %v2606 = vadd.f32 %v2492, %v2605
      %2607 = vmatprep.mubr.f32.mxu0 %v2135
      %2608 = vmatmul.mubr.f32.gmra.mxu0 %v2133
      %v2609 = vpop.f32.mrf.mxu0
      %v2610 = vadd.f32 %v2497, %v2609
      %v2611 = vpop.f32.mrf.mxu0
      %v2612 = vadd.f32 %v2497, %v2611
      %2613 = vmatprep.mubr.f32.mxu0 %v2141
      %2614 = vmatmul.mubr.f32.gmra.mxu0 %v2139
      %v2615 = vpop.f32.mrf.mxu0
      %v2616 = vadd.f32 %v2502, %v2615
      %v2617 = vpop.f32.mrf.mxu0
      %v2618 = vadd.f32 %v2502, %v2617
      %2619 = vmatprep.mubr.f32.mxu0 %v2147
      %2620 = vmatmul.mubr.f32.gmra.mxu0 %v2145
      %v2621 = vpop.f32.mrf.mxu0
      %v2622 = vadd.f32 %v2507, %v2621
      %v2623 = vpop.f32.mrf.mxu0
      %v2624 = vadd.f32 %v2507, %v2623
      %2625 = vmatprep.mubr.f32.mxu0 %v2153
      %2626 = vmatmul.mubr.f32.gmra.mxu0 %v2151
      %v2627 = vpop.f32.mrf.mxu0
      %v2628 = vadd.f32 %v2512, %v2627
      %v2629 = vpop.f32.mrf.mxu0
      %v2630 = vadd.f32 %v2512, %v2629
      %2631 = vmatprep.mubr.f32.mxu0 %v2159
      %2632 = vmatmul.mubr.f32.gmra.mxu0 %v2157
      %v2633 = vpop.f32.mrf.mxu0
      %v2634 = vadd.f32 %v2517, %v2633
      %v2635 = vpop.f32.mrf.mxu0
      %v2636 = vadd.f32 %v2517, %v2635
      %2637 = vdwg.mxu0
      %2638 = vmatprep.subr.mxu0 %v2458
      %2639 = vmatpush1.msra.mxu0 %v2457
      %2640 = vmatprep.subr.mxu0 %v2456
      %2641 = vmatpush1.msra.mxu0 %v2455
      %2642 = vmatprep.subr.mxu0 %v2454
      %2643 = vmatpush1.msra.mxu0 %v2453
      %2644 = vmatprep.subr.mxu0 %v2452
      %2645 = vmatpush1.msra.mxu0 %v2451
      %2646 = vmatprep.subr.mxu0 %v2450
      %2647 = vmatpush1.msra.mxu0 %v2449
      %2648 = vmatprep.subr.mxu0 %v2448
      %2649 = vmatpush1.msra.mxu0 %v2447
      %2650 = vmatprep.subr.mxu0 %v2446
      %2651 = vmatpush1.msra.mxu0 %v2445
      %2652 = vmatprep.subr.mxu0 %v2444
      %2653 = vmatpush1.msra.mxu0 %v2443
      %2654 = vmatprep.subr.mxu0 %v2442
      %2655 = vmatpush1.msra.mxu0 %v2441
      %2656 = vmatprep.subr.mxu0 %v2440
      %2657 = vmatpush1.msra.mxu0 %v2439
      %2658 = vmatprep.subr.mxu0 %v2438
      %2659 = vmatpush1.msra.mxu0 %v2437
      %2660 = vmatprep.subr.mxu0 %v2436
      %2661 = vmatpush1.msra.mxu0 %v2435
      %2662 = vmatprep.subr.mxu0 %v2434
      %2663 = vmatpush1.msra.mxu0 %v2433
      %2664 = vmatprep.subr.mxu0 %v2432
      %2665 = vmatpush1.msra.mxu0 %v2431
      %2666 = vmatprep.subr.mxu0 %v2430
      %2667 = vmatpush1.msra.mxu0 %v2429
      %2668 = vmatprep.subr.mxu0 %v2428
      %2669 = vmatpush1.msra.mxu0 %v2427
      %2670 = vmatprep.subr.mxu0 0.0
      %2671 = vmatpush2.msra.mxu0 0.0
      %2672 = vmatprep.subr.mxu0 0.0
      %2673 = vmatpush2.msra.mxu0 0.0
      %2674 = vmatprep.subr.mxu0 0.0
      %2675 = vmatpush2.msra.mxu0 0.0
      %2676 = vmatprep.subr.mxu0 0.0
      %2677 = vmatpush2.msra.mxu0 0.0
      %2678 = vmatprep.subr.mxu0 %v2482
      %2679 = vmatpush2.msra.mxu0 %v2481
      %2680 = vmatprep.subr.mxu0 %v2480
      %2681 = vmatpush2.msra.mxu0 %v2479
      %2682 = vmatprep.subr.mxu0 %v2478
      %2683 = vmatpush2.msra.mxu0 %v2477
      %2684 = vmatprep.subr.mxu0 %v2476
      %2685 = vmatpush2.msra.mxu0 %v2475
      %2686 = vmatprep.subr.mxu0 %v2474
      %2687 = vmatpush2.msra.mxu0 %v2473
      %2688 = vmatprep.subr.mxu0 %v2472
      %2689 = vmatpush2.msra.mxu0 %v2471
      %2690 = vmatprep.subr.mxu0 %v2470
      %2691 = vmatpush2.msra.mxu0 %v2469
      %2692 = vmatprep.subr.mxu0 %v2468
      %2693 = vmatpush2.msra.mxu0 %v2467
      %2694 = vmatprep.subr.mxu0 %v2466
      %2695 = vmatpush2.msra.mxu0 %v2465
      %2696 = vmatprep.subr.mxu0 %v2464
      %2697 = vmatpush2.msra.mxu0 %v2463
      %2698 = vmatprep.subr.mxu0 %v2462
      %2699 = vmatpush2.msra.mxu0 %v2461
      %2700 = vmatprep.subr.mxu0 %v2460
      %2701 = vmatpush2.msra.mxu0 %v2459
      %2702 = vmatprep.mubr.f32.mxu0 %v2520
      %2703 = vmatmul.mubr.f32.gmra.mxu0 %v2329
      %v2704 = vpop.f32.mrf.mxu0
      %v2705 = vadd.f32 %v2604, %v2704
      %v2706 = vpop.f32.mrf.mxu0
      %v2707 = vadd.f32 %v2606, %v2706
      %2708 = vmatprep.mubr.f32.mxu0 %v2523
      %2709 = vmatmul.mubr.f32.gmra.mxu0 %v2335
      %v2710 = vpop.f32.mrf.mxu0
      %v2711 = vadd.f32 %v2610, %v2710
      %v2712 = vpop.f32.mrf.mxu0
      %v2713 = vadd.f32 %v2612, %v2712
      %2714 = vmatprep.mubr.f32.mxu0 %v2526
      %2715 = vmatmul.mubr.f32.gmra.mxu0 %v2341
      %v2716 = vpop.f32.mrf.mxu0
      %v2717 = vadd.f32 %v2616, %v2716
      %v2718 = vpop.f32.mrf.mxu0
      %v2719 = vadd.f32 %v2618, %v2718
      %2720 = vmatprep.mubr.f32.mxu0 %v2529
      %2721 = vmatmul.mubr.f32.gmra.mxu0 %v2347
      %v2722 = vpop.f32.mrf.mxu0
      %v2723 = vadd.f32 %v2622, %v2722
      %v2724 = vpop.f32.mrf.mxu0
      %v2725 = vadd.f32 %v2624, %v2724
      %2726 = vmatprep.mubr.f32.mxu0 %v2532
      %2727 = vmatmul.mubr.f32.gmra.mxu0 %v2353
      %v2728 = vpop.f32.mrf.mxu0
      %v2729 = vadd.f32 %v2628, %v2728
      %v2730 = vpop.f32.mrf.mxu0
      %v2731 = vadd.f32 %v2630, %v2730
      %2732 = vmatprep.mubr.f32.mxu0 %v2535
      %2733 = vmatmul.mubr.f32.gmra.mxu0 %v2359
      %v2734 = vpop.f32.mrf.mxu0
      %v2735 = vadd.f32 %v2634, %v2734
      %v2736 = vpop.f32.mrf.mxu0
      %v2737 = vadd.f32 %v2636, %v2736
      %2738 = vdwg.mxu0
      %v2739 = vmax.f32 %v2705, 0.0
      %v2740 = vmax.f32 %v2707, 0.0
      %v2741 = vmax.f32 %v2711, 0.0
      %v2742 = vmax.f32 %v2713, 0.0
      %v2743 = vmax.f32 %v2717, 0.0
      %v2744 = vmax.f32 %v2719, 0.0
      %v2745 = vmax.f32 %v2723, 0.0
      %v2746 = vmax.f32 %v2725, 0.0
      %v2747 = vmax.f32 %v2729, 0.0
      %v2748 = vmax.f32 %v2731, 0.0
      %v2749 = vmax.f32 %v2735, 0.0
      %v2750 = vmax.f32 %v2737, 0.0
      %2751 = vst [vmem:[%s197] sm:$0xff] %v2739
      %2752 = vst [vmem:[%s197 + $0x8] sm:$0xff] %v2740
      %2753 = vst [vmem:[%s197 + $0x10] sm:$0xff] %v2741
      %2754 = vst [vmem:[%s197 + $0x18] sm:$0xff] %v2742
      %2755 = vst [vmem:[%s197 + $0x20] sm:$0xff] %v2743
      %2756 = vst [vmem:[%s197 + $0x28] sm:$0xff] %v2744
      %2757 = vst [vmem:[%s197 + $0x30] sm:$0xff] %v2745
      %2758 = vst [vmem:[%s197 + $0x38] sm:$0xff] %v2746
      %2759 = vst [vmem:[%s197 + $0x40] sm:$0xff] %v2747
      %2760 = vst [vmem:[%s197 + $0x48] sm:$0xff] %v2748
      %2761 = vst [vmem:[%s197 + $0x50] sm:$0xff] %v2749
      %2762 = vst [vmem:[%s197 + $0x58] sm:$0xff] %v2750
      %p2763 = scmp.lt.s32.totalorder %s15, 1
      %s2764 = scalar_select %p2763, %s15, 1
      %s2765 = smul.addr %s2764, 12
      %s2766 = smul.addr %s2765, 8
      %s2767 = scalar_lea.vmem %s4, %s2766
      // Predicated region
      $region37: #{dilate_merge_pallas.1} parent=35 // pred_check
        %p2768 = pneg %p122
      $region38: #{dilate_merge_pallas.1} parent=35 // pred_check_branch
        %2770 = sbr.rel (%p2768) target = $region40
      $region39: #{dilate_merge_pallas.1} parent=35 // pred_region
        _
      $region40: #{dilate_merge_pallas.1} parent=35 // pred_fallthru
        _
    $region36: #{dilate_merge_pallas.1} parent=5 // pred_fallthru
      _
    %p2771 = scmp.le.s32.totalorder 2, %s10
    // Predicated region
    $region41: #{dilate_merge_pallas.1} parent=5 // pred_check
      %p2772 = pneg %p2771
    $region42: #{dilate_merge_pallas.1} parent=5 // pred_check_branch
      %2774 = sbr.rel (%p2772) target = $region44
    $region43: #{dilate_merge_pallas.1} parent=5 // pred_region
      %s2775 = ssub.s32 %s10, 2
      // Predicated region
      $region45: #{dilate_merge_pallas.1} parent=43 // pred_check
        %p2776 = pneg %p128
      $region46: #{dilate_merge_pallas.1} parent=43 // pred_check_branch
        %2778 = sbr.rel (%p2776) target = $region48
      $region47: #{dilate_merge_pallas.1} parent=43 // pred_region
        %p2779 = scmp.lt.s32.totalorder %s16, 1
        %s2780 = scalar_select %p2779, %s16, 1
        %s2781 = smul.addr %s2780, 12
        %s2782 = smul.addr %s2781, 8
        %s2783 = scalar_lea.vmem %s4, %s2782
      $region48: #{dilate_merge_pallas.1} parent=43 // pred_fallthru
        _
    $region44: #{dilate_merge_pallas.1} parent=5 // pred_fallthru
      _
  $region6: #{dilate_merge_pallas.1} parent=0 // loop_footer
    %s14 = sadd.s32 1, %s10
  $region7: #{dilate_merge_pallas.1} parent=0 // loop_footer_branch
    %9 = sbr.rel target = $region3
  $region8: #{dilate_merge_pallas.1} parent=0 // loop_exit
    _

</llo_original>
